<compile_context>
chip_gen: v5e
topology: v5e:2x2
jax: 0.10.0
libtpu: 0.0.40
codegen_flags: <defaults>
</compile_context>

<pallas_src>
import functools

import jax
import jax.numpy as jnp
from jax import lax
from jax.experimental import pallas as pl
from jax.experimental.pallas import tpu as pltpu


# ----------------------------- matmul helpers -------------------------------

def _mm(a, b):
    """a @ b (contract last dim of a with first dim of b); bf16 MXU, f32 acc."""
    return lax.dot_general(
        a.astype(jnp.bfloat16), b.astype(jnp.bfloat16),
        dimension_numbers=(((a.ndim - 1,), (0,)), ((), ())),
        preferred_element_type=jnp.float32)


def _mm_t(a, b):
    """a @ b.T (contract last dims of both) without materializing a transpose."""
    return lax.dot_general(
        a.astype(jnp.bfloat16), b.astype(jnp.bfloat16),
        dimension_numbers=(((1,), (1,)), ((), ())),
        preferred_element_type=jnp.float32)


# ------------------------------ fused kernel --------------------------------

def _seq2sql_kernel(qlen_ref, hnum_ref,                       # scalar prefetch
                    xq_ref, xh_ref,                           # per-batch data
                    wq_ref, bq_ref, whe_ref, bhe_ref,         # encoders
                    wattq_ref, wattqch_ref, wattqval_ref,     # fused att. proj
                    wck_ref, wout_ref, bout_ref,              # head stacks
                    opemb_ref, u_ref,
                    wvco_ref, wvout_ref, wvbout_ref,          # where_val head
                    o_sc_ref, o_sa_ref, o_wn_ref, o_wc_ref, o_wo_ref, o_wv_ref,
                    *, d_h, Lq, Hn, mw, n_op, n_agg, n_wn):
    b = pl.program_id(0)
    q_len = qlen_ref[b]
    h_num = hnum_ref[b]
    NEG = -1e9

    # ---- encoders: one fused matmul -> [enc_q | enc_q_ch | enc_q_val] ------
    qall = jnp.tanh(_mm(xq_ref[0], wq_ref[...]) + bq_ref[...])       # (Lq,3dh)
    enc_q = qall[:, :d_h]
    enc_qch = qall[:, d_h:2 * d_h]
    enc_qval = qall[:, 2 * d_h:]
    enc_h = jnp.tanh(_mm(xh_ref[0], whe_ref[...]) + bhe_ref[...])    # (Hn,dh)

    # ---- validity masks built in-kernel from SMEM scalars -------------------
    q_valid = lax.broadcasted_iota(jnp.int32, (1, Lq), 1) < q_len    # (1,Lq)
    row_iota = lax.broadcasted_iota(jnp.int32, (Hn, 1), 0)
    col_valid = row_iota < h_num                                     # (Hn,1)

    # ---- dense fused attention-query projections (no zero blocks) ----------
    qa_q = _mm(enc_q, wattq_ref[...])        # (Lq, 3*d_h): [sc | sa | wop]
    qa_qch = _mm(enc_qch, wattqch_ref[...])  # (Lq, 2*d_h): [wcol | wn]
    qa_qv = _mm(enc_qval, wattqval_ref[...])  # (Lq, 2*d_h): [wv_att | wv_q]
    qa_sc, qa_sa, qa_wo = qa_q[:, :d_h], qa_q[:, d_h:2 * d_h], qa_q[:, 2 * d_h:]
    qa_wc, qa_wn = qa_qch[:, :d_h], qa_qch[:, d_h:]
    qa_wv, a_wv = qa_qv[:, :d_h], qa_qv[:, d_h:]

    def attend(keys, qa_h, qenc):
        att = _mm_t(keys, qa_h)                                      # (K, Lq)
        att = jnp.where(q_valid, att, NEG)
        att = att - jnp.max(att, axis=-1, keepdims=True)
        e = jnp.exp(att)
        p = e * pl.reciprocal(jnp.sum(e, axis=-1, keepdims=True), approx=True)
        return _mm(p, qenc)                                          # (K, d_h)

    def head(keys, qa_h, qenc, i):
        c = attend(keys, qa_h, qenc)
        # 256-deep fused contraction: [context | keys] @ vstack([Wc, Wh])
        s = jnp.tanh(_mm(jnp.concatenate([c, keys], axis=-1), wck_ref[i]))
        return _mm(s, wout_ref[i]) + bout_ref[i]                     # (K, wpad)

    def pick_row(score):
        """First-argmax one-hot over the header (sublane) axis, (Hn,1) bool."""
        mx = jnp.max(score, axis=0, keepdims=True)
        first = jnp.min(jnp.where(score >= mx, row_iota, Hn),
                        axis=0, keepdims=True)
        return row_iota == first

    # ---- stage 1: select-column / where-column / where-number --------------
    sc_score = jnp.where(col_valid, head(enc_h, qa_sc, enc_q, 0)[:, :1], NEG)
    o_sc_ref[0] = sc_score
    wc_score = jnp.where(col_valid, head(enc_h, qa_wc, enc_qch, 1)[:, :1], NEG)
    o_wc_ref[0] = wc_score
    o_wn_ref[0] = head(u_ref[...], qa_wn, enc_qch, 2)[:, :n_wn]

    # predicted select column -> its header encoding (one-hot select)
    sel_vec = jnp.sum(jnp.where(pick_row(sc_score), enc_h, 0.0),
                      axis=0, keepdims=True)                         # (1, d_h)

    # predicted where columns: top max_where_num via iterative argmax
    rows = []
    wrk = wc_score
    for _ in range(mw):
        oh = pick_row(wrk)
        rows.append(jnp.sum(jnp.where(oh, enc_h, 0.0), axis=0, keepdims=True))
        wrk = jnp.where(oh, -1e30, wrk)
    wcol_vec = jnp.concatenate(rows, axis=0)                         # (mw, d_h)

    # ---- stage 2: select-aggregation / where-operator / where-value --------
    o_sa_ref[0] = head(sel_vec, qa_sa, enc_q, 3)[:, :n_agg]

    wo_full = head(wcol_vec, qa_wo, enc_q, 4)                        # (mw, wpad)
    o_wo_ref[0] = wo_full[:, :n_op]

    # predicted operator -> embedding via first-argmax one-hot matmul
    wpad = wo_full.shape[-1]
    lane_iota = lax.broadcasted_iota(jnp.int32, wo_full.shape, 1)
    op_valid = lane_iota < n_op
    mx = jnp.max(jnp.where(op_valid, wo_full, -1e30), axis=-1, keepdims=True)
    first = jnp.min(jnp.where(op_valid & (wo_full >= mx), lane_iota, wpad),
                    axis=-1, keepdims=True)
    op_1h = (lane_iota == first).astype(jnp.float32)                 # (mw, wpad)
    op_vec = _mm(op_1h, opemb_ref[...])                              # (mw, d_h)

    # where value (start/end pointers): ONE batched matmul over mw*Lq rows
    c_wv = attend(wcol_vec, qa_wv, enc_qval)                         # (mw, d_h)
    bterm = _mm(jnp.concatenate([c_wv, op_vec], axis=-1), wvco_ref[...])
    t_all = jnp.concatenate(
        [jnp.tanh(a_wv + bterm[i:i + 1, :]) for i in range(mw)], axis=0)
    o_wv_ref[0] = _mm(t_all, wvout_ref[...]) + wvbout_ref[...]       # (mw*Lq, 2)


# ------------------------------ pallas wrapper -------------------------------

def _batched_spec(shape):
    nd = len(shape)
    return pl.BlockSpec((1,) + tuple(shape[1:]),
                        lambda b, *_: (b,) + (0,) * (nd - 1))


def _const_spec(shape):
    nd = len(shape)
    return pl.BlockSpec(tuple(shape), lambda b, *_: (0,) * nd)


_WEIGHT_KEYS = ('wq_cat', 'bq_cat', 'wh_enc', 'bh_enc',
                'w_att_q', 'w_att_qch', 'w_att_qval',
                'wck', 'wout', 'bout', 'op_emb_pad', 'u',
                'wv_wco', 'wv_wout', 'wv_bout')


def seq2sql_pallas(prepped, x_q, x_h, q_lens, h_nums, *,
                   d_h, mw, n_op, n_agg, n_wn):
    f32 = jnp.float32
    bs, Lq, _ = x_q.shape
    _, Hn, _ = x_h.shape
    weights = [prepped[k] for k in _WEIGHT_KEYS]

    in_specs = ([_batched_spec(x_q.shape), _batched_spec(x_h.shape)] +
                [_const_spec(w.shape) for w in weights])
    out_shapes = (jax.ShapeDtypeStruct((bs, Hn, 1), f32),
                  jax.ShapeDtypeStruct((bs, 1, n_agg), f32),
                  jax.ShapeDtypeStruct((bs, 1, n_wn), f32),
                  jax.ShapeDtypeStruct((bs, Hn, 1), f32),
                  jax.ShapeDtypeStruct((bs, mw, n_op), f32),
                  jax.ShapeDtypeStruct((bs, mw * Lq, 2), f32))
    out_specs = tuple(_batched_spec(s.shape) for s in out_shapes)

    kern = functools.partial(_seq2sql_kernel, d_h=d_h, Lq=Lq, Hn=Hn, mw=mw,
                             n_op=n_op, n_agg=n_agg, n_wn=n_wn)
    return pl.pallas_call(
        kern,
        out_shape=out_shapes,
        grid_spec=pltpu.PrefetchScalarGridSpec(
            num_scalar_prefetch=2,
            grid=(bs,),
            in_specs=in_specs,
            out_specs=out_specs),
        compiler_params=pltpu.CompilerParams(
            dimension_semantics=("parallel",)),
    )(q_lens, h_nums, x_q, x_h, *weights)


# ------------------------------ Parameters ----------------------------------

def init_params(key, d_in, d_in_ch, d_h, d_f, ch_vocab_size, n_op, n_agg,
                max_where_num):
    ks = iter(jax.random.split(key, 64))

    def w(shape, scale=0.05):
        return scale * jax.random.normal(next(ks), shape, jnp.float32)

    def head(d_out):
        return dict(watt=w((d_h, d_h)), wc=w((d_h, d_h)), wh=w((d_h, d_h)),
                    wout=w((d_h, d_out)), bout=w((1, d_out)))

    return dict(
        embed_ch=w((ch_vocab_size, d_in_ch)),
        # encoders (single tanh projections standing in for the BiLSTMs)
        Wq=w((d_in, d_h)), bq=w((1, d_h)),
        Wqch=w((d_in + d_in_ch, d_h)), bqch=w((1, d_h)),
        Wqval=w((d_in + d_in_ch + d_f, d_h)), bqval=w((1, d_h)),
        Wh=w((d_in, d_h)), bh=w((1, d_h)),
        # heads
        sc=head(1), sa=head(n_agg), wn=head(max_where_num + 1),
        wcol=head(1), wop=head(n_op),
        wv=dict(watt=w((d_h, d_h)), wq=w((d_h, d_h)), wc=w((d_h, d_h)),
                wo=w((d_h, d_h)), wout=w((d_h, 2)), bout=w((1, 2))),
        u_num=w((1, d_h)),          # learned query vector for where_num pooling
        op_emb=w((n_op, d_h)),      # operator embeddings for where_val
    )


def prepare_params(params, d_in, d_in_ch, d_f):
    """One-time weight fusion / padding, hoisted out of the jitted forward."""
    d_all = d_in + d_in_ch + d_f
    heads = [params['sc'], params['wcol'], params['wn'],
             params['sa'], params['wop']]
    widths = [h['wout'].shape[1] for h in heads]
    wpad = max(8, -(-max(widths) // 8) * 8)
    d_hdr = -(-d_in // 128) * 128          # header feature dim -> full lane tiles

    def pad_rows(w, rows):
        return jnp.pad(w, ((0, rows - w.shape[0]), (0, 0)))

    def pad_cols(w, cols):
        return jnp.pad(w, ((0, 0), (0, cols - w.shape[1])))

    return dict(
        embed_ch=params['embed_ch'],
        # fused question encoder: [enc_q | enc_q_ch | enc_q_val]
        wq_cat=jnp.concatenate([pad_rows(params['Wq'], d_all),
                                pad_rows(params['Wqch'], d_all),
                                pad_rows(params['Wqval'], d_all)], axis=1),
        bq_cat=jnp.concatenate([params['bq'], params['bqch'],
                                params['bqval']], axis=1),
        wh_enc=pad_rows(params['Wh'], d_hdr), bh_enc=params['bh'],
        # dense fused attention-query projections (one per source encoding)
        w_att_q=jnp.concatenate([params['sc']['watt'], params['sa']['watt'],
                                 params['wop']['watt']], axis=1),
        w_att_qch=jnp.concatenate([params['wcol']['watt'],
                                   params['wn']['watt']], axis=1),
        w_att_qval=jnp.concatenate([params['wv']['watt'],
                                    params['wv']['wq']], axis=1),
        # per-head fused [context|key] projections and (padded) output layers
        wck=jnp.stack([jnp.concatenate([h['wc'], h['wh']], axis=0)
                       for h in heads]),
        wout=jnp.stack([pad_cols(h['wout'], wpad) for h in heads]),
        bout=jnp.stack([pad_cols(h['bout'], wpad) for h in heads]),
        op_emb_pad=pad_rows(params['op_emb'], wpad),
        u=params['u_num'],
        wv_wco=jnp.concatenate([params['wv']['wc'], params['wv']['wo']], axis=0),
        wv_wout=params['wv']['wout'],
        wv_bout=params['wv']['bout'],
    )


# ------------------------------ Forward pass ---------------------------------

def seq2sql_forward(prepped, q_emb, q_lens, h_emb, h_lens, h_nums,
                    q_emb_ch, q_lens_ch, h_emb_ch, h_lens_ch, q_feature,
                    *, max_where_num=4, n_op=4, n_agg=6):
    f32 = jnp.float32
    bs, Lq, d_in = q_emb.shape
    _, Hn, Lh, _ = h_emb.shape
    Lch = q_emb_ch.shape[-1]
    d_h = prepped['wh_enc'].shape[1]
    d_hdr = prepped['wh_enc'].shape[0]
    mw = max_where_num

    # ---- char embedding of question tokens: masked mean over characters ----
    qc = jnp.take(prepped['embed_ch'], q_emb_ch, axis=0)     # (bs,Lq,Lch,d_ch)
    ch_mask = (jnp.arange(Lch)[None, None, :] < q_lens_ch[:, :, None]).astype(f32)
    q_ch = jnp.sum(qc * ch_mask[..., None], axis=2) / jnp.maximum(
        q_lens_ch[:, :, None].astype(f32), 1.0)              # (bs,Lq,d_ch)

    x_q = jnp.concatenate([q_emb, q_ch, q_feature], axis=-1)  # (bs, Lq, d_all)

    # header pooling (pooling_type='last'), K dim zero-padded to full lane tiles
    last_idx = jnp.clip(h_lens - 1, 0, Lh - 1)
    idx_b = jnp.broadcast_to(last_idx[:, :, None, None], (bs, Hn, 1, d_in))
    h_last = jnp.take_along_axis(h_emb, idx_b, axis=2)[:, :, 0, :]
    x_h = jnp.pad(h_last, ((0, 0), (0, 0), (0, d_hdr - d_in)))

    o_sc, o_sa, o_wn, o_wc, o_wo, o_wv = seq2sql_pallas(
        prepped, x_q, x_h, q_lens.astype(jnp.int32), h_nums.astype(jnp.int32),
        d_h=d_h, mw=mw, n_op=n_op, n_agg=n_agg, n_wn=mw + 1)

    return (o_sc[:, :, 0], o_sa[:, 0, :], o_wn[:, 0, :], o_wc[:, :, 0],
            o_wo, o_wv.reshape(bs, mw, Lq, 2))


# --------------------------------- Main --------------------------------------

if __name__ == "__main__":
    # module hyperparameters (d_in + d_in_ch + d_f = 128, d_h = 128: TPU-native)
    d_in, d_in_ch, d_h, d_f = 96, 24, 128, 8
    n_layers, dropout_prob = 1, 0.3           # unused (eval mode, no recurrence)
    ch_vocab_size, n_op, n_agg, max_where_num = 64, 4, 6, 4
    bs, Lq, Hn, Lh, Lch = 2, 8, 5, 4, 6

    key = jax.random.PRNGKey(0)
    kp, k1, k2, k3, k4, k5, k6 = jax.random.split(key, 7)
    params = init_params(kp, d_in, d_in_ch, d_h, d_f, ch_vocab_size,
                         n_op, n_agg, max_where_num)
    prepped = prepare_params(params, d_in, d_in_ch, d_f)   # one-time weight prep

    q_emb = jax.random.normal(k1, (bs, Lq, d_in), jnp.float32)
    q_lens = jnp.array([8, 6], jnp.int32)
    h_emb = jax.random.normal(k2, (bs, Hn, Lh, d_in), jnp.float32)
    h_lens = jnp.array([[4, 3, 2, 4, 1], [2, 4, 3, 1, 2]], jnp.int32)
    h_nums = jnp.array([5, 4], jnp.int32)
    q_emb_ch = jax.random.randint(k3, (bs, Lq, Lch), 0, ch_vocab_size, jnp.int32)
    q_lens_ch = jax.random.randint(k4, (bs, Lq), 1, Lch + 1, jnp.int32)
    h_emb_ch = jax.random.randint(k5, (bs, Hn, Lh, Lch), 0, ch_vocab_size,
                                  jnp.int32)       # unused (see TODO)
    h_lens_ch = jnp.ones((bs, Hn, Lh), jnp.int32)  # unused (see TODO)
    q_feature = jax.random.normal(k6, (bs, Lq, d_f), jnp.float32)

    fwd = jax.jit(functools.partial(seq2sql_forward,
                                    max_where_num=max_where_num,
                                    n_op=n_op, n_agg=n_agg))
    outs = fwd(prepped, q_emb, q_lens, h_emb, h_lens, h_nums,
               q_emb_ch, q_lens_ch, h_emb_ch, h_lens_ch, q_feature)
    outs = jax.block_until_ready(outs)

    expected = [(bs, Hn), (bs, n_agg), (bs, max_where_num + 1), (bs, Hn),
                (bs, max_where_num, n_op), (bs, max_where_num, Lq, 2)]
    got = [tuple(o.shape) for o in outs]
    assert got == expected, got
    assert all(bool(jnp.all(jnp.isfinite(o))) for o in outs)
    print("KERNEL_OK")
</pallas_src>

<mosaic_0001>
module attributes {stable_mosaic.version = 11 : i64} {
  func.func @_seq2sql_kernel(%arg0: i32, %arg1: memref<2xi32, #tpu.memory_space<smem>>, %arg2: memref<2xi32, #tpu.memory_space<smem>>, %arg3: memref<1x8x128xf32, #tpu.memory_space<vmem>>, %arg4: memref<1x5x128xf32, #tpu.memory_space<vmem>>, %arg5: memref<128x384xf32, #tpu.memory_space<vmem>>, %arg6: memref<1x384xf32, #tpu.memory_space<vmem>>, %arg7: memref<128x128xf32, #tpu.memory_space<vmem>>, %arg8: memref<1x128xf32, #tpu.memory_space<vmem>>, %arg9: memref<128x384xf32, #tpu.memory_space<vmem>>, %arg10: memref<128x256xf32, #tpu.memory_space<vmem>>, %arg11: memref<128x256xf32, #tpu.memory_space<vmem>>, %arg12: memref<5x256x128xf32, #tpu.memory_space<vmem>>, %arg13: memref<5x128x8xf32, #tpu.memory_space<vmem>>, %arg14: memref<5x1x8xf32, #tpu.memory_space<vmem>>, %arg15: memref<8x128xf32, #tpu.memory_space<vmem>>, %arg16: memref<1x128xf32, #tpu.memory_space<vmem>>, %arg17: memref<256x128xf32, #tpu.memory_space<vmem>>, %arg18: memref<128x2xf32, #tpu.memory_space<vmem>>, %arg19: memref<1x2xf32, #tpu.memory_space<vmem>>, %arg20: memref<1x5x1xf32, #tpu.memory_space<vmem>>, %arg21: memref<1x1x6xf32, #tpu.memory_space<vmem>>, %arg22: memref<1x1x5xf32, #tpu.memory_space<vmem>>, %arg23: memref<1x5x1xf32, #tpu.memory_space<vmem>>, %arg24: memref<1x4x4xf32, #tpu.memory_space<vmem>>, %arg25: memref<1x32x2xf32, #tpu.memory_space<vmem>>) attributes {dimension_semantics = [#tpu.dimension_semantics<parallel>], iteration_bounds = array<i64: 2>, scalar_prefetch = 2 : i64, scratch_operands = 0 : i64, tpu.core_type = #tpu.core_type<tc>, window_params = [{transform_indices = @transform_0, window_bounds = array<i64: 1, 8, 128>}, {transform_indices = @transform_1, window_bounds = array<i64: 1, 5, 128>}, {pipeline_mode = #tpu.pipeline_mode<synchronous>, transform_indices = @transform_2, window_bounds = array<i64: 128, 384>}, {pipeline_mode = #tpu.pipeline_mode<synchronous>, transform_indices = @transform_3, window_bounds = array<i64: 1, 384>}, {pipeline_mode = #tpu.pipeline_mode<synchronous>, transform_indices = @transform_4, window_bounds = array<i64: 128, 128>}, {pipeline_mode = #tpu.pipeline_mode<synchronous>, transform_indices = @transform_5, window_bounds = array<i64: 1, 128>}, {pipeline_mode = #tpu.pipeline_mode<synchronous>, transform_indices = @transform_6, window_bounds = array<i64: 128, 384>}, {pipeline_mode = #tpu.pipeline_mode<synchronous>, transform_indices = @transform_7, window_bounds = array<i64: 128, 256>}, {pipeline_mode = #tpu.pipeline_mode<synchronous>, transform_indices = @transform_8, window_bounds = array<i64: 128, 256>}, {pipeline_mode = #tpu.pipeline_mode<synchronous>, transform_indices = @transform_9, window_bounds = array<i64: 5, 256, 128>}, {pipeline_mode = #tpu.pipeline_mode<synchronous>, transform_indices = @transform_10, window_bounds = array<i64: 5, 128, 8>}, {pipeline_mode = #tpu.pipeline_mode<synchronous>, transform_indices = @transform_11, window_bounds = array<i64: 5, 1, 8>}, {pipeline_mode = #tpu.pipeline_mode<synchronous>, transform_indices = @transform_12, window_bounds = array<i64: 8, 128>}, {pipeline_mode = #tpu.pipeline_mode<synchronous>, transform_indices = @transform_13, window_bounds = array<i64: 1, 128>}, {pipeline_mode = #tpu.pipeline_mode<synchronous>, transform_indices = @transform_14, window_bounds = array<i64: 256, 128>}, {pipeline_mode = #tpu.pipeline_mode<synchronous>, transform_indices = @transform_15, window_bounds = array<i64: 128, 2>}, {pipeline_mode = #tpu.pipeline_mode<synchronous>, transform_indices = @transform_16, window_bounds = array<i64: 1, 2>}, {transform_indices = @transform_17, window_bounds = array<i64: 1, 5, 1>}, {transform_indices = @transform_18, window_bounds = array<i64: 1, 1, 6>}, {transform_indices = @transform_19, window_bounds = array<i64: 1, 1, 5>}, {transform_indices = @transform_20, window_bounds = array<i64: 1, 5, 1>}, {transform_indices = @transform_21, window_bounds = array<i64: 1, 4, 4>}, {transform_indices = @transform_22, window_bounds = array<i64: 1, 32, 2>}]} {
    %0 = arith.index_cast %arg0 : i32 to index
    %1 = memref.load %arg1[%0] : memref<2xi32, #tpu.memory_space<smem>>
    %2 = arith.index_cast %arg0 : i32 to index
    %3 = memref.load %arg2[%2] : memref<2xi32, #tpu.memory_space<smem>>
    %c0 = arith.constant 0 : index
    %c0_0 = arith.constant 0 : index
    %c0_1 = arith.constant 0 : index
    %4 = vector.load %arg3[%c0, %c0_0, %c0_1] : memref<1x8x128xf32, #tpu.memory_space<vmem>>, vector<1x8x128xf32>
    %5 = vector.shape_cast %4 : vector<1x8x128xf32> to vector<8x128xf32>
    %c0_2 = arith.constant 0 : index
    %c0_3 = arith.constant 0 : index
    %6 = vector.load %arg5[%c0_2, %c0_3] : memref<128x384xf32, #tpu.memory_space<vmem>>, vector<128x384xf32>
    %7 = arith.truncf %5 : vector<8x128xf32> to vector<8x128xbf16>
    %8 = arith.truncf %6 : vector<128x384xf32> to vector<128x384xbf16>
    %cst = arith.constant dense<0.000000e+00> : vector<8x384xf32>
    %9 = tpu.matmul %7, %8, %cst {dimension_numbers = #tpu.dot_dimension_numbers<[1], [0], [0], [1], [0, 0, 1, 1], [], []>} : vector<8x128xbf16>, vector<128x384xbf16>, vector<8x384xf32> -> vector<8x384xf32>
    %c0_4 = arith.constant 0 : index
    %c0_5 = arith.constant 0 : index
    %10 = vector.load %arg6[%c0_4, %c0_5] : memref<1x384xf32, #tpu.memory_space<vmem>>, vector<1x384xf32>
    %11 = vector.broadcast %10 : vector<1x384xf32> to vector<8x384xf32>
    %12 = arith.addf %9, %11 : vector<8x384xf32>
    %13 = math.tanh %12 : vector<8x384xf32>
    %14 = vector.extract_strided_slice %13 {offsets = [0, 0], sizes = [8, 128], strides = [1, 1]} : vector<8x384xf32> to vector<8x128xf32>
    %15 = vector.extract_strided_slice %13 {offsets = [0, 128], sizes = [8, 128], strides = [1, 1]} : vector<8x384xf32> to vector<8x128xf32>
    %16 = vector.extract_strided_slice %13 {offsets = [0, 256], sizes = [8, 128], strides = [1, 1]} : vector<8x384xf32> to vector<8x128xf32>
    %c0_6 = arith.constant 0 : index
    %c0_7 = arith.constant 0 : index
    %c0_8 = arith.constant 0 : index
    %17 = vector.load %arg4[%c0_6, %c0_7, %c0_8] : memref<1x5x128xf32, #tpu.memory_space<vmem>>, vector<1x5x128xf32>
    %18 = vector.shape_cast %17 : vector<1x5x128xf32> to vector<5x128xf32>
    %c0_9 = arith.constant 0 : index
    %c0_10 = arith.constant 0 : index
    %19 = vector.load %arg7[%c0_9, %c0_10] : memref<128x128xf32, #tpu.memory_space<vmem>>, vector<128x128xf32>
    %20 = arith.truncf %18 : vector<5x128xf32> to vector<5x128xbf16>
    %21 = arith.truncf %19 : vector<128x128xf32> to vector<128x128xbf16>
    %cst_11 = arith.constant dense<0.000000e+00> : vector<5x128xf32>
    %22 = tpu.matmul %20, %21, %cst_11 {dimension_numbers = #tpu.dot_dimension_numbers<[1], [0], [0], [1], [0, 0, 1, 1], [], []>} : vector<5x128xbf16>, vector<128x128xbf16>, vector<5x128xf32> -> vector<5x128xf32>
    %c0_12 = arith.constant 0 : index
    %c0_13 = arith.constant 0 : index
    %23 = vector.load %arg8[%c0_12, %c0_13] : memref<1x128xf32, #tpu.memory_space<vmem>>, vector<1x128xf32>
    %24 = vector.broadcast %23 : vector<1x128xf32> to vector<5x128xf32>
    %25 = arith.addf %22, %24 : vector<5x128xf32>
    %26 = math.tanh %25 : vector<5x128xf32>
    %27 = tpu.iota {dimensions = array<i32: 1>} : vector<1x8xi32>
    %28 = vector.broadcast %1 : i32 to vector<1x8xi32>
    %29 = arith.cmpi slt, %27, %28 : vector<1x8xi32>
    %30 = tpu.iota {dimensions = array<i32: 0>} : vector<5x1xi32>
    %31 = vector.broadcast %3 : i32 to vector<5x1xi32>
    %32 = arith.cmpi slt, %30, %31 : vector<5x1xi32>
    %c0_14 = arith.constant 0 : index
    %c0_15 = arith.constant 0 : index
    %33 = vector.load %arg9[%c0_14, %c0_15] : memref<128x384xf32, #tpu.memory_space<vmem>>, vector<128x384xf32>
    %34 = arith.truncf %14 : vector<8x128xf32> to vector<8x128xbf16>
    %35 = arith.truncf %33 : vector<128x384xf32> to vector<128x384xbf16>
    %cst_16 = arith.constant dense<0.000000e+00> : vector<8x384xf32>
    %36 = tpu.matmul %34, %35, %cst_16 {dimension_numbers = #tpu.dot_dimension_numbers<[1], [0], [0], [1], [0, 0, 1, 1], [], []>} : vector<8x128xbf16>, vector<128x384xbf16>, vector<8x384xf32> -> vector<8x384xf32>
    %c0_17 = arith.constant 0 : index
    %c0_18 = arith.constant 0 : index
    %37 = vector.load %arg10[%c0_17, %c0_18] : memref<128x256xf32, #tpu.memory_space<vmem>>, vector<128x256xf32>
    %38 = arith.truncf %15 : vector<8x128xf32> to vector<8x128xbf16>
    %39 = arith.truncf %37 : vector<128x256xf32> to vector<128x256xbf16>
    %cst_19 = arith.constant dense<0.000000e+00> : vector<8x256xf32>
    %40 = tpu.matmul %38, %39, %cst_19 {dimension_numbers = #tpu.dot_dimension_numbers<[1], [0], [0], [1], [0, 0, 1, 1], [], []>} : vector<8x128xbf16>, vector<128x256xbf16>, vector<8x256xf32> -> vector<8x256xf32>
    %c0_20 = arith.constant 0 : index
    %c0_21 = arith.constant 0 : index
    %41 = vector.load %arg11[%c0_20, %c0_21] : memref<128x256xf32, #tpu.memory_space<vmem>>, vector<128x256xf32>
    %42 = arith.truncf %16 : vector<8x128xf32> to vector<8x128xbf16>
    %43 = arith.truncf %41 : vector<128x256xf32> to vector<128x256xbf16>
    %cst_22 = arith.constant dense<0.000000e+00> : vector<8x256xf32>
    %44 = tpu.matmul %42, %43, %cst_22 {dimension_numbers = #tpu.dot_dimension_numbers<[1], [0], [0], [1], [0, 0, 1, 1], [], []>} : vector<8x128xbf16>, vector<128x256xbf16>, vector<8x256xf32> -> vector<8x256xf32>
    %45 = vector.extract_strided_slice %36 {offsets = [0, 0], sizes = [8, 128], strides = [1, 1]} : vector<8x384xf32> to vector<8x128xf32>
    %46 = vector.extract_strided_slice %36 {offsets = [0, 128], sizes = [8, 128], strides = [1, 1]} : vector<8x384xf32> to vector<8x128xf32>
    %47 = vector.extract_strided_slice %36 {offsets = [0, 256], sizes = [8, 128], strides = [1, 1]} : vector<8x384xf32> to vector<8x128xf32>
    %48 = vector.extract_strided_slice %40 {offsets = [0, 0], sizes = [8, 128], strides = [1, 1]} : vector<8x256xf32> to vector<8x128xf32>
    %49 = vector.extract_strided_slice %40 {offsets = [0, 128], sizes = [8, 128], strides = [1, 1]} : vector<8x256xf32> to vector<8x128xf32>
    %50 = vector.extract_strided_slice %44 {offsets = [0, 0], sizes = [8, 128], strides = [1, 1]} : vector<8x256xf32> to vector<8x128xf32>
    %51 = vector.extract_strided_slice %44 {offsets = [0, 128], sizes = [8, 128], strides = [1, 1]} : vector<8x256xf32> to vector<8x128xf32>
    %52 = arith.truncf %26 : vector<5x128xf32> to vector<5x128xbf16>
    %53 = arith.truncf %45 : vector<8x128xf32> to vector<8x128xbf16>
    %cst_23 = arith.constant dense<0.000000e+00> : vector<5x8xf32>
    %54 = tpu.matmul %52, %53, %cst_23 {dimension_numbers = #tpu.dot_dimension_numbers<[1], [1], [0], [0], [0, 0, 1, 0], [], []>} : vector<5x128xbf16>, vector<8x128xbf16>, vector<5x8xf32> -> vector<5x8xf32>
    %cst_24 = arith.constant -1.000000e+09 : f32
    %55 = vector.shape_cast %29 : vector<1x8xi1> to vector<1x8xi1>
    %56 = vector.broadcast %55 : vector<1x8xi1> to vector<5x8xi1>
    %57 = vector.broadcast %cst_24 : f32 to vector<5x8xf32>
    %58 = arith.select %56, %54, %57 : vector<5x8xi1>, vector<5x8xf32>
    %cst_25 = arith.constant dense<0xFF800000> : vector<5xf32>
    %59 = vector.multi_reduction <maximumf>, %58, %cst_25 [1] : vector<5x8xf32> to vector<5xf32>
    %60 = vector.shape_cast %59 : vector<5xf32> to vector<5x1xf32>
    %61 = vector.broadcast %60 : vector<5x1xf32> to vector<5x8xf32>
    %62 = arith.subf %58, %61 : vector<5x8xf32>
    %63 = math.exp %62 : vector<5x8xf32>
    %cst_26 = arith.constant dense<0.000000e+00> : vector<5xf32>
    %64 = vector.multi_reduction <add>, %63, %cst_26 [1] : vector<5x8xf32> to vector<5xf32>
    %65 = vector.shape_cast %64 : vector<5xf32> to vector<5x1xf32>
    %66 = tpu.reciprocal %65 {approx = true} : vector<5x1xf32> -> vector<5x1xf32>
    %67 = vector.broadcast %66 : vector<5x1xf32> to vector<5x8xf32>
    %68 = arith.mulf %63, %67 : vector<5x8xf32>
    %69 = arith.truncf %68 : vector<5x8xf32> to vector<5x8xbf16>
    %70 = arith.truncf %14 : vector<8x128xf32> to vector<8x128xbf16>
    %cst_27 = arith.constant dense<0.000000e+00> : vector<5x128xf32>
    %71 = tpu.matmul %69, %70, %cst_27 {dimension_numbers = #tpu.dot_dimension_numbers<[1], [0], [0], [1], [0, 0, 1, 1], [], []>} : vector<5x8xbf16>, vector<8x128xbf16>, vector<5x128xf32> -> vector<5x128xf32>
    %72 = tpu.concatenate %71, %26 in 1 : vector<5x128xf32>, vector<5x128xf32> -> vector<5x256xf32>
    %c0_28 = arith.constant 0 : index
    %c0_29 = arith.constant 0 : index
    %c0_30 = arith.constant 0 : index
    %73 = vector.load %arg12[%c0_28, %c0_29, %c0_30] : memref<5x256x128xf32, #tpu.memory_space<vmem>>, vector<1x256x128xf32>
    %74 = vector.shape_cast %73 : vector<1x256x128xf32> to vector<256x128xf32>
    %75 = arith.truncf %72 : vector<5x256xf32> to vector<5x256xbf16>
    %76 = arith.truncf %74 : vector<256x128xf32> to vector<256x128xbf16>
    %cst_31 = arith.constant dense<0.000000e+00> : vector<5x128xf32>
    %77 = tpu.matmul %75, %76, %cst_31 {dimension_numbers = #tpu.dot_dimension_numbers<[1], [0], [0], [1], [0, 0, 1, 1], [], []>} : vector<5x256xbf16>, vector<256x128xbf16>, vector<5x128xf32> -> vector<5x128xf32>
    %78 = math.tanh %77 : vector<5x128xf32>
    %c0_32 = arith.constant 0 : index
    %c0_33 = arith.constant 0 : index
    %c0_34 = arith.constant 0 : index
    %79 = vector.load %arg13[%c0_32, %c0_33, %c0_34] : memref<5x128x8xf32, #tpu.memory_space<vmem>>, vector<1x128x8xf32>
    %80 = vector.shape_cast %79 : vector<1x128x8xf32> to vector<128x8xf32>
    %81 = arith.truncf %78 : vector<5x128xf32> to vector<5x128xbf16>
    %82 = arith.truncf %80 : vector<128x8xf32> to vector<128x8xbf16>
    %cst_35 = arith.constant dense<0.000000e+00> : vector<5x8xf32>
    %83 = tpu.matmul %81, %82, %cst_35 {dimension_numbers = #tpu.dot_dimension_numbers<[1], [0], [0], [1], [0, 0, 1, 1], [], []>} : vector<5x128xbf16>, vector<128x8xbf16>, vector<5x8xf32> -> vector<5x8xf32>
    %c0_36 = arith.constant 0 : index
    %c0_37 = arith.constant 0 : index
    %c0_38 = arith.constant 0 : index
    %84 = vector.load %arg14[%c0_36, %c0_37, %c0_38] : memref<5x1x8xf32, #tpu.memory_space<vmem>>, vector<1x1x8xf32>
    %85 = vector.shape_cast %84 : vector<1x1x8xf32> to vector<1x8xf32>
    %86 = vector.broadcast %85 : vector<1x8xf32> to vector<5x8xf32>
    %87 = arith.addf %83, %86 : vector<5x8xf32>
    %88 = vector.extract_strided_slice %87 {offsets = [0, 0], sizes = [5, 1], strides = [1, 1]} : vector<5x8xf32> to vector<5x1xf32>
    %cst_39 = arith.constant -1.000000e+09 : f32
    %89 = vector.broadcast %cst_39 : f32 to vector<5x1xf32>
    %90 = arith.select %32, %88, %89 : vector<5x1xi1>, vector<5x1xf32>
    %c0_40 = arith.constant 0 : index
    %c0_41 = arith.constant 0 : index
    %c0_42 = arith.constant 0 : index
    %91 = vector.load %arg20[%c0_40, %c0_41, %c0_42] : memref<1x5x1xf32, #tpu.memory_space<vmem>>, vector<1x5x1xf32>
    %92 = vector.shape_cast %91 : vector<1x5x1xf32> to vector<5x1xf32>
    %93 = vector.shape_cast %90 : vector<5x1xf32> to vector<1x5x1xf32>
    tpu.vector_store %arg20[%c0_40, %c0_41, %c0_42], %93 {strides = array<i32>} : memref<1x5x1xf32, #tpu.memory_space<vmem>>, vector<1x5x1xf32>,
    %94 = arith.truncf %26 : vector<5x128xf32> to vector<5x128xbf16>
    %95 = arith.truncf %48 : vector<8x128xf32> to vector<8x128xbf16>
    %cst_43 = arith.constant dense<0.000000e+00> : vector<5x8xf32>
    %96 = tpu.matmul %94, %95, %cst_43 {dimension_numbers = #tpu.dot_dimension_numbers<[1], [1], [0], [0], [0, 0, 1, 0], [], []>} : vector<5x128xbf16>, vector<8x128xbf16>, vector<5x8xf32> -> vector<5x8xf32>
    %cst_44 = arith.constant -1.000000e+09 : f32
    %97 = vector.shape_cast %29 : vector<1x8xi1> to vector<1x8xi1>
    %98 = vector.broadcast %97 : vector<1x8xi1> to vector<5x8xi1>
    %99 = vector.broadcast %cst_44 : f32 to vector<5x8xf32>
    %100 = arith.select %98, %96, %99 : vector<5x8xi1>, vector<5x8xf32>
    %cst_45 = arith.constant dense<0xFF800000> : vector<5xf32>
    %101 = vector.multi_reduction <maximumf>, %100, %cst_45 [1] : vector<5x8xf32> to vector<5xf32>
    %102 = vector.shape_cast %101 : vector<5xf32> to vector<5x1xf32>
    %103 = vector.broadcast %102 : vector<5x1xf32> to vector<5x8xf32>
    %104 = arith.subf %100, %103 : vector<5x8xf32>
    %105 = math.exp %104 : vector<5x8xf32>
    %cst_46 = arith.constant dense<0.000000e+00> : vector<5xf32>
    %106 = vector.multi_reduction <add>, %105, %cst_46 [1] : vector<5x8xf32> to vector<5xf32>
    %107 = vector.shape_cast %106 : vector<5xf32> to vector<5x1xf32>
    %108 = tpu.reciprocal %107 {approx = true} : vector<5x1xf32> -> vector<5x1xf32>
    %109 = vector.broadcast %108 : vector<5x1xf32> to vector<5x8xf32>
    %110 = arith.mulf %105, %109 : vector<5x8xf32>
    %111 = arith.truncf %110 : vector<5x8xf32> to vector<5x8xbf16>
    %112 = arith.truncf %15 : vector<8x128xf32> to vector<8x128xbf16>
    %cst_47 = arith.constant dense<0.000000e+00> : vector<5x128xf32>
    %113 = tpu.matmul %111, %112, %cst_47 {dimension_numbers = #tpu.dot_dimension_numbers<[1], [0], [0], [1], [0, 0, 1, 1], [], []>} : vector<5x8xbf16>, vector<8x128xbf16>, vector<5x128xf32> -> vector<5x128xf32>
    %114 = tpu.concatenate %113, %26 in 1 : vector<5x128xf32>, vector<5x128xf32> -> vector<5x256xf32>
    %c1 = arith.constant 1 : index
    %c0_48 = arith.constant 0 : index
    %c0_49 = arith.constant 0 : index
    %115 = vector.load %arg12[%c1, %c0_48, %c0_49] : memref<5x256x128xf32, #tpu.memory_space<vmem>>, vector<1x256x128xf32>
    %116 = vector.shape_cast %115 : vector<1x256x128xf32> to vector<256x128xf32>
    %117 = arith.truncf %114 : vector<5x256xf32> to vector<5x256xbf16>
    %118 = arith.truncf %116 : vector<256x128xf32> to vector<256x128xbf16>
    %cst_50 = arith.constant dense<0.000000e+00> : vector<5x128xf32>
    %119 = tpu.matmul %117, %118, %cst_50 {dimension_numbers = #tpu.dot_dimension_numbers<[1], [0], [0], [1], [0, 0, 1, 1], [], []>} : vector<5x256xbf16>, vector<256x128xbf16>, vector<5x128xf32> -> vector<5x128xf32>
    %120 = math.tanh %119 : vector<5x128xf32>
    %c1_51 = arith.constant 1 : index
    %c0_52 = arith.constant 0 : index
    %c0_53 = arith.constant 0 : index
    %121 = vector.load %arg13[%c1_51, %c0_52, %c0_53] : memref<5x128x8xf32, #tpu.memory_space<vmem>>, vector<1x128x8xf32>
    %122 = vector.shape_cast %121 : vector<1x128x8xf32> to vector<128x8xf32>
    %123 = arith.truncf %120 : vector<5x128xf32> to vector<5x128xbf16>
    %124 = arith.truncf %122 : vector<128x8xf32> to vector<128x8xbf16>
    %cst_54 = arith.constant dense<0.000000e+00> : vector<5x8xf32>
    %125 = tpu.matmul %123, %124, %cst_54 {dimension_numbers = #tpu.dot_dimension_numbers<[1], [0], [0], [1], [0, 0, 1, 1], [], []>} : vector<5x128xbf16>, vector<128x8xbf16>, vector<5x8xf32> -> vector<5x8xf32>
    %c1_55 = arith.constant 1 : index
    %c0_56 = arith.constant 0 : index
    %c0_57 = arith.constant 0 : index
    %126 = vector.load %arg14[%c1_55, %c0_56, %c0_57] : memref<5x1x8xf32, #tpu.memory_space<vmem>>, vector<1x1x8xf32>
    %127 = vector.shape_cast %126 : vector<1x1x8xf32> to vector<1x8xf32>
    %128 = vector.broadcast %127 : vector<1x8xf32> to vector<5x8xf32>
    %129 = arith.addf %125, %128 : vector<5x8xf32>
    %130 = vector.extract_strided_slice %129 {offsets = [0, 0], sizes = [5, 1], strides = [1, 1]} : vector<5x8xf32> to vector<5x1xf32>
    %cst_58 = arith.constant -1.000000e+09 : f32
    %131 = vector.broadcast %cst_58 : f32 to vector<5x1xf32>
    %132 = arith.select %32, %130, %131 : vector<5x1xi1>, vector<5x1xf32>
    %c0_59 = arith.constant 0 : index
    %c0_60 = arith.constant 0 : index
    %c0_61 = arith.constant 0 : index
    %133 = vector.load %arg23[%c0_59, %c0_60, %c0_61] : memref<1x5x1xf32, #tpu.memory_space<vmem>>, vector<1x5x1xf32>
    %134 = vector.shape_cast %133 : vector<1x5x1xf32> to vector<5x1xf32>
    %135 = vector.shape_cast %132 : vector<5x1xf32> to vector<1x5x1xf32>
    tpu.vector_store %arg23[%c0_59, %c0_60, %c0_61], %135 {strides = array<i32>} : memref<1x5x1xf32, #tpu.memory_space<vmem>>, vector<1x5x1xf32>,
    %c0_62 = arith.constant 0 : index
    %c0_63 = arith.constant 0 : index
    %136 = vector.load %arg16[%c0_62, %c0_63] : memref<1x128xf32, #tpu.memory_space<vmem>>, vector<1x128xf32>
    %137 = arith.truncf %136 : vector<1x128xf32> to vector<1x128xbf16>
    %138 = arith.truncf %49 : vector<8x128xf32> to vector<8x128xbf16>
    %cst_64 = arith.constant dense<0.000000e+00> : vector<1x8xf32>
    %139 = tpu.matmul %137, %138, %cst_64 {dimension_numbers = #tpu.dot_dimension_numbers<[1], [1], [0], [0], [0, 0, 1, 0], [], []>} : vector<1x128xbf16>, vector<8x128xbf16>, vector<1x8xf32> -> vector<1x8xf32>
    %cst_65 = arith.constant -1.000000e+09 : f32
    %140 = vector.broadcast %cst_65 : f32 to vector<1x8xf32>
    %141 = arith.select %29, %139, %140 : vector<1x8xi1>, vector<1x8xf32>
    %cst_66 = arith.constant dense<0xFF800000> : vector<1xf32>
    %142 = vector.multi_reduction <maximumf>, %141, %cst_66 [1] : vector<1x8xf32> to vector<1xf32>
    %143 = vector.shape_cast %142 : vector<1xf32> to vector<1x1xf32>
    %144 = vector.broadcast %143 : vector<1x1xf32> to vector<1x8xf32>
    %145 = arith.subf %141, %144 : vector<1x8xf32>
    %146 = math.exp %145 : vector<1x8xf32>
    %cst_67 = arith.constant dense<0.000000e+00> : vector<1xf32>
    %147 = vector.multi_reduction <add>, %146, %cst_67 [1] : vector<1x8xf32> to vector<1xf32>
    %148 = vector.shape_cast %147 : vector<1xf32> to vector<1x1xf32>
    %149 = tpu.reciprocal %148 {approx = true} : vector<1x1xf32> -> vector<1x1xf32>
    %150 = vector.broadcast %149 : vector<1x1xf32> to vector<1x8xf32>
    %151 = arith.mulf %146, %150 : vector<1x8xf32>
    %152 = arith.truncf %151 : vector<1x8xf32> to vector<1x8xbf16>
    %153 = arith.truncf %15 : vector<8x128xf32> to vector<8x128xbf16>
    %cst_68 = arith.constant dense<0.000000e+00> : vector<1x128xf32>
    %154 = tpu.matmul %152, %153, %cst_68 {dimension_numbers = #tpu.dot_dimension_numbers<[1], [0], [0], [1], [0, 0, 1, 1], [], []>} : vector<1x8xbf16>, vector<8x128xbf16>, vector<1x128xf32> -> vector<1x128xf32>
    %155 = tpu.concatenate %154, %136 in 1 : vector<1x128xf32>, vector<1x128xf32> -> vector<1x256xf32>
    %c2 = arith.constant 2 : index
    %c0_69 = arith.constant 0 : index
    %c0_70 = arith.constant 0 : index
    %156 = vector.load %arg12[%c2, %c0_69, %c0_70] : memref<5x256x128xf32, #tpu.memory_space<vmem>>, vector<1x256x128xf32>
    %157 = vector.shape_cast %156 : vector<1x256x128xf32> to vector<256x128xf32>
    %158 = arith.truncf %155 : vector<1x256xf32> to vector<1x256xbf16>
    %159 = arith.truncf %157 : vector<256x128xf32> to vector<256x128xbf16>
    %cst_71 = arith.constant dense<0.000000e+00> : vector<1x128xf32>
    %160 = tpu.matmul %158, %159, %cst_71 {dimension_numbers = #tpu.dot_dimension_numbers<[1], [0], [0], [1], [0, 0, 1, 1], [], []>} : vector<1x256xbf16>, vector<256x128xbf16>, vector<1x128xf32> -> vector<1x128xf32>
    %161 = math.tanh %160 : vector<1x128xf32>
    %c2_72 = arith.constant 2 : index
    %c0_73 = arith.constant 0 : index
    %c0_74 = arith.constant 0 : index
    %162 = vector.load %arg13[%c2_72, %c0_73, %c0_74] : memref<5x128x8xf32, #tpu.memory_space<vmem>>, vector<1x128x8xf32>
    %163 = vector.shape_cast %162 : vector<1x128x8xf32> to vector<128x8xf32>
    %164 = arith.truncf %161 : vector<1x128xf32> to vector<1x128xbf16>
    %165 = arith.truncf %163 : vector<128x8xf32> to vector<128x8xbf16>
    %cst_75 = arith.constant dense<0.000000e+00> : vector<1x8xf32>
    %166 = tpu.matmul %164, %165, %cst_75 {dimension_numbers = #tpu.dot_dimension_numbers<[1], [0], [0], [1], [0, 0, 1, 1], [], []>} : vector<1x128xbf16>, vector<128x8xbf16>, vector<1x8xf32> -> vector<1x8xf32>
    %c2_76 = arith.constant 2 : index
    %c0_77 = arith.constant 0 : index
    %c0_78 = arith.constant 0 : index
    %167 = vector.load %arg14[%c2_76, %c0_77, %c0_78] : memref<5x1x8xf32, #tpu.memory_space<vmem>>, vector<1x1x8xf32>
    %168 = vector.shape_cast %167 : vector<1x1x8xf32> to vector<1x8xf32>
    %169 = arith.addf %166, %168 : vector<1x8xf32>
    %170 = vector.extract_strided_slice %169 {offsets = [0, 0], sizes = [1, 5], strides = [1, 1]} : vector<1x8xf32> to vector<1x5xf32>
    %c0_79 = arith.constant 0 : index
    %c0_80 = arith.constant 0 : index
    %c0_81 = arith.constant 0 : index
    %171 = vector.load %arg22[%c0_79, %c0_80, %c0_81] : memref<1x1x5xf32, #tpu.memory_space<vmem>>, vector<1x1x5xf32>
    %172 = vector.shape_cast %171 : vector<1x1x5xf32> to vector<1x5xf32>
    %173 = vector.shape_cast %170 : vector<1x5xf32> to vector<1x1x5xf32>
    tpu.vector_store %arg22[%c0_79, %c0_80, %c0_81], %173 {strides = array<i32>} : memref<1x1x5xf32, #tpu.memory_space<vmem>>, vector<1x1x5xf32>,
    %cst_82 = arith.constant dense<0xFF800000> : vector<1xf32>
    %174 = vector.multi_reduction <maximumf>, %90, %cst_82 [0] : vector<5x1xf32> to vector<1xf32>
    %175 = vector.shape_cast %174 : vector<1xf32> to vector<1x1xf32>
    %176 = vector.broadcast %175 : vector<1x1xf32> to vector<5x1xf32>
    %177 = arith.cmpf oge, %90, %176 : vector<5x1xf32>
    %c5_i32 = arith.constant 5 : i32
    %178 = vector.broadcast %c5_i32 : i32 to vector<5x1xi32>
    %179 = arith.select %177, %30, %178 : vector<5x1xi1>, vector<5x1xi32>
    %cst_83 = arith.constant dense<2147483647> : vector<1xi32>
    %180 = vector.multi_reduction <minsi>, %179, %cst_83 [0] : vector<5x1xi32> to vector<1xi32>
    %181 = vector.shape_cast %180 : vector<1xi32> to vector<1x1xi32>
    %182 = vector.broadcast %181 : vector<1x1xi32> to vector<5x1xi32>
    %183 = arith.cmpi eq, %30, %182 : vector<5x1xi32>
    %cst_84 = arith.constant 0.000000e+00 : f32
    %184 = vector.shape_cast %183 : vector<5x1xi1> to vector<5x1xi1>
    %185 = vector.broadcast %184 : vector<5x1xi1> to vector<5x128xi1>
    %186 = vector.broadcast %cst_84 : f32 to vector<5x128xf32>
    %187 = arith.select %185, %26, %186 : vector<5x128xi1>, vector<5x128xf32>
    %cst_85 = arith.constant dense<0.000000e+00> : vector<128xf32>
    %188 = vector.multi_reduction <add>, %187, %cst_85 [0] : vector<5x128xf32> to vector<128xf32>
    %189 = vector.shape_cast %188 : vector<128xf32> to vector<1x128xf32>
    %cst_86 = arith.constant dense<0xFF800000> : vector<1xf32>
    %190 = vector.multi_reduction <maximumf>, %132, %cst_86 [0] : vector<5x1xf32> to vector<1xf32>
    %191 = vector.shape_cast %190 : vector<1xf32> to vector<1x1xf32>
    %192 = vector.broadcast %191 : vector<1x1xf32> to vector<5x1xf32>
    %193 = arith.cmpf oge, %132, %192 : vector<5x1xf32>
    %c5_i32_87 = arith.constant 5 : i32
    %194 = vector.broadcast %c5_i32_87 : i32 to vector<5x1xi32>
    %195 = arith.select %193, %30, %194 : vector<5x1xi1>, vector<5x1xi32>
    %cst_88 = arith.constant dense<2147483647> : vector<1xi32>
    %196 = vector.multi_reduction <minsi>, %195, %cst_88 [0] : vector<5x1xi32> to vector<1xi32>
    %197 = vector.shape_cast %196 : vector<1xi32> to vector<1x1xi32>
    %198 = vector.broadcast %197 : vector<1x1xi32> to vector<5x1xi32>
    %199 = arith.cmpi eq, %30, %198 : vector<5x1xi32>
    %cst_89 = arith.constant 0.000000e+00 : f32
    %200 = vector.shape_cast %199 : vector<5x1xi1> to vector<5x1xi1>
    %201 = vector.broadcast %200 : vector<5x1xi1> to vector<5x128xi1>
    %202 = vector.broadcast %cst_89 : f32 to vector<5x128xf32>
    %203 = arith.select %201, %26, %202 : vector<5x128xi1>, vector<5x128xf32>
    %cst_90 = arith.constant dense<0.000000e+00> : vector<128xf32>
    %204 = vector.multi_reduction <add>, %203, %cst_90 [0] : vector<5x128xf32> to vector<128xf32>
    %205 = vector.shape_cast %204 : vector<128xf32> to vector<1x128xf32>
    %cst_91 = arith.constant -1.000000e+30 : f32
    %206 = vector.broadcast %cst_91 : f32 to vector<5x1xf32>
    %207 = arith.select %199, %206, %132 : vector<5x1xi1>, vector<5x1xf32>
    %cst_92 = arith.constant dense<0xFF800000> : vector<1xf32>
    %208 = vector.multi_reduction <maximumf>, %207, %cst_92 [0] : vector<5x1xf32> to vector<1xf32>
    %209 = vector.shape_cast %208 : vector<1xf32> to vector<1x1xf32>
    %210 = vector.broadcast %209 : vector<1x1xf32> to vector<5x1xf32>
    %211 = arith.cmpf oge, %207, %210 : vector<5x1xf32>
    %c5_i32_93 = arith.constant 5 : i32
    %212 = vector.broadcast %c5_i32_93 : i32 to vector<5x1xi32>
    %213 = arith.select %211, %30, %212 : vector<5x1xi1>, vector<5x1xi32>
    %cst_94 = arith.constant dense<2147483647> : vector<1xi32>
    %214 = vector.multi_reduction <minsi>, %213, %cst_94 [0] : vector<5x1xi32> to vector<1xi32>
    %215 = vector.shape_cast %214 : vector<1xi32> to vector<1x1xi32>
    %216 = vector.broadcast %215 : vector<1x1xi32> to vector<5x1xi32>
    %217 = arith.cmpi eq, %30, %216 : vector<5x1xi32>
    %cst_95 = arith.constant 0.000000e+00 : f32
    %218 = vector.shape_cast %217 : vector<5x1xi1> to vector<5x1xi1>
    %219 = vector.broadcast %218 : vector<5x1xi1> to vector<5x128xi1>
    %220 = vector.broadcast %cst_95 : f32 to vector<5x128xf32>
    %221 = arith.select %219, %26, %220 : vector<5x128xi1>, vector<5x128xf32>
    %cst_96 = arith.constant dense<0.000000e+00> : vector<128xf32>
    %222 = vector.multi_reduction <add>, %221, %cst_96 [0] : vector<5x128xf32> to vector<128xf32>
    %223 = vector.shape_cast %222 : vector<128xf32> to vector<1x128xf32>
    %cst_97 = arith.constant -1.000000e+30 : f32
    %224 = vector.broadcast %cst_97 : f32 to vector<5x1xf32>
    %225 = arith.select %217, %224, %207 : vector<5x1xi1>, vector<5x1xf32>
    %cst_98 = arith.constant dense<0xFF800000> : vector<1xf32>
    %226 = vector.multi_reduction <maximumf>, %225, %cst_98 [0] : vector<5x1xf32> to vector<1xf32>
    %227 = vector.shape_cast %226 : vector<1xf32> to vector<1x1xf32>
    %228 = vector.broadcast %227 : vector<1x1xf32> to vector<5x1xf32>
    %229 = arith.cmpf oge, %225, %228 : vector<5x1xf32>
    %c5_i32_99 = arith.constant 5 : i32
    %230 = vector.broadcast %c5_i32_99 : i32 to vector<5x1xi32>
    %231 = arith.select %229, %30, %230 : vector<5x1xi1>, vector<5x1xi32>
    %cst_100 = arith.constant dense<2147483647> : vector<1xi32>
    %232 = vector.multi_reduction <minsi>, %231, %cst_100 [0] : vector<5x1xi32> to vector<1xi32>
    %233 = vector.shape_cast %232 : vector<1xi32> to vector<1x1xi32>
    %234 = vector.broadcast %233 : vector<1x1xi32> to vector<5x1xi32>
    %235 = arith.cmpi eq, %30, %234 : vector<5x1xi32>
    %cst_101 = arith.constant 0.000000e+00 : f32
    %236 = vector.shape_cast %235 : vector<5x1xi1> to vector<5x1xi1>
    %237 = vector.broadcast %236 : vector<5x1xi1> to vector<5x128xi1>
    %238 = vector.broadcast %cst_101 : f32 to vector<5x128xf32>
    %239 = arith.select %237, %26, %238 : vector<5x128xi1>, vector<5x128xf32>
    %cst_102 = arith.constant dense<0.000000e+00> : vector<128xf32>
    %240 = vector.multi_reduction <add>, %239, %cst_102 [0] : vector<5x128xf32> to vector<128xf32>
    %241 = vector.shape_cast %240 : vector<128xf32> to vector<1x128xf32>
    %cst_103 = arith.constant -1.000000e+30 : f32
    %242 = vector.broadcast %cst_103 : f32 to vector<5x1xf32>
    %243 = arith.select %235, %242, %225 : vector<5x1xi1>, vector<5x1xf32>
    %cst_104 = arith.constant dense<0xFF800000> : vector<1xf32>
    %244 = vector.multi_reduction <maximumf>, %243, %cst_104 [0] : vector<5x1xf32> to vector<1xf32>
    %245 = vector.shape_cast %244 : vector<1xf32> to vector<1x1xf32>
    %246 = vector.broadcast %245 : vector<1x1xf32> to vector<5x1xf32>
    %247 = arith.cmpf oge, %243, %246 : vector<5x1xf32>
    %c5_i32_105 = arith.constant 5 : i32
    %248 = vector.broadcast %c5_i32_105 : i32 to vector<5x1xi32>
    %249 = arith.select %247, %30, %248 : vector<5x1xi1>, vector<5x1xi32>
    %cst_106 = arith.constant dense<2147483647> : vector<1xi32>
    %250 = vector.multi_reduction <minsi>, %249, %cst_106 [0] : vector<5x1xi32> to vector<1xi32>
    %251 = vector.shape_cast %250 : vector<1xi32> to vector<1x1xi32>
    %252 = vector.broadcast %251 : vector<1x1xi32> to vector<5x1xi32>
    %253 = arith.cmpi eq, %30, %252 : vector<5x1xi32>
    %cst_107 = arith.constant 0.000000e+00 : f32
    %254 = vector.shape_cast %253 : vector<5x1xi1> to vector<5x1xi1>
    %255 = vector.broadcast %254 : vector<5x1xi1> to vector<5x128xi1>
    %256 = vector.broadcast %cst_107 : f32 to vector<5x128xf32>
    %257 = arith.select %255, %26, %256 : vector<5x128xi1>, vector<5x128xf32>
    %cst_108 = arith.constant dense<0.000000e+00> : vector<128xf32>
    %258 = vector.multi_reduction <add>, %257, %cst_108 [0] : vector<5x128xf32> to vector<128xf32>
    %259 = vector.shape_cast %258 : vector<128xf32> to vector<1x128xf32>
    %260 = tpu.concatenate %205, %223, %241, %259 in 0 : vector<1x128xf32>, vector<1x128xf32>, vector<1x128xf32>, vector<1x128xf32> -> vector<4x128xf32>
    %261 = arith.truncf %189 : vector<1x128xf32> to vector<1x128xbf16>
    %262 = arith.truncf %46 : vector<8x128xf32> to vector<8x128xbf16>
    %cst_109 = arith.constant dense<0.000000e+00> : vector<1x8xf32>
    %263 = tpu.matmul %261, %262, %cst_109 {dimension_numbers = #tpu.dot_dimension_numbers<[1], [1], [0], [0], [0, 0, 1, 0], [], []>} : vector<1x128xbf16>, vector<8x128xbf16>, vector<1x8xf32> -> vector<1x8xf32>
    %cst_110 = arith.constant -1.000000e+09 : f32
    %264 = vector.broadcast %cst_110 : f32 to vector<1x8xf32>
    %265 = arith.select %29, %263, %264 : vector<1x8xi1>, vector<1x8xf32>
    %cst_111 = arith.constant dense<0xFF800000> : vector<1xf32>
    %266 = vector.multi_reduction <maximumf>, %265, %cst_111 [1] : vector<1x8xf32> to vector<1xf32>
    %267 = vector.shape_cast %266 : vector<1xf32> to vector<1x1xf32>
    %268 = vector.broadcast %267 : vector<1x1xf32> to vector<1x8xf32>
    %269 = arith.subf %265, %268 : vector<1x8xf32>
    %270 = math.exp %269 : vector<1x8xf32>
    %cst_112 = arith.constant dense<0.000000e+00> : vector<1xf32>
    %271 = vector.multi_reduction <add>, %270, %cst_112 [1] : vector<1x8xf32> to vector<1xf32>
    %272 = vector.shape_cast %271 : vector<1xf32> to vector<1x1xf32>
    %273 = tpu.reciprocal %272 {approx = true} : vector<1x1xf32> -> vector<1x1xf32>
    %274 = vector.broadcast %273 : vector<1x1xf32> to vector<1x8xf32>
    %275 = arith.mulf %270, %274 : vector<1x8xf32>
    %276 = arith.truncf %275 : vector<1x8xf32> to vector<1x8xbf16>
    %277 = arith.truncf %14 : vector<8x128xf32> to vector<8x128xbf16>
    %cst_113 = arith.constant dense<0.000000e+00> : vector<1x128xf32>
    %278 = tpu.matmul %276, %277, %cst_113 {dimension_numbers = #tpu.dot_dimension_numbers<[1], [0], [0], [1], [0, 0, 1, 1], [], []>} : vector<1x8xbf16>, vector<8x128xbf16>, vector<1x128xf32> -> vector<1x128xf32>
    %279 = tpu.concatenate %278, %189 in 1 : vector<1x128xf32>, vector<1x128xf32> -> vector<1x256xf32>
    %c3 = arith.constant 3 : index
    %c0_114 = arith.constant 0 : index
    %c0_115 = arith.constant 0 : index
    %280 = vector.load %arg12[%c3, %c0_114, %c0_115] : memref<5x256x128xf32, #tpu.memory_space<vmem>>, vector<1x256x128xf32>
    %281 = vector.shape_cast %280 : vector<1x256x128xf32> to vector<256x128xf32>
    %282 = arith.truncf %279 : vector<1x256xf32> to vector<1x256xbf16>
    %283 = arith.truncf %281 : vector<256x128xf32> to vector<256x128xbf16>
    %cst_116 = arith.constant dense<0.000000e+00> : vector<1x128xf32>
    %284 = tpu.matmul %282, %283, %cst_116 {dimension_numbers = #tpu.dot_dimension_numbers<[1], [0], [0], [1], [0, 0, 1, 1], [], []>} : vector<1x256xbf16>, vector<256x128xbf16>, vector<1x128xf32> -> vector<1x128xf32>
    %285 = math.tanh %284 : vector<1x128xf32>
    %c3_117 = arith.constant 3 : index
    %c0_118 = arith.constant 0 : index
    %c0_119 = arith.constant 0 : index
    %286 = vector.load %arg13[%c3_117, %c0_118, %c0_119] : memref<5x128x8xf32, #tpu.memory_space<vmem>>, vector<1x128x8xf32>
    %287 = vector.shape_cast %286 : vector<1x128x8xf32> to vector<128x8xf32>
    %288 = arith.truncf %285 : vector<1x128xf32> to vector<1x128xbf16>
    %289 = arith.truncf %287 : vector<128x8xf32> to vector<128x8xbf16>
    %cst_120 = arith.constant dense<0.000000e+00> : vector<1x8xf32>
    %290 = tpu.matmul %288, %289, %cst_120 {dimension_numbers = #tpu.dot_dimension_numbers<[1], [0], [0], [1], [0, 0, 1, 1], [], []>} : vector<1x128xbf16>, vector<128x8xbf16>, vector<1x8xf32> -> vector<1x8xf32>
    %c3_121 = arith.constant 3 : index
    %c0_122 = arith.constant 0 : index
    %c0_123 = arith.constant 0 : index
    %291 = vector.load %arg14[%c3_121, %c0_122, %c0_123] : memref<5x1x8xf32, #tpu.memory_space<vmem>>, vector<1x1x8xf32>
    %292 = vector.shape_cast %291 : vector<1x1x8xf32> to vector<1x8xf32>
    %293 = arith.addf %290, %292 : vector<1x8xf32>
    %294 = vector.extract_strided_slice %293 {offsets = [0, 0], sizes = [1, 6], strides = [1, 1]} : vector<1x8xf32> to vector<1x6xf32>
    %c0_124 = arith.constant 0 : index
    %c0_125 = arith.constant 0 : index
    %c0_126 = arith.constant 0 : index
    %295 = vector.load %arg21[%c0_124, %c0_125, %c0_126] : memref<1x1x6xf32, #tpu.memory_space<vmem>>, vector<1x1x6xf32>
    %296 = vector.shape_cast %295 : vector<1x1x6xf32> to vector<1x6xf32>
    %297 = vector.shape_cast %294 : vector<1x6xf32> to vector<1x1x6xf32>
    tpu.vector_store %arg21[%c0_124, %c0_125, %c0_126], %297 {strides = array<i32>} : memref<1x1x6xf32, #tpu.memory_space<vmem>>, vector<1x1x6xf32>,
    %298 = arith.truncf %260 : vector<4x128xf32> to vector<4x128xbf16>
    %299 = arith.truncf %47 : vector<8x128xf32> to vector<8x128xbf16>
    %cst_127 = arith.constant dense<0.000000e+00> : vector<4x8xf32>
    %300 = tpu.matmul %298, %299, %cst_127 {dimension_numbers = #tpu.dot_dimension_numbers<[1], [1], [0], [0], [0, 0, 1, 0], [], []>} : vector<4x128xbf16>, vector<8x128xbf16>, vector<4x8xf32> -> vector<4x8xf32>
    %cst_128 = arith.constant -1.000000e+09 : f32
    %301 = vector.shape_cast %29 : vector<1x8xi1> to vector<1x8xi1>
    %302 = vector.broadcast %301 : vector<1x8xi1> to vector<4x8xi1>
    %303 = vector.broadcast %cst_128 : f32 to vector<4x8xf32>
    %304 = arith.select %302, %300, %303 : vector<4x8xi1>, vector<4x8xf32>
    %cst_129 = arith.constant dense<0xFF800000> : vector<4xf32>
    %305 = vector.multi_reduction <maximumf>, %304, %cst_129 [1] : vector<4x8xf32> to vector<4xf32>
    %306 = vector.shape_cast %305 : vector<4xf32> to vector<4x1xf32>
    %307 = vector.broadcast %306 : vector<4x1xf32> to vector<4x8xf32>
    %308 = arith.subf %304, %307 : vector<4x8xf32>
    %309 = math.exp %308 : vector<4x8xf32>
    %cst_130 = arith.constant dense<0.000000e+00> : vector<4xf32>
    %310 = vector.multi_reduction <add>, %309, %cst_130 [1] : vector<4x8xf32> to vector<4xf32>
    %311 = vector.shape_cast %310 : vector<4xf32> to vector<4x1xf32>
    %312 = tpu.reciprocal %311 {approx = true} : vector<4x1xf32> -> vector<4x1xf32>
    %313 = vector.broadcast %312 : vector<4x1xf32> to vector<4x8xf32>
    %314 = arith.mulf %309, %313 : vector<4x8xf32>
    %315 = arith.truncf %314 : vector<4x8xf32> to vector<4x8xbf16>
    %316 = arith.truncf %14 : vector<8x128xf32> to vector<8x128xbf16>
    %cst_131 = arith.constant dense<0.000000e+00> : vector<4x128xf32>
    %317 = tpu.matmul %315, %316, %cst_131 {dimension_numbers = #tpu.dot_dimension_numbers<[1], [0], [0], [1], [0, 0, 1, 1], [], []>} : vector<4x8xbf16>, vector<8x128xbf16>, vector<4x128xf32> -> vector<4x128xf32>
    %318 = tpu.concatenate %317, %260 in 1 : vector<4x128xf32>, vector<4x128xf32> -> vector<4x256xf32>
    %c4 = arith.constant 4 : index
    %c0_132 = arith.constant 0 : index
    %c0_133 = arith.constant 0 : index
    %319 = vector.load %arg12[%c4, %c0_132, %c0_133] : memref<5x256x128xf32, #tpu.memory_space<vmem>>, vector<1x256x128xf32>
    %320 = vector.shape_cast %319 : vector<1x256x128xf32> to vector<256x128xf32>
    %321 = arith.truncf %318 : vector<4x256xf32> to vector<4x256xbf16>
    %322 = arith.truncf %320 : vector<256x128xf32> to vector<256x128xbf16>
    %cst_134 = arith.constant dense<0.000000e+00> : vector<4x128xf32>
    %323 = tpu.matmul %321, %322, %cst_134 {dimension_numbers = #tpu.dot_dimension_numbers<[1], [0], [0], [1], [0, 0, 1, 1], [], []>} : vector<4x256xbf16>, vector<256x128xbf16>, vector<4x128xf32> -> vector<4x128xf32>
    %324 = math.tanh %323 : vector<4x128xf32>
    %c4_135 = arith.constant 4 : index
    %c0_136 = arith.constant 0 : index
    %c0_137 = arith.constant 0 : index
    %325 = vector.load %arg13[%c4_135, %c0_136, %c0_137] : memref<5x128x8xf32, #tpu.memory_space<vmem>>, vector<1x128x8xf32>
    %326 = vector.shape_cast %325 : vector<1x128x8xf32> to vector<128x8xf32>
    %327 = arith.truncf %324 : vector<4x128xf32> to vector<4x128xbf16>
    %328 = arith.truncf %326 : vector<128x8xf32> to vector<128x8xbf16>
    %cst_138 = arith.constant dense<0.000000e+00> : vector<4x8xf32>
    %329 = tpu.matmul %327, %328, %cst_138 {dimension_numbers = #tpu.dot_dimension_numbers<[1], [0], [0], [1], [0, 0, 1, 1], [], []>} : vector<4x128xbf16>, vector<128x8xbf16>, vector<4x8xf32> -> vector<4x8xf32>
    %c4_139 = arith.constant 4 : index
    %c0_140 = arith.constant 0 : index
    %c0_141 = arith.constant 0 : index
    %330 = vector.load %arg14[%c4_139, %c0_140, %c0_141] : memref<5x1x8xf32, #tpu.memory_space<vmem>>, vector<1x1x8xf32>
    %331 = vector.shape_cast %330 : vector<1x1x8xf32> to vector<1x8xf32>
    %332 = vector.broadcast %331 : vector<1x8xf32> to vector<4x8xf32>
    %333 = arith.addf %329, %332 : vector<4x8xf32>
    %334 = vector.extract_strided_slice %333 {offsets = [0, 0], sizes = [4, 4], strides = [1, 1]} : vector<4x8xf32> to vector<4x4xf32>
    %c0_142 = arith.constant 0 : index
    %c0_143 = arith.constant 0 : index
    %c0_144 = arith.constant 0 : index
    %335 = vector.load %arg24[%c0_142, %c0_143, %c0_144] : memref<1x4x4xf32, #tpu.memory_space<vmem>>, vector<1x4x4xf32>
    %336 = vector.shape_cast %335 : vector<1x4x4xf32> to vector<4x4xf32>
    %337 = vector.shape_cast %334 : vector<4x4xf32> to vector<1x4x4xf32>
    tpu.vector_store %arg24[%c0_142, %c0_143, %c0_144], %337 {strides = array<i32>} : memref<1x4x4xf32, #tpu.memory_space<vmem>>, vector<1x4x4xf32>,
    %338 = tpu.iota {dimensions = array<i32: 1>} : vector<4x8xi32>
    %c4_i32 = arith.constant 4 : i32
    %339 = vector.broadcast %c4_i32 : i32 to vector<4x8xi32>
    %340 = arith.cmpi slt, %338, %339 : vector<4x8xi32>
    %cst_145 = arith.constant -1.000000e+30 : f32
    %341 = vector.broadcast %cst_145 : f32 to vector<4x8xf32>
    %342 = arith.select %340, %333, %341 : vector<4x8xi1>, vector<4x8xf32>
    %cst_146 = arith.constant dense<0xFF800000> : vector<4xf32>
    %343 = vector.multi_reduction <maximumf>, %342, %cst_146 [1] : vector<4x8xf32> to vector<4xf32>
    %344 = vector.shape_cast %343 : vector<4xf32> to vector<4x1xf32>
    %345 = vector.broadcast %344 : vector<4x1xf32> to vector<4x8xf32>
    %346 = arith.cmpf oge, %333, %345 : vector<4x8xf32>
    %347 = arith.andi %340, %346 : vector<4x8xi1>
    %c8_i32 = arith.constant 8 : i32
    %348 = vector.broadcast %c8_i32 : i32 to vector<4x8xi32>
    %349 = arith.select %347, %338, %348 : vector<4x8xi1>, vector<4x8xi32>
    %cst_147 = arith.constant dense<2147483647> : vector<4xi32>
    %350 = vector.multi_reduction <minsi>, %349, %cst_147 [1] : vector<4x8xi32> to vector<4xi32>
    %351 = vector.shape_cast %350 : vector<4xi32> to vector<4x1xi32>
    %352 = vector.broadcast %351 : vector<4x1xi32> to vector<4x8xi32>
    %353 = arith.cmpi eq, %338, %352 : vector<4x8xi32>
    %354 = arith.extui %353 : vector<4x8xi1> to vector<4x8xi32>
    %355 = arith.sitofp %354 : vector<4x8xi32> to vector<4x8xf32>
    %c0_148 = arith.constant 0 : index
    %c0_149 = arith.constant 0 : index
    %356 = vector.load %arg15[%c0_148, %c0_149] : memref<8x128xf32, #tpu.memory_space<vmem>>, vector<8x128xf32>
    %357 = arith.truncf %355 : vector<4x8xf32> to vector<4x8xbf16>
    %358 = arith.truncf %356 : vector<8x128xf32> to vector<8x128xbf16>
    %cst_150 = arith.constant dense<0.000000e+00> : vector<4x128xf32>
    %359 = tpu.matmul %357, %358, %cst_150 {dimension_numbers = #tpu.dot_dimension_numbers<[1], [0], [0], [1], [0, 0, 1, 1], [], []>} : vector<4x8xbf16>, vector<8x128xbf16>, vector<4x128xf32> -> vector<4x128xf32>
    %360 = arith.truncf %260 : vector<4x128xf32> to vector<4x128xbf16>
    %361 = arith.truncf %50 : vector<8x128xf32> to vector<8x128xbf16>
    %cst_151 = arith.constant dense<0.000000e+00> : vector<4x8xf32>
    %362 = tpu.matmul %360, %361, %cst_151 {dimension_numbers = #tpu.dot_dimension_numbers<[1], [1], [0], [0], [0, 0, 1, 0], [], []>} : vector<4x128xbf16>, vector<8x128xbf16>, vector<4x8xf32> -> vector<4x8xf32>
    %cst_152 = arith.constant -1.000000e+09 : f32
    %363 = vector.shape_cast %29 : vector<1x8xi1> to vector<1x8xi1>
    %364 = vector.broadcast %363 : vector<1x8xi1> to vector<4x8xi1>
    %365 = vector.broadcast %cst_152 : f32 to vector<4x8xf32>
    %366 = arith.select %364, %362, %365 : vector<4x8xi1>, vector<4x8xf32>
    %cst_153 = arith.constant dense<0xFF800000> : vector<4xf32>
    %367 = vector.multi_reduction <maximumf>, %366, %cst_153 [1] : vector<4x8xf32> to vector<4xf32>
    %368 = vector.shape_cast %367 : vector<4xf32> to vector<4x1xf32>
    %369 = vector.broadcast %368 : vector<4x1xf32> to vector<4x8xf32>
    %370 = arith.subf %366, %369 : vector<4x8xf32>
    %371 = math.exp %370 : vector<4x8xf32>
    %cst_154 = arith.constant dense<0.000000e+00> : vector<4xf32>
    %372 = vector.multi_reduction <add>, %371, %cst_154 [1] : vector<4x8xf32> to vector<4xf32>
    %373 = vector.shape_cast %372 : vector<4xf32> to vector<4x1xf32>
    %374 = tpu.reciprocal %373 {approx = true} : vector<4x1xf32> -> vector<4x1xf32>
    %375 = vector.broadcast %374 : vector<4x1xf32> to vector<4x8xf32>
    %376 = arith.mulf %371, %375 : vector<4x8xf32>
    %377 = arith.truncf %376 : vector<4x8xf32> to vector<4x8xbf16>
    %378 = arith.truncf %16 : vector<8x128xf32> to vector<8x128xbf16>
    %cst_155 = arith.constant dense<0.000000e+00> : vector<4x128xf32>
    %379 = tpu.matmul %377, %378, %cst_155 {dimension_numbers = #tpu.dot_dimension_numbers<[1], [0], [0], [1], [0, 0, 1, 1], [], []>} : vector<4x8xbf16>, vector<8x128xbf16>, vector<4x128xf32> -> vector<4x128xf32>
    %380 = tpu.concatenate %379, %359 in 1 : vector<4x128xf32>, vector<4x128xf32> -> vector<4x256xf32>
    %c0_156 = arith.constant 0 : index
    %c0_157 = arith.constant 0 : index
    %381 = vector.load %arg17[%c0_156, %c0_157] : memref<256x128xf32, #tpu.memory_space<vmem>>, vector<256x128xf32>
    %382 = arith.truncf %380 : vector<4x256xf32> to vector<4x256xbf16>
    %383 = arith.truncf %381 : vector<256x128xf32> to vector<256x128xbf16>
    %cst_158 = arith.constant dense<0.000000e+00> : vector<4x128xf32>
    %384 = tpu.matmul %382, %383, %cst_158 {dimension_numbers = #tpu.dot_dimension_numbers<[1], [0], [0], [1], [0, 0, 1, 1], [], []>} : vector<4x256xbf16>, vector<256x128xbf16>, vector<4x128xf32> -> vector<4x128xf32>
    %385 = vector.extract_strided_slice %384 {offsets = [0, 0], sizes = [1, 128], strides = [1, 1]} : vector<4x128xf32> to vector<1x128xf32>
    %386 = vector.broadcast %385 : vector<1x128xf32> to vector<8x128xf32>
    %387 = arith.addf %51, %386 : vector<8x128xf32>
    %388 = math.tanh %387 : vector<8x128xf32>
    %389 = vector.extract_strided_slice %384 {offsets = [1, 0], sizes = [1, 128], strides = [1, 1]} : vector<4x128xf32> to vector<1x128xf32>
    %390 = vector.broadcast %389 : vector<1x128xf32> to vector<8x128xf32>
    %391 = arith.addf %51, %390 : vector<8x128xf32>
    %392 = math.tanh %391 : vector<8x128xf32>
    %393 = vector.extract_strided_slice %384 {offsets = [2, 0], sizes = [1, 128], strides = [1, 1]} : vector<4x128xf32> to vector<1x128xf32>
    %394 = vector.broadcast %393 : vector<1x128xf32> to vector<8x128xf32>
    %395 = arith.addf %51, %394 : vector<8x128xf32>
    %396 = math.tanh %395 : vector<8x128xf32>
    %397 = vector.extract_strided_slice %384 {offsets = [3, 0], sizes = [1, 128], strides = [1, 1]} : vector<4x128xf32> to vector<1x128xf32>
    %398 = vector.broadcast %397 : vector<1x128xf32> to vector<8x128xf32>
    %399 = arith.addf %51, %398 : vector<8x128xf32>
    %400 = math.tanh %399 : vector<8x128xf32>
    %401 = tpu.concatenate %388, %392, %396, %400 in 0 : vector<8x128xf32>, vector<8x128xf32>, vector<8x128xf32>, vector<8x128xf32> -> vector<32x128xf32>
    %c0_159 = arith.constant 0 : index
    %c0_160 = arith.constant 0 : index
    %402 = vector.load %arg18[%c0_159, %c0_160] : memref<128x2xf32, #tpu.memory_space<vmem>>, vector<128x2xf32>
    %403 = arith.truncf %401 : vector<32x128xf32> to vector<32x128xbf16>
    %404 = arith.truncf %402 : vector<128x2xf32> to vector<128x2xbf16>
    %cst_161 = arith.constant dense<0.000000e+00> : vector<32x2xf32>
    %405 = tpu.matmul %403, %404, %cst_161 {dimension_numbers = #tpu.dot_dimension_numbers<[1], [0], [0], [1], [0, 0, 1, 1], [], []>} : vector<32x128xbf16>, vector<128x2xbf16>, vector<32x2xf32> -> vector<32x2xf32>
    %c0_162 = arith.constant 0 : index
    %c0_163 = arith.constant 0 : index
    %406 = vector.load %arg19[%c0_162, %c0_163] : memref<1x2xf32, #tpu.memory_space<vmem>>, vector<1x2xf32>
    %407 = vector.broadcast %406 : vector<1x2xf32> to vector<32x2xf32>
    %408 = arith.addf %405, %407 : vector<32x2xf32>
    %c0_164 = arith.constant 0 : index
    %c0_165 = arith.constant 0 : index
    %c0_166 = arith.constant 0 : index
    %409 = vector.load %arg25[%c0_164, %c0_165, %c0_166] : memref<1x32x2xf32, #tpu.memory_space<vmem>>, vector<1x32x2xf32>
    %410 = vector.shape_cast %409 : vector<1x32x2xf32> to vector<32x2xf32>
    %411 = vector.shape_cast %408 : vector<32x2xf32> to vector<1x32x2xf32>
    tpu.vector_store %arg25[%c0_164, %c0_165, %c0_166], %411 {strides = array<i32>} : memref<1x32x2xf32, #tpu.memory_space<vmem>>, vector<1x32x2xf32>,
    return
  }
  func.func @transform_0(%arg0: i32, %arg1: memref<2xi32, #tpu.memory_space<smem>>, %arg2: memref<2xi32, #tpu.memory_space<smem>>) -> (i32, i32, i32) {
    %c0_i32 = arith.constant 0 : i32
    %c0_i32_0 = arith.constant 0 : i32
    %c0_i32_1 = arith.constant 0 : i32
    return %arg0, %c0_i32, %c0_i32_0 : i32, i32, i32
  }
  func.func @transform_1(%arg0: i32, %arg1: memref<2xi32, #tpu.memory_space<smem>>, %arg2: memref<2xi32, #tpu.memory_space<smem>>) -> (i32, i32, i32) {
    %c0_i32 = arith.constant 0 : i32
    %c0_i32_0 = arith.constant 0 : i32
    %c0_i32_1 = arith.constant 0 : i32
    return %arg0, %c0_i32, %c0_i32_0 : i32, i32, i32
  }
  func.func @transform_2(%arg0: i32, %arg1: memref<2xi32, #tpu.memory_space<smem>>, %arg2: memref<2xi32, #tpu.memory_space<smem>>) -> (i32, i32) {
    %c0_i32 = arith.constant 0 : i32
    %c0_i32_0 = arith.constant 0 : i32
    %c0_i32_1 = arith.constant 0 : i32
    return %c0_i32, %c0_i32_0 : i32, i32
  }
  func.func @transform_3(%arg0: i32, %arg1: memref<2xi32, #tpu.memory_space<smem>>, %arg2: memref<2xi32, #tpu.memory_space<smem>>) -> (i32, i32) {
    %c0_i32 = arith.constant 0 : i32
    %c0_i32_0 = arith.constant 0 : i32
    %c0_i32_1 = arith.constant 0 : i32
    return %c0_i32, %c0_i32_0 : i32, i32
  }
  func.func @transform_4(%arg0: i32, %arg1: memref<2xi32, #tpu.memory_space<smem>>, %arg2: memref<2xi32, #tpu.memory_space<smem>>) -> (i32, i32) {
    %c0_i32 = arith.constant 0 : i32
    %c0_i32_0 = arith.constant 0 : i32
    %c0_i32_1 = arith.constant 0 : i32
    return %c0_i32, %c0_i32_0 : i32, i32
  }
  func.func @transform_5(%arg0: i32, %arg1: memref<2xi32, #tpu.memory_space<smem>>, %arg2: memref<2xi32, #tpu.memory_space<smem>>) -> (i32, i32) {
    %c0_i32 = arith.constant 0 : i32
    %c0_i32_0 = arith.constant 0 : i32
    %c0_i32_1 = arith.constant 0 : i32
    return %c0_i32, %c0_i32_0 : i32, i32
  }
  func.func @transform_6(%arg0: i32, %arg1: memref<2xi32, #tpu.memory_space<smem>>, %arg2: memref<2xi32, #tpu.memory_space<smem>>) -> (i32, i32) {
    %c0_i32 = arith.constant 0 : i32
    %c0_i32_0 = arith.constant 0 : i32
    %c0_i32_1 = arith.constant 0 : i32
    return %c0_i32, %c0_i32_0 : i32, i32
  }
  func.func @transform_7(%arg0: i32, %arg1: memref<2xi32, #tpu.memory_space<smem>>, %arg2: memref<2xi32, #tpu.memory_space<smem>>) -> (i32, i32) {
    %c0_i32 = arith.constant 0 : i32
    %c0_i32_0 = arith.constant 0 : i32
    %c0_i32_1 = arith.constant 0 : i32
    return %c0_i32, %c0_i32_0 : i32, i32
  }
  func.func @transform_8(%arg0: i32, %arg1: memref<2xi32, #tpu.memory_space<smem>>, %arg2: memref<2xi32, #tpu.memory_space<smem>>) -> (i32, i32) {
    %c0_i32 = arith.constant 0 : i32
    %c0_i32_0 = arith.constant 0 : i32
    %c0_i32_1 = arith.constant 0 : i32
    return %c0_i32, %c0_i32_0 : i32, i32
  }
  func.func @transform_9(%arg0: i32, %arg1: memref<2xi32, #tpu.memory_space<smem>>, %arg2: memref<2xi32, #tpu.memory_space<smem>>) -> (i32, i32, i32) {
    %c0_i32 = arith.constant 0 : i32
    %c0_i32_0 = arith.constant 0 : i32
    %c0_i32_1 = arith.constant 0 : i32
    %c0_i32_2 = arith.constant 0 : i32
    return %c0_i32, %c0_i32_0, %c0_i32_1 : i32, i32, i32
  }
  func.func @transform_10(%arg0: i32, %arg1: memref<2xi32, #tpu.memory_space<smem>>, %arg2: memref<2xi32, #tpu.memory_space<smem>>) -> (i32, i32, i32) {
    %c0_i32 = arith.constant 0 : i32
    %c0_i32_0 = arith.constant 0 : i32
    %c0_i32_1 = arith.constant 0 : i32
    %c0_i32_2 = arith.constant 0 : i32
    return %c0_i32, %c0_i32_0, %c0_i32_1 : i32, i32, i32
  }
  func.func @transform_11(%arg0: i32, %arg1: memref<2xi32, #tpu.memory_space<smem>>, %arg2: memref<2xi32, #tpu.memory_space<smem>>) -> (i32, i32, i32) {
    %c0_i32 = arith.constant 0 : i32
    %c0_i32_0 = arith.constant 0 : i32
    %c0_i32_1 = arith.constant 0 : i32
    %c0_i32_2 = arith.constant 0 : i32
    return %c0_i32, %c0_i32_0, %c0_i32_1 : i32, i32, i32
  }
  func.func @transform_12(%arg0: i32, %arg1: memref<2xi32, #tpu.memory_space<smem>>, %arg2: memref<2xi32, #tpu.memory_space<smem>>) -> (i32, i32) {
    %c0_i32 = arith.constant 0 : i32
    %c0_i32_0 = arith.constant 0 : i32
    %c0_i32_1 = arith.constant 0 : i32
    return %c0_i32, %c0_i32_0 : i32, i32
  }
  func.func @transform_13(%arg0: i32, %arg1: memref<2xi32, #tpu.memory_space<smem>>, %arg2: memref<2xi32, #tpu.memory_space<smem>>) -> (i32, i32) {
    %c0_i32 = arith.constant 0 : i32
    %c0_i32_0 = arith.constant 0 : i32
    %c0_i32_1 = arith.constant 0 : i32
    return %c0_i32, %c0_i32_0 : i32, i32
  }
  func.func @transform_14(%arg0: i32, %arg1: memref<2xi32, #tpu.memory_space<smem>>, %arg2: memref<2xi32, #tpu.memory_space<smem>>) -> (i32, i32) {
    %c0_i32 = arith.constant 0 : i32
    %c0_i32_0 = arith.constant 0 : i32
    %c0_i32_1 = arith.constant 0 : i32
    return %c0_i32, %c0_i32_0 : i32, i32
  }
  func.func @transform_15(%arg0: i32, %arg1: memref<2xi32, #tpu.memory_space<smem>>, %arg2: memref<2xi32, #tpu.memory_space<smem>>) -> (i32, i32) {
    %c0_i32 = arith.constant 0 : i32
    %c0_i32_0 = arith.constant 0 : i32
    %c0_i32_1 = arith.constant 0 : i32
    return %c0_i32, %c0_i32_0 : i32, i32
  }
  func.func @transform_16(%arg0: i32, %arg1: memref<2xi32, #tpu.memory_space<smem>>, %arg2: memref<2xi32, #tpu.memory_space<smem>>) -> (i32, i32) {
    %c0_i32 = arith.constant 0 : i32
    %c0_i32_0 = arith.constant 0 : i32
    %c0_i32_1 = arith.constant 0 : i32
    return %c0_i32, %c0_i32_0 : i32, i32
  }
  func.func @transform_17(%arg0: i32, %arg1: memref<2xi32, #tpu.memory_space<smem>>, %arg2: memref<2xi32, #tpu.memory_space<smem>>) -> (i32, i32, i32) {
    %c0_i32 = arith.constant 0 : i32
    %c0_i32_0 = arith.constant 0 : i32
    %c0_i32_1 = arith.constant 0 : i32
    return %arg0, %c0_i32, %c0_i32_0 : i32, i32, i32
  }
  func.func @transform_18(%arg0: i32, %arg1: memref<2xi32, #tpu.memory_space<smem>>, %arg2: memref<2xi32, #tpu.memory_space<smem>>) -> (i32, i32, i32) {
    %c0_i32 = arith.constant 0 : i32
    %c0_i32_0 = arith.constant 0 : i32
    %c0_i32_1 = arith.constant 0 : i32
    return %arg0, %c0_i32, %c0_i32_0 : i32, i32, i32
  }
  func.func @transform_19(%arg0: i32, %arg1: memref<2xi32, #tpu.memory_space<smem>>, %arg2: memref<2xi32, #tpu.memory_space<smem>>) -> (i32, i32, i32) {
    %c0_i32 = arith.constant 0 : i32
    %c0_i32_0 = arith.constant 0 : i32
    %c0_i32_1 = arith.constant 0 : i32
    return %arg0, %c0_i32, %c0_i32_0 : i32, i32, i32
  }
  func.func @transform_20(%arg0: i32, %arg1: memref<2xi32, #tpu.memory_space<smem>>, %arg2: memref<2xi32, #tpu.memory_space<smem>>) -> (i32, i32, i32) {
    %c0_i32 = arith.constant 0 : i32
    %c0_i32_0 = arith.constant 0 : i32
    %c0_i32_1 = arith.constant 0 : i32
    return %arg0, %c0_i32, %c0_i32_0 : i32, i32, i32
  }
  func.func @transform_21(%arg0: i32, %arg1: memref<2xi32, #tpu.memory_space<smem>>, %arg2: memref<2xi32, #tpu.memory_space<smem>>) -> (i32, i32, i32) {
    %c0_i32 = arith.constant 0 : i32
    %c0_i32_0 = arith.constant 0 : i32
    %c0_i32_1 = arith.constant 0 : i32
    return %arg0, %c0_i32, %c0_i32_0 : i32, i32, i32
  }
  func.func @transform_22(%arg0: i32, %arg1: memref<2xi32, #tpu.memory_space<smem>>, %arg2: memref<2xi32, #tpu.memory_space<smem>>) -> (i32, i32, i32) {
    %c0_i32 = arith.constant 0 : i32
    %c0_i32_0 = arith.constant 0 : i32
    %c0_i32_1 = arith.constant 0 : i32
    return %arg0, %c0_i32, %c0_i32_0 : i32, i32, i32
  }
}

</mosaic_0001>

<llo_original>
// kernel: seq2sql_forward.1
$region0: #{seq2sql_forward.1}
  #allocation0 [shape = 'u32[]', space=smem, size = 0x4, offset = 0x4, fixed_abs, tag = 'smem constant byte address 0x4 - core index']
  #allocation1 [shape = 'u32[72,128]{1,0:T(1,128)}', space=vmem, size = 0x9000, scoped, tag = 'internal scratch']
  #allocation2 [shape = 's32[1]{0}', space=sflag, size = 0x4, scoped, tag = 'scoped memory for seq2sql_forward.1']
  #allocation3 [shape = 'u8[512]{0}', space=smem, size = 0x200, scoped, tag = 'prefetched SMEM operand 0']
  #allocation4 [shape = 'u8[512]{0}', space=smem, size = 0x200, scoped, tag = 'prefetched SMEM operand 1']
  %s0 = inlined_call_operand.vmem [shape: s32[2], index: 0, kind: input, shape index: {}]
  %s1 = inlined_call_operand.vmem [shape: s32[2], index: 1, kind: input, shape index: {}]
  %s2 = inlined_call_operand.vmem [shape: f32[2,8,128], index: 2, kind: input, shape index: {}]
  %s3 = inlined_call_operand.vmem [shape: f32[2,5,128], index: 3, kind: input, shape index: {}]
  %s4 = inlined_call_operand.vmem [shape: f32[128,384], index: 4, kind: input, shape index: {}]
  %s5 = inlined_call_operand.vmem [shape: f32[1,384], index: 5, kind: input, shape index: {}]
  %s6 = inlined_call_operand.vmem [shape: f32[128,128], index: 6, kind: input, shape index: {}]
  %s7 = inlined_call_operand.vmem [shape: f32[1,128], index: 7, kind: input, shape index: {}]
  %s8 = inlined_call_operand.vmem [shape: f32[128,384], index: 8, kind: input, shape index: {}]
  %s9 = inlined_call_operand.vmem [shape: f32[128,256], index: 9, kind: input, shape index: {}]
  %s10 = inlined_call_operand.vmem [shape: f32[128,256], index: 10, kind: input, shape index: {}]
  %s11 = inlined_call_operand.vmem [shape: f32[5,256,128], index: 11, kind: input, shape index: {}]
  %s12 = inlined_call_operand.vmem [shape: f32[5,128,8], index: 12, kind: input, shape index: {}]
  %s13 = inlined_call_operand.vmem [shape: f32[5,1,8], index: 13, kind: input, shape index: {}]
  %s14 = inlined_call_operand.vmem [shape: f32[8,128], index: 14, kind: input, shape index: {}]
  %s15 = inlined_call_operand.vmem [shape: f32[1,128], index: 15, kind: input, shape index: {}]
  %s16 = inlined_call_operand.vmem [shape: f32[256,128], index: 16, kind: input, shape index: {}]
  %s17 = inlined_call_operand.vmem [shape: f32[128,2], index: 17, kind: input, shape index: {}]
  %s18 = inlined_call_operand.vmem [shape: f32[1,2], index: 18, kind: input, shape index: {}]
  %s19 = inlined_call_operand.vmem [shape: f32[2,5,1], index: 19, kind: output, shape index: {0}]
  %s20 = inlined_call_operand.hbm [shape: f32[2,1,6], index: 20, kind: output, shape index: {1}]
  %s21 = inlined_call_operand.hbm [shape: f32[2,1,5], index: 21, kind: output, shape index: {2}]
  %s22 = inlined_call_operand.vmem [shape: f32[2,5,1], index: 22, kind: output, shape index: {3}]
  %s23 = inlined_call_operand.hbm [shape: f32[2,4,4], index: 23, kind: output, shape index: {4}]
  %s24 = inlined_call_operand.vmem [shape: f32[2,32,2], index: 24, kind: output, shape index: {5}]
  %25 = xla_tuple %s19, %s20, %s21, %s22, %s23, %s24
  %s26 = sld [smem:[#allocation0]]
  $region141: #{seq2sql_forward.1} parent=0
    _
  %s28 = ssub.s32 1, %s26
  %s29 = scalar_select 0, %s28, %s26
  %s31 = sshll.u32 %s0, 4
  %s32 = int_to_ptr.vmem [resolvable:$true] %s31
  %34 = dma.vmem_to_smem %s32, 16, [#allocation3], [#allocation2]
  %s36 = sshll.u32 %s1, 4
  %s37 = int_to_ptr.vmem [resolvable:$true] %s36
  %39 = dma.vmem_to_smem %s37, 16, [#allocation4], [#allocation2]
  %41 = dma.done [#allocation2], 32
  %42 = sfence
  $region1: #{seq2sql_forward.1} parent=0
    #allocation5 [shape = 'u8[1024]{0}', space=vmem, size = 0x400, scoped, tag = 'output window, operand 1']
    #allocation6 [shape = 's32[2]{0}', space=sflag, size = 0x8, scoped, tag = 'scoped memory for seq2sql_forward.1']
    #allocation7 [shape = 'u8[1024]{0}', space=vmem, size = 0x400, scoped, tag = 'output window, operand 2']
    #allocation8 [shape = 's32[2]{0}', space=sflag, size = 0x8, scoped, tag = 'scoped memory for seq2sql_forward.1']
    #allocation9 [shape = 'u8[4096]{0}', space=vmem, size = 0x1000, scoped, tag = 'output window, operand 4']
    %43 = vsyncpa [#allocation6], 0
    %s44 = scalar_lea.sflag [#allocation6], 1
    %45 = vsyncpa %s44, 0
    %46 = vsyncpa [#allocation8], 0
    %s47 = scalar_lea.sflag [#allocation8], 1
    %48 = vsyncpa %s47, 0
    loop: start=0, step=1, limit=4
    $region2: #{seq2sql_forward.1} parent=1 // loop_pre_header
      _
    $region3: #{seq2sql_forward.1} parent=1 // loop_header
      %s50 = sphi 0, %s54
      %p51 = scmp.ge.s32.totalorder %s50, 4
      %s60 = sphi 0, %s62
      %s63 = sphi 0, %s60
      %s64 = sphi 0, %s63
      %s80 = sphi 0, %s64
      %s86 = sphi 0, %s88
      %s89 = sphi 0, %s86
      %s90 = sphi 0, %s89
      %s106 = sphi 0, %s90
      %s110 = sphi 0, %s110
      %s112 = sphi 0, %s110
      %s113 = sphi 0, %s112
      %s127 = sphi 0, %s113
      %s131 = sphi 0, %s131
      %s133 = sphi 0, %s131
      %s134 = sphi 0, %s133
      %s148 = sphi 0, %s134
      %s152 = sphi 0, %s152
      %s154 = sphi 0, %s152
      %s155 = sphi 0, %s154
      %s169 = sphi 0, %s155
      %s173 = sphi 0, %s173
      %s175 = sphi 0, %s173
      %s176 = sphi 0, %s175
      %s190 = sphi 0, %s176
      %s194 = sphi 0, %s194
      %s196 = sphi 0, %s194
      %s197 = sphi 0, %s196
      %s211 = sphi 0, %s197
      %s215 = sphi 0, %s215
      %s217 = sphi 0, %s215
      %s218 = sphi 0, %s217
      %s232 = sphi 0, %s218
      %s236 = sphi 0, %s236
      %s238 = sphi 0, %s236
      %s239 = sphi 0, %s238
      %s253 = sphi 0, %s239
      %s257 = sphi 0, %s257
      %s259 = sphi 0, %s257
      %s260 = sphi 0, %s259
      %s274 = sphi 0, %s260
      %s278 = sphi 0, %s278
      %s280 = sphi 0, %s278
      %s281 = sphi 0, %s280
      %s295 = sphi 0, %s281
      %s299 = sphi 0, %s299
      %s301 = sphi 0, %s299
      %s302 = sphi 0, %s301
      %s316 = sphi 0, %s302
      %s320 = sphi 0, %s320
      %s322 = sphi 0, %s320
      %s323 = sphi 0, %s322
      %s337 = sphi 0, %s323
      %s341 = sphi 0, %s341
      %s343 = sphi 0, %s341
      %s344 = sphi 0, %s343
      %s358 = sphi 0, %s344
      %s362 = sphi 0, %s362
      %s364 = sphi 0, %s362
      %s365 = sphi 0, %s364
      %s379 = sphi 0, %s365
      %s383 = sphi 0, %s383
      %s385 = sphi 0, %s383
      %s386 = sphi 0, %s385
      %s400 = sphi 0, %s386
      %s404 = sphi 0, %s404
      %s406 = sphi 0, %s404
      %s407 = sphi 0, %s406
      %s421 = sphi 0, %s407
      %s427 = sphi 0, %s429
      %s430 = sphi 0, %s427
      %s431 = sphi 0, %s430
      %s447 = sphi 0, %s431
      %s453 = sphi 0, %s455
      %s456 = sphi 0, %s453
      %s457 = sphi 0, %s456
      %s473 = sphi 0, %s457
      %s479 = sphi 0, %s481
      %s482 = sphi 0, %s479
      %s483 = sphi 0, %s482
      %s499 = sphi 0, %s483
      %s505 = sphi 0, %s507
      %s508 = sphi 0, %s505
      %s509 = sphi 0, %s508
      %s525 = sphi 0, %s509
      %s531 = sphi 0, %s533
      %s534 = sphi 0, %s531
      %s535 = sphi 0, %s534
      %s551 = sphi 0, %s535
      %s557 = sphi 0, %s559
      %s560 = sphi 0, %s557
      %s561 = sphi 0, %s560
      %s577 = sphi 0, %s561
    $region4: #{seq2sql_forward.1} parent=1 // loop_header_branch
      %53 = sbr.rel (%p51) target = $region8
    $region5: #{seq2sql_forward.1} parent=1 // loop_body
      %s55 = ssub.s32 %s50, 1
      %s56 = ssub.s32 %s50, 2
      %s57 = sadd.s32 %s50, 1
      %s58 = ssub.s32 %s50, %s57
      %p59 = scmp.eq.s32.totalorder %s58, 0
      %s61 = sadd.s32 %s60, 1
      %s62 = scalar_select %p59, %s60, %s61
      %p65 = pneg %p59
      %p66 = scmp.eq.s32.totalorder %s50, 1
      %p67 = por %p65, %p66
      %p68 = scmp.ne.s32.totalorder %s60, %s63
      %p69 = scmp.eq.s32.totalorder %s50, 0
      %p70 = por %p68, %p69
      %p71 = scmp.ne.s32.totalorder %s60, %s63
      %p72 = scmp.eq.s32.totalorder %s55, 1
      %p73 = por %p71, %p72
      %p74 = scmp.ne.s32.totalorder %s63, %s64
      %p75 = scmp.eq.s32.totalorder %s55, 0
      %p76 = por %p74, %p75
      %p77 = scmp.ne.s32.totalorder %s63, %s64
      %p78 = scmp.eq.s32.totalorder %s56, 1
      %p79 = por %p77, %p78
      %p81 = scmp.ne.s32.totalorder %s64, %s80
      %p82 = scmp.eq.s32.totalorder %s56, 0
      %p83 = por %p81, %p82
      %s84 = ssub.s32 %s50, %s57
      %p85 = scmp.eq.s32.totalorder %s84, 0
      %s87 = sadd.s32 %s86, 1
      %s88 = scalar_select %p85, %s86, %s87
      %p91 = pneg %p85
      %p92 = scmp.eq.s32.totalorder %s50, 1
      %p93 = por %p91, %p92
      %p94 = scmp.ne.s32.totalorder %s86, %s89
      %p95 = scmp.eq.s32.totalorder %s50, 0
      %p96 = por %p94, %p95
      %p97 = scmp.ne.s32.totalorder %s86, %s89
      %p98 = scmp.eq.s32.totalorder %s55, 1
      %p99 = por %p97, %p98
      %p100 = scmp.ne.s32.totalorder %s89, %s90
      %p101 = scmp.eq.s32.totalorder %s55, 0
      %p102 = por %p100, %p101
      %p103 = scmp.ne.s32.totalorder %s89, %s90
      %p104 = scmp.eq.s32.totalorder %s56, 1
      %p105 = por %p103, %p104
      %p107 = scmp.ne.s32.totalorder %s90, %s106
      %p108 = scmp.eq.s32.totalorder %s56, 0
      %p109 = por %p107, %p108
      %s111 = sadd.s32 %s110, 1
      %p114 = scmp.eq.s32.totalorder %s50, 1
      %p115 = scmp.ne.s32.totalorder %s110, %s112
      %p116 = scmp.eq.s32.totalorder %s50, 0
      %p117 = por %p115, %p116
      %p118 = scmp.ne.s32.totalorder %s110, %s112
      %p119 = scmp.eq.s32.totalorder %s55, 1
      %p120 = por %p118, %p119
      %p121 = scmp.ne.s32.totalorder %s112, %s113
      %p122 = scmp.eq.s32.totalorder %s55, 0
      %p123 = por %p121, %p122
      %p124 = scmp.ne.s32.totalorder %s112, %s113
      %p125 = scmp.eq.s32.totalorder %s56, 1
      %p126 = por %p124, %p125
      %p128 = scmp.ne.s32.totalorder %s113, %s127
      %p129 = scmp.eq.s32.totalorder %s56, 0
      %p130 = por %p128, %p129
      %s132 = sadd.s32 %s131, 1
      %p135 = scmp.eq.s32.totalorder %s50, 1
      %p136 = scmp.ne.s32.totalorder %s131, %s133
      %p137 = scmp.eq.s32.totalorder %s50, 0
      %p138 = por %p136, %p137
      %p139 = scmp.ne.s32.totalorder %s131, %s133
      %p140 = scmp.eq.s32.totalorder %s55, 1
      %p141 = por %p139, %p140
      %p142 = scmp.ne.s32.totalorder %s133, %s134
      %p143 = scmp.eq.s32.totalorder %s55, 0
      %p144 = por %p142, %p143
      %p145 = scmp.ne.s32.totalorder %s133, %s134
      %p146 = scmp.eq.s32.totalorder %s56, 1
      %p147 = por %p145, %p146
      %p149 = scmp.ne.s32.totalorder %s134, %s148
      %p150 = scmp.eq.s32.totalorder %s56, 0
      %p151 = por %p149, %p150
      %s153 = sadd.s32 %s152, 1
      %p156 = scmp.eq.s32.totalorder %s50, 1
      %p157 = scmp.ne.s32.totalorder %s152, %s154
      %p158 = scmp.eq.s32.totalorder %s50, 0
      %p159 = por %p157, %p158
      %p160 = scmp.ne.s32.totalorder %s152, %s154
      %p161 = scmp.eq.s32.totalorder %s55, 1
      %p162 = por %p160, %p161
      %p163 = scmp.ne.s32.totalorder %s154, %s155
      %p164 = scmp.eq.s32.totalorder %s55, 0
      %p165 = por %p163, %p164
      %p166 = scmp.ne.s32.totalorder %s154, %s155
      %p167 = scmp.eq.s32.totalorder %s56, 1
      %p168 = por %p166, %p167
      %p170 = scmp.ne.s32.totalorder %s155, %s169
      %p171 = scmp.eq.s32.totalorder %s56, 0
      %p172 = por %p170, %p171
      %s174 = sadd.s32 %s173, 1
      %p177 = scmp.eq.s32.totalorder %s50, 1
      %p178 = scmp.ne.s32.totalorder %s173, %s175
      %p179 = scmp.eq.s32.totalorder %s50, 0
      %p180 = por %p178, %p179
      %p181 = scmp.ne.s32.totalorder %s173, %s175
      %p182 = scmp.eq.s32.totalorder %s55, 1
      %p183 = por %p181, %p182
      %p184 = scmp.ne.s32.totalorder %s175, %s176
      %p185 = scmp.eq.s32.totalorder %s55, 0
      %p186 = por %p184, %p185
      %p187 = scmp.ne.s32.totalorder %s175, %s176
      %p188 = scmp.eq.s32.totalorder %s56, 1
      %p189 = por %p187, %p188
      %p191 = scmp.ne.s32.totalorder %s176, %s190
      %p192 = scmp.eq.s32.totalorder %s56, 0
      %p193 = por %p191, %p192
      %s195 = sadd.s32 %s194, 1
      %p198 = scmp.eq.s32.totalorder %s50, 1
      %p199 = scmp.ne.s32.totalorder %s194, %s196
      %p200 = scmp.eq.s32.totalorder %s50, 0
      %p201 = por %p199, %p200
      %p202 = scmp.ne.s32.totalorder %s194, %s196
      %p203 = scmp.eq.s32.totalorder %s55, 1
      %p204 = por %p202, %p203
      %p205 = scmp.ne.s32.totalorder %s196, %s197
      %p206 = scmp.eq.s32.totalorder %s55, 0
      %p207 = por %p205, %p206
      %p208 = scmp.ne.s32.totalorder %s196, %s197
      %p209 = scmp.eq.s32.totalorder %s56, 1
      %p210 = por %p208, %p209
      %p212 = scmp.ne.s32.totalorder %s197, %s211
      %p213 = scmp.eq.s32.totalorder %s56, 0
      %p214 = por %p212, %p213
      %s216 = sadd.s32 %s215, 1
      %p219 = scmp.eq.s32.totalorder %s50, 1
      %p220 = scmp.ne.s32.totalorder %s215, %s217
      %p221 = scmp.eq.s32.totalorder %s50, 0
      %p222 = por %p220, %p221
      %p223 = scmp.ne.s32.totalorder %s215, %s217
      %p224 = scmp.eq.s32.totalorder %s55, 1
      %p225 = por %p223, %p224
      %p226 = scmp.ne.s32.totalorder %s217, %s218
      %p227 = scmp.eq.s32.totalorder %s55, 0
      %p228 = por %p226, %p227
      %p229 = scmp.ne.s32.totalorder %s217, %s218
      %p230 = scmp.eq.s32.totalorder %s56, 1
      %p231 = por %p229, %p230
      %p233 = scmp.ne.s32.totalorder %s218, %s232
      %p234 = scmp.eq.s32.totalorder %s56, 0
      %p235 = por %p233, %p234
      %s237 = sadd.s32 %s236, 1
      %p240 = scmp.eq.s32.totalorder %s50, 1
      %p241 = scmp.ne.s32.totalorder %s236, %s238
      %p242 = scmp.eq.s32.totalorder %s50, 0
      %p243 = por %p241, %p242
      %p244 = scmp.ne.s32.totalorder %s236, %s238
      %p245 = scmp.eq.s32.totalorder %s55, 1
      %p246 = por %p244, %p245
      %p247 = scmp.ne.s32.totalorder %s238, %s239
      %p248 = scmp.eq.s32.totalorder %s55, 0
      %p249 = por %p247, %p248
      %p250 = scmp.ne.s32.totalorder %s238, %s239
      %p251 = scmp.eq.s32.totalorder %s56, 1
      %p252 = por %p250, %p251
      %p254 = scmp.ne.s32.totalorder %s239, %s253
      %p255 = scmp.eq.s32.totalorder %s56, 0
      %p256 = por %p254, %p255
      %s258 = sadd.s32 %s257, 1
      %p261 = scmp.eq.s32.totalorder %s50, 1
      %p262 = scmp.ne.s32.totalorder %s257, %s259
      %p263 = scmp.eq.s32.totalorder %s50, 0
      %p264 = por %p262, %p263
      %p265 = scmp.ne.s32.totalorder %s257, %s259
      %p266 = scmp.eq.s32.totalorder %s55, 1
      %p267 = por %p265, %p266
      %p268 = scmp.ne.s32.totalorder %s259, %s260
      %p269 = scmp.eq.s32.totalorder %s55, 0
      %p270 = por %p268, %p269
      %p271 = scmp.ne.s32.totalorder %s259, %s260
      %p272 = scmp.eq.s32.totalorder %s56, 1
      %p273 = por %p271, %p272
      %p275 = scmp.ne.s32.totalorder %s260, %s274
      %p276 = scmp.eq.s32.totalorder %s56, 0
      %p277 = por %p275, %p276
      %s279 = sadd.s32 %s278, 1
      %p282 = scmp.eq.s32.totalorder %s50, 1
      %p283 = scmp.ne.s32.totalorder %s278, %s280
      %p284 = scmp.eq.s32.totalorder %s50, 0
      %p285 = por %p283, %p284
      %p286 = scmp.ne.s32.totalorder %s278, %s280
      %p287 = scmp.eq.s32.totalorder %s55, 1
      %p288 = por %p286, %p287
      %p289 = scmp.ne.s32.totalorder %s280, %s281
      %p290 = scmp.eq.s32.totalorder %s55, 0
      %p291 = por %p289, %p290
      %p292 = scmp.ne.s32.totalorder %s280, %s281
      %p293 = scmp.eq.s32.totalorder %s56, 1
      %p294 = por %p292, %p293
      %p296 = scmp.ne.s32.totalorder %s281, %s295
      %p297 = scmp.eq.s32.totalorder %s56, 0
      %p298 = por %p296, %p297
      %s300 = sadd.s32 %s299, 1
      %p303 = scmp.eq.s32.totalorder %s50, 1
      %p304 = scmp.ne.s32.totalorder %s299, %s301
      %p305 = scmp.eq.s32.totalorder %s50, 0
      %p306 = por %p304, %p305
      %p307 = scmp.ne.s32.totalorder %s299, %s301
      %p308 = scmp.eq.s32.totalorder %s55, 1
      %p309 = por %p307, %p308
      %p310 = scmp.ne.s32.totalorder %s301, %s302
      %p311 = scmp.eq.s32.totalorder %s55, 0
      %p312 = por %p310, %p311
      %p313 = scmp.ne.s32.totalorder %s301, %s302
      %p314 = scmp.eq.s32.totalorder %s56, 1
      %p315 = por %p313, %p314
      %p317 = scmp.ne.s32.totalorder %s302, %s316
      %p318 = scmp.eq.s32.totalorder %s56, 0
      %p319 = por %p317, %p318
      %s321 = sadd.s32 %s320, 1
      %p324 = scmp.eq.s32.totalorder %s50, 1
      %p325 = scmp.ne.s32.totalorder %s320, %s322
      %p326 = scmp.eq.s32.totalorder %s50, 0
      %p327 = por %p325, %p326
      %p328 = scmp.ne.s32.totalorder %s320, %s322
      %p329 = scmp.eq.s32.totalorder %s55, 1
      %p330 = por %p328, %p329
      %p331 = scmp.ne.s32.totalorder %s322, %s323
      %p332 = scmp.eq.s32.totalorder %s55, 0
      %p333 = por %p331, %p332
      %p334 = scmp.ne.s32.totalorder %s322, %s323
      %p335 = scmp.eq.s32.totalorder %s56, 1
      %p336 = por %p334, %p335
      %p338 = scmp.ne.s32.totalorder %s323, %s337
      %p339 = scmp.eq.s32.totalorder %s56, 0
      %p340 = por %p338, %p339
      %s342 = sadd.s32 %s341, 1
      %p345 = scmp.eq.s32.totalorder %s50, 1
      %p346 = scmp.ne.s32.totalorder %s341, %s343
      %p347 = scmp.eq.s32.totalorder %s50, 0
      %p348 = por %p346, %p347
      %p349 = scmp.ne.s32.totalorder %s341, %s343
      %p350 = scmp.eq.s32.totalorder %s55, 1
      %p351 = por %p349, %p350
      %p352 = scmp.ne.s32.totalorder %s343, %s344
      %p353 = scmp.eq.s32.totalorder %s55, 0
      %p354 = por %p352, %p353
      %p355 = scmp.ne.s32.totalorder %s343, %s344
      %p356 = scmp.eq.s32.totalorder %s56, 1
      %p357 = por %p355, %p356
      %p359 = scmp.ne.s32.totalorder %s344, %s358
      %p360 = scmp.eq.s32.totalorder %s56, 0
      %p361 = por %p359, %p360
      %s363 = sadd.s32 %s362, 1
      %p366 = scmp.eq.s32.totalorder %s50, 1
      %p367 = scmp.ne.s32.totalorder %s362, %s364
      %p368 = scmp.eq.s32.totalorder %s50, 0
      %p369 = por %p367, %p368
      %p370 = scmp.ne.s32.totalorder %s362, %s364
      %p371 = scmp.eq.s32.totalorder %s55, 1
      %p372 = por %p370, %p371
      %p373 = scmp.ne.s32.totalorder %s364, %s365
      %p374 = scmp.eq.s32.totalorder %s55, 0
      %p375 = por %p373, %p374
      %p376 = scmp.ne.s32.totalorder %s364, %s365
      %p377 = scmp.eq.s32.totalorder %s56, 1
      %p378 = por %p376, %p377
      %p380 = scmp.ne.s32.totalorder %s365, %s379
      %p381 = scmp.eq.s32.totalorder %s56, 0
      %p382 = por %p380, %p381
      %s384 = sadd.s32 %s383, 1
      %p387 = scmp.eq.s32.totalorder %s50, 1
      %p388 = scmp.ne.s32.totalorder %s383, %s385
      %p389 = scmp.eq.s32.totalorder %s50, 0
      %p390 = por %p388, %p389
      %p391 = scmp.ne.s32.totalorder %s383, %s385
      %p392 = scmp.eq.s32.totalorder %s55, 1
      %p393 = por %p391, %p392
      %p394 = scmp.ne.s32.totalorder %s385, %s386
      %p395 = scmp.eq.s32.totalorder %s55, 0
      %p396 = por %p394, %p395
      %p397 = scmp.ne.s32.totalorder %s385, %s386
      %p398 = scmp.eq.s32.totalorder %s56, 1
      %p399 = por %p397, %p398
      %p401 = scmp.ne.s32.totalorder %s386, %s400
      %p402 = scmp.eq.s32.totalorder %s56, 0
      %p403 = por %p401, %p402
      %s405 = sadd.s32 %s404, 1
      %p408 = scmp.eq.s32.totalorder %s50, 1
      %p409 = scmp.ne.s32.totalorder %s404, %s406
      %p410 = scmp.eq.s32.totalorder %s50, 0
      %p411 = por %p409, %p410
      %p412 = scmp.ne.s32.totalorder %s404, %s406
      %p413 = scmp.eq.s32.totalorder %s55, 1
      %p414 = por %p412, %p413
      %p415 = scmp.ne.s32.totalorder %s406, %s407
      %p416 = scmp.eq.s32.totalorder %s55, 0
      %p417 = por %p415, %p416
      %p418 = scmp.ne.s32.totalorder %s406, %s407
      %p419 = scmp.eq.s32.totalorder %s56, 1
      %p420 = por %p418, %p419
      %p422 = scmp.ne.s32.totalorder %s407, %s421
      %p423 = scmp.eq.s32.totalorder %s56, 0
      %p424 = por %p422, %p423
      %s425 = ssub.s32 %s50, %s57
      %p426 = scmp.eq.s32.totalorder %s425, 0
      %s428 = sadd.s32 %s427, 1
      %s429 = scalar_select %p426, %s427, %s428
      %p432 = pneg %p426
      %p433 = scmp.eq.s32.totalorder %s50, 1
      %p434 = por %p432, %p433
      %p435 = scmp.ne.s32.totalorder %s427, %s430
      %p436 = scmp.eq.s32.totalorder %s50, 0
      %p437 = por %p435, %p436
      %p438 = scmp.ne.s32.totalorder %s427, %s430
      %p439 = scmp.eq.s32.totalorder %s55, 1
      %p440 = por %p438, %p439
      %p441 = scmp.ne.s32.totalorder %s430, %s431
      %p442 = scmp.eq.s32.totalorder %s55, 0
      %p443 = por %p441, %p442
      %p444 = scmp.ne.s32.totalorder %s430, %s431
      %p445 = scmp.eq.s32.totalorder %s56, 1
      %p446 = por %p444, %p445
      %p448 = scmp.ne.s32.totalorder %s431, %s447
      %p449 = scmp.eq.s32.totalorder %s56, 0
      %p450 = por %p448, %p449
      %s451 = ssub.s32 %s50, %s57
      %p452 = scmp.eq.s32.totalorder %s451, 0
      %s454 = sadd.s32 %s453, 1
      %s455 = scalar_select %p452, %s453, %s454
      %p458 = pneg %p452
      %p459 = scmp.eq.s32.totalorder %s50, 1
      %p460 = por %p458, %p459
      %p461 = scmp.ne.s32.totalorder %s453, %s456
      %p462 = scmp.eq.s32.totalorder %s50, 0
      %p463 = por %p461, %p462
      %p464 = scmp.ne.s32.totalorder %s453, %s456
      %p465 = scmp.eq.s32.totalorder %s55, 1
      %p466 = por %p464, %p465
      %p467 = scmp.ne.s32.totalorder %s456, %s457
      %p468 = scmp.eq.s32.totalorder %s55, 0
      %p469 = por %p467, %p468
      %p470 = scmp.ne.s32.totalorder %s456, %s457
      %p471 = scmp.eq.s32.totalorder %s56, 1
      %p472 = por %p470, %p471
      %p474 = scmp.ne.s32.totalorder %s457, %s473
      %p475 = scmp.eq.s32.totalorder %s56, 0
      %p476 = por %p474, %p475
      %s477 = ssub.s32 %s50, %s57
      %p478 = scmp.eq.s32.totalorder %s477, 0
      %s480 = sadd.s32 %s479, 1
      %s481 = scalar_select %p478, %s479, %s480
      %p484 = pneg %p478
      %p485 = scmp.eq.s32.totalorder %s50, 1
      %p486 = por %p484, %p485
      %p487 = scmp.ne.s32.totalorder %s479, %s482
      %p488 = scmp.eq.s32.totalorder %s50, 0
      %p489 = por %p487, %p488
      %p490 = scmp.ne.s32.totalorder %s479, %s482
      %p491 = scmp.eq.s32.totalorder %s55, 1
      %p492 = por %p490, %p491
      %p493 = scmp.ne.s32.totalorder %s482, %s483
      %p494 = scmp.eq.s32.totalorder %s55, 0
      %p495 = por %p493, %p494
      %p496 = scmp.ne.s32.totalorder %s482, %s483
      %p497 = scmp.eq.s32.totalorder %s56, 1
      %p498 = por %p496, %p497
      %p500 = scmp.ne.s32.totalorder %s483, %s499
      %p501 = scmp.eq.s32.totalorder %s56, 0
      %p502 = por %p500, %p501
      %s503 = ssub.s32 %s50, %s57
      %p504 = scmp.eq.s32.totalorder %s503, 0
      %s506 = sadd.s32 %s505, 1
      %s507 = scalar_select %p504, %s505, %s506
      %p510 = pneg %p504
      %p511 = scmp.eq.s32.totalorder %s50, 1
      %p512 = por %p510, %p511
      %p513 = scmp.ne.s32.totalorder %s505, %s508
      %p514 = scmp.eq.s32.totalorder %s50, 0
      %p515 = por %p513, %p514
      %p516 = scmp.ne.s32.totalorder %s505, %s508
      %p517 = scmp.eq.s32.totalorder %s55, 1
      %p518 = por %p516, %p517
      %p519 = scmp.ne.s32.totalorder %s508, %s509
      %p520 = scmp.eq.s32.totalorder %s55, 0
      %p521 = por %p519, %p520
      %p522 = scmp.ne.s32.totalorder %s508, %s509
      %p523 = scmp.eq.s32.totalorder %s56, 1
      %p524 = por %p522, %p523
      %p526 = scmp.ne.s32.totalorder %s509, %s525
      %p527 = scmp.eq.s32.totalorder %s56, 0
      %p528 = por %p526, %p527
      %s529 = ssub.s32 %s50, %s57
      %p530 = scmp.eq.s32.totalorder %s529, 0
      %s532 = sadd.s32 %s531, 1
      %s533 = scalar_select %p530, %s531, %s532
      %p536 = pneg %p530
      %p537 = scmp.eq.s32.totalorder %s50, 1
      %p538 = por %p536, %p537
      %p539 = scmp.ne.s32.totalorder %s531, %s534
      %p540 = scmp.eq.s32.totalorder %s50, 0
      %p541 = por %p539, %p540
      %p542 = scmp.ne.s32.totalorder %s531, %s534
      %p543 = scmp.eq.s32.totalorder %s55, 1
      %p544 = por %p542, %p543
      %p545 = scmp.ne.s32.totalorder %s534, %s535
      %p546 = scmp.eq.s32.totalorder %s55, 0
      %p547 = por %p545, %p546
      %p548 = scmp.ne.s32.totalorder %s534, %s535
      %p549 = scmp.eq.s32.totalorder %s56, 1
      %p550 = por %p548, %p549
      %p552 = scmp.ne.s32.totalorder %s535, %s551
      %p553 = scmp.eq.s32.totalorder %s56, 0
      %p554 = por %p552, %p553
      %s555 = ssub.s32 %s50, %s57
      %p556 = scmp.eq.s32.totalorder %s555, 0
      %s558 = sadd.s32 %s557, 1
      %s559 = scalar_select %p556, %s557, %s558
      %p562 = pneg %p556
      %p563 = scmp.eq.s32.totalorder %s50, 1
      %p564 = por %p562, %p563
      %p565 = scmp.ne.s32.totalorder %s557, %s560
      %p566 = scmp.eq.s32.totalorder %s50, 0
      %p567 = por %p565, %p566
      %p568 = scmp.ne.s32.totalorder %s557, %s560
      %p569 = scmp.eq.s32.totalorder %s55, 1
      %p570 = por %p568, %p569
      %p571 = scmp.ne.s32.totalorder %s560, %s561
      %p572 = scmp.eq.s32.totalorder %s55, 0
      %p573 = por %p571, %p572
      %p574 = scmp.ne.s32.totalorder %s560, %s561
      %p575 = scmp.eq.s32.totalorder %s56, 1
      %p576 = por %p574, %p575
      %p578 = scmp.ne.s32.totalorder %s561, %s577
      %p579 = scmp.eq.s32.totalorder %s56, 0
      %p580 = por %p578, %p579
      %p581 = scmp.le.s32.totalorder 1, %s50
      %p582 = scmp.lt.s32.totalorder %s50, 3
      %p583 = pnand %p581, %p582
      %p584 = pneg %p583
      // Predicated region
      $region9: #{seq2sql_forward.1} parent=5 // pred_check
        _
      $region10: #{seq2sql_forward.1} parent=5 // pred_check_branch
        %586 = sbr.rel (%p583) target = $region12
      $region11: #{seq2sql_forward.1} parent=5 // pred_region
        %s587 = ssub.s32 %s50, 1
        // Predicated region
        $region13: #{seq2sql_forward.1} parent=11 // pred_check
          %p588 = pneg %p123
        $region14: #{seq2sql_forward.1} parent=11 // pred_check_branch
          %590 = sbr.rel (%p588) target = $region16
        $region15: #{seq2sql_forward.1} parent=11 // pred_region
          _
        $region16: #{seq2sql_forward.1} parent=11 // pred_fallthru
          _
        // Predicated region
        $region17: #{seq2sql_forward.1} parent=11 // pred_check
          %p591 = pneg %p144
        $region18: #{seq2sql_forward.1} parent=11 // pred_check_branch
          %593 = sbr.rel (%p591) target = $region20
        $region19: #{seq2sql_forward.1} parent=11 // pred_region
          _
        $region20: #{seq2sql_forward.1} parent=11 // pred_fallthru
          _
        // Predicated region
        $region21: #{seq2sql_forward.1} parent=11 // pred_check
          %p594 = pneg %p165
        $region22: #{seq2sql_forward.1} parent=11 // pred_check_branch
          %596 = sbr.rel (%p594) target = $region24
        $region23: #{seq2sql_forward.1} parent=11 // pred_region
          _
        $region24: #{seq2sql_forward.1} parent=11 // pred_fallthru
          _
        // Predicated region
        $region25: #{seq2sql_forward.1} parent=11 // pred_check
          %p597 = pneg %p186
        $region26: #{seq2sql_forward.1} parent=11 // pred_check_branch
          %599 = sbr.rel (%p597) target = $region28
        $region27: #{seq2sql_forward.1} parent=11 // pred_region
          _
        $region28: #{seq2sql_forward.1} parent=11 // pred_fallthru
          _
        // Predicated region
        $region29: #{seq2sql_forward.1} parent=11 // pred_check
          %p600 = pneg %p207
        $region30: #{seq2sql_forward.1} parent=11 // pred_check_branch
          %602 = sbr.rel (%p600) target = $region32
        $region31: #{seq2sql_forward.1} parent=11 // pred_region
          _
        $region32: #{seq2sql_forward.1} parent=11 // pred_fallthru
          _
        // Predicated region
        $region33: #{seq2sql_forward.1} parent=11 // pred_check
          %p603 = pneg %p228
        $region34: #{seq2sql_forward.1} parent=11 // pred_check_branch
          %605 = sbr.rel (%p603) target = $region36
        $region35: #{seq2sql_forward.1} parent=11 // pred_region
          _
        $region36: #{seq2sql_forward.1} parent=11 // pred_fallthru
          _
        // Predicated region
        $region37: #{seq2sql_forward.1} parent=11 // pred_check
          %p606 = pneg %p249
        $region38: #{seq2sql_forward.1} parent=11 // pred_check_branch
          %608 = sbr.rel (%p606) target = $region40
        $region39: #{seq2sql_forward.1} parent=11 // pred_region
          _
        $region40: #{seq2sql_forward.1} parent=11 // pred_fallthru
          _
        // Predicated region
        $region41: #{seq2sql_forward.1} parent=11 // pred_check
          %p609 = pneg %p270
        $region42: #{seq2sql_forward.1} parent=11 // pred_check_branch
          %611 = sbr.rel (%p609) target = $region44
        $region43: #{seq2sql_forward.1} parent=11 // pred_region
          _
        $region44: #{seq2sql_forward.1} parent=11 // pred_fallthru
          _
        // Predicated region
        $region45: #{seq2sql_forward.1} parent=11 // pred_check
          %p612 = pneg %p291
        $region46: #{seq2sql_forward.1} parent=11 // pred_check_branch
          %614 = sbr.rel (%p612) target = $region48
        $region47: #{seq2sql_forward.1} parent=11 // pred_region
          _
        $region48: #{seq2sql_forward.1} parent=11 // pred_fallthru
          _
        // Predicated region
        $region49: #{seq2sql_forward.1} parent=11 // pred_check
          %p615 = pneg %p312
        $region50: #{seq2sql_forward.1} parent=11 // pred_check_branch
          %617 = sbr.rel (%p615) target = $region52
        $region51: #{seq2sql_forward.1} parent=11 // pred_region
          _
        $region52: #{seq2sql_forward.1} parent=11 // pred_fallthru
          _
        // Predicated region
        $region53: #{seq2sql_forward.1} parent=11 // pred_check
          %p618 = pneg %p333
        $region54: #{seq2sql_forward.1} parent=11 // pred_check_branch
          %620 = sbr.rel (%p618) target = $region56
        $region55: #{seq2sql_forward.1} parent=11 // pred_region
          _
        $region56: #{seq2sql_forward.1} parent=11 // pred_fallthru
          _
        // Predicated region
        $region57: #{seq2sql_forward.1} parent=11 // pred_check
          %p621 = pneg %p354
        $region58: #{seq2sql_forward.1} parent=11 // pred_check_branch
          %623 = sbr.rel (%p621) target = $region60
        $region59: #{seq2sql_forward.1} parent=11 // pred_region
          _
        $region60: #{seq2sql_forward.1} parent=11 // pred_fallthru
          _
        // Predicated region
        $region61: #{seq2sql_forward.1} parent=11 // pred_check
          %p624 = pneg %p375
        $region62: #{seq2sql_forward.1} parent=11 // pred_check_branch
          %626 = sbr.rel (%p624) target = $region64
        $region63: #{seq2sql_forward.1} parent=11 // pred_region
          _
        $region64: #{seq2sql_forward.1} parent=11 // pred_fallthru
          _
        // Predicated region
        $region65: #{seq2sql_forward.1} parent=11 // pred_check
          %p627 = pneg %p396
        $region66: #{seq2sql_forward.1} parent=11 // pred_check_branch
          %629 = sbr.rel (%p627) target = $region68
        $region67: #{seq2sql_forward.1} parent=11 // pred_region
          _
        $region68: #{seq2sql_forward.1} parent=11 // pred_fallthru
          _
        // Predicated region
        $region69: #{seq2sql_forward.1} parent=11 // pred_check
          %p630 = pneg %p417
        $region70: #{seq2sql_forward.1} parent=11 // pred_check_branch
          %632 = sbr.rel (%p630) target = $region72
        $region71: #{seq2sql_forward.1} parent=11 // pred_region
          _
        $region72: #{seq2sql_forward.1} parent=11 // pred_fallthru
          _
      $region12: #{seq2sql_forward.1} parent=5 // pred_fallthru
        _
      %p633 = scmp.lt.s32.totalorder %s50, 2
      // Predicated region
      $region73: #{seq2sql_forward.1} parent=5 // pred_check
        %p634 = pneg %p633
      $region74: #{seq2sql_forward.1} parent=5 // pred_check_branch
        %636 = sbr.rel (%p634) target = $region76
      $region75: #{seq2sql_forward.1} parent=5 // pred_region
        // Predicated region
        $region77: #{seq2sql_forward.1} parent=75 // pred_check
          %p637 = pneg %p70
        $region78: #{seq2sql_forward.1} parent=75 // pred_check_branch
          %639 = sbr.rel (%p637) target = $region80
        $region79: #{seq2sql_forward.1} parent=75 // pred_region
          %p640 = scmp.lt.s32.totalorder %s50, 1
          %s641 = scalar_select %p640, %s50, 1
          %s642 = smul.addr %s641, 8
          %s643 = scalar_lea.vmem %s2, %s642
        $region80: #{seq2sql_forward.1} parent=75 // pred_fallthru
          _
        // Predicated region
        $region81: #{seq2sql_forward.1} parent=75 // pred_check
          %p644 = pneg %p96
        $region82: #{seq2sql_forward.1} parent=75 // pred_check_branch
          %646 = sbr.rel (%p644) target = $region84
        $region83: #{seq2sql_forward.1} parent=75 // pred_region
          %p647 = scmp.lt.s32.totalorder %s50, 1
          %s648 = scalar_select %p647, %s50, 1
          %s649 = smul.addr %s648, 8
          %s650 = scalar_lea.vmem %s3, %s649
        $region84: #{seq2sql_forward.1} parent=75 // pred_fallthru
          _
      $region76: #{seq2sql_forward.1} parent=5 // pred_fallthru
        _
      %p651 = scmp.le.s32.totalorder 1, %s50
      %p652 = scmp.lt.s32.totalorder %s50, 3
      %p653 = pnand %p651, %p652
      %p654 = pneg %p653
      // Predicated region
      $region85: #{seq2sql_forward.1} parent=5 // pred_check
        _
      $region86: #{seq2sql_forward.1} parent=5 // pred_check_branch
        %656 = sbr.rel (%p653) target = $region88
      $region87: #{seq2sql_forward.1} parent=5 // pred_region
        %s657 = ssub.s32 %s50, 1
        %p658 = scmp.lt.s32.totalorder %s55, 1
        %s659 = scalar_select %p658, %s55, 1
        %s660 = smul.addr %s659, 8
        %s661 = scalar_lea.vmem %s2, %s660
        %p662 = pneg %p76
        %p663 = pneg %p73
        %p664 = scmp.lt.s32.totalorder %s55, 1
        %s665 = scalar_select %p664, %s55, 1
        %s666 = smul.addr %s665, 8
        %s667 = scalar_lea.vmem %s3, %s666
        %p668 = pneg %p102
        %p669 = pneg %p99
        %p670 = pneg %p123
        %p671 = pneg %p120
        %p672 = pneg %p144
        %p673 = pneg %p141
        %p674 = pneg %p165
        %p675 = pneg %p162
        %p676 = pneg %p186
        %p677 = pneg %p183
        %p678 = pneg %p207
        %p679 = pneg %p204
        %p680 = pneg %p228
        %p681 = pneg %p225
        %p682 = pneg %p249
        %p683 = pneg %p246
        %p684 = pneg %p270
        %p685 = pneg %p267
        %p686 = pneg %p291
        %p687 = pneg %p288
        %p688 = pneg %p312
        %p689 = pneg %p309
        %p690 = pneg %p333
        %p691 = pneg %p330
        %p692 = pneg %p354
        %p693 = pneg %p351
        %p694 = pneg %p375
        %p695 = pneg %p372
        %p696 = pneg %p396
        %p697 = pneg %p393
        %p698 = pneg %p417
        %p699 = pneg %p414
        %p700 = pneg %p443
        %p701 = pneg %p440
        %p702 = scmp.lt.s32.totalorder %s55, 1
        %s703 = scalar_select %p702, %s55, 1
        %s704 = smul.addr %s703, 8
        %s705 = scalar_lea.vmem %s19, %s704
        %p706 = pneg %p469
        %p707 = pneg %p466
        %s708 = sand.u32 %s456, 1
        %s709 = scalar_lea.sflag [#allocation6], %s708
        %s710 = sand.u32 %s456, 1
        %s711 = scalar_lea.vmem [#allocation5], %s710
        %p712 = pneg %p495
        %p713 = pneg %p492
        %s714 = sand.u32 %s55, 1
        %s715 = scalar_lea.sflag [#allocation8], %s714
        %s716 = sand.u32 %s482, 1
        %s717 = scalar_lea.vmem [#allocation7], %s716
        %p718 = pneg %p521
        %p719 = pneg %p518
        %p720 = scmp.lt.s32.totalorder %s55, 1
        %s721 = scalar_select %p720, %s55, 1
        %s722 = smul.addr %s721, 8
        %s723 = scalar_lea.vmem %s22, %s722
        %p724 = pneg %p547
        %p725 = pneg %p544
        %s726 = sand.u32 %s55, 1
        %s727 = scalar_lea.sflag [#allocation8], %s726
        %s728 = sand.u32 %s534, 1
        %s729 = smul.addr %s728, 4
        %s730 = scalar_lea.vmem [#allocation9], %s729
        %p731 = pneg %p573
        %p732 = pneg %p570
        %p733 = scmp.lt.s32.totalorder %s55, 1
        %s734 = scalar_select %p733, %s55, 1
        %s735 = smul.addr %s734, 4
        %s736 = smul.addr %s735, 8
        %s737 = scalar_lea.vmem %s24, %s736
        %p738 = scmp.lt.s32.totalorder %s55, 1
        %s739 = scalar_select %p738, %s55, 1
        %s740 = smul.addr %s739, 8
        %s741 = scalar_lea.vmem %s2, %s740
        %p742 = scmp.lt.s32.totalorder %s55, 1
        %s743 = scalar_select %p742, %s55, 1
        %s744 = smul.addr %s743, 8
        %s745 = scalar_lea.vmem %s3, %s744
        %p746 = scmp.lt.s32.totalorder %s55, 1
        %s747 = scalar_select %p746, %s55, 1
        %s748 = smul.addr %s747, 8
        %s749 = scalar_lea.vmem %s19, %s748
        %p750 = scmp.lt.s32.totalorder %s55, 1
        %s751 = scalar_select %p750, %s55, 1
        %s752 = smul.addr %s751, 8
        %s753 = scalar_lea.vmem %s22, %s752
        %p754 = scmp.lt.s32.totalorder %s55, 1
        %s755 = scalar_select %p754, %s55, 1
        %s756 = smul.addr %s755, 4
        %s757 = smul.addr %s756, 8
        %s758 = scalar_lea.vmem %s24, %s757
        %s760 = sld [smem:[#allocation3 + %s55]]
        %s761 = sld [smem:[#allocation4 + %s55]]
        %v762 = vld [vmem:[%s741] sm:$0xff]
        %v763 = vld [vmem:[%s4] sm:$0xff]
        %v764 = vld [vmem:[%s4 + $0x8] sm:$0xff]
        %v765 = vld [vmem:[%s4 + $0x10] sm:$0xff]
        %v766 = vld [vmem:[%s4 + $0x18] sm:$0xff]
        %v767 = vld [vmem:[%s4 + $0x20] sm:$0xff]
        %v768 = vld [vmem:[%s4 + $0x28] sm:$0xff]
        %v769 = vld [vmem:[%s4 + $0x30] sm:$0xff]
        %v770 = vld [vmem:[%s4 + $0x38] sm:$0xff]
        %v771 = vld [vmem:[%s4 + $0x40] sm:$0xff]
        %v772 = vld [vmem:[%s4 + $0x48] sm:$0xff]
        %v773 = vld [vmem:[%s4 + $0x50] sm:$0xff]
        %v774 = vld [vmem:[%s4 + $0x58] sm:$0xff]
        %v775 = vld [vmem:[%s4 + $0x60] sm:$0xff]
        %v776 = vld [vmem:[%s4 + $0x68] sm:$0xff]
        %v777 = vld [vmem:[%s4 + $0x70] sm:$0xff]
        %v778 = vld [vmem:[%s4 + $0x78] sm:$0xff]
        %v779 = vld [vmem:[%s4 + $0x80] sm:$0xff]
        %v780 = vld [vmem:[%s4 + $0x88] sm:$0xff]
        %v781 = vld [vmem:[%s4 + $0x90] sm:$0xff]
        %v782 = vld [vmem:[%s4 + $0x98] sm:$0xff]
        %v783 = vld [vmem:[%s4 + $0xa0] sm:$0xff]
        %v784 = vld [vmem:[%s4 + $0xa8] sm:$0xff]
        %v785 = vld [vmem:[%s4 + $0xb0] sm:$0xff]
        %v786 = vld [vmem:[%s4 + $0xb8] sm:$0xff]
        %v787 = vld [vmem:[%s4 + $0xc0] sm:$0xff]
        %v788 = vld [vmem:[%s4 + $0xc8] sm:$0xff]
        %v789 = vld [vmem:[%s4 + $0xd0] sm:$0xff]
        %v790 = vld [vmem:[%s4 + $0xd8] sm:$0xff]
        %v791 = vld [vmem:[%s4 + $0xe0] sm:$0xff]
        %v792 = vld [vmem:[%s4 + $0xe8] sm:$0xff]
        %v793 = vld [vmem:[%s4 + $0xf0] sm:$0xff]
        %v794 = vld [vmem:[%s4 + $0xf8] sm:$0xff]
        %v795 = vld [vmem:[%s4 + $0x100] sm:$0xff]
        %v796 = vld [vmem:[%s4 + $0x108] sm:$0xff]
        %v797 = vld [vmem:[%s4 + $0x110] sm:$0xff]
        %v798 = vld [vmem:[%s4 + $0x118] sm:$0xff]
        %v799 = vld [vmem:[%s4 + $0x120] sm:$0xff]
        %v800 = vld [vmem:[%s4 + $0x128] sm:$0xff]
        %v801 = vld [vmem:[%s4 + $0x130] sm:$0xff]
        %v802 = vld [vmem:[%s4 + $0x138] sm:$0xff]
        %v803 = vld [vmem:[%s4 + $0x140] sm:$0xff]
        %v804 = vld [vmem:[%s4 + $0x148] sm:$0xff]
        %v805 = vld [vmem:[%s4 + $0x150] sm:$0xff]
        %v806 = vld [vmem:[%s4 + $0x158] sm:$0xff]
        %v807 = vld [vmem:[%s4 + $0x160] sm:$0xff]
        %v808 = vld [vmem:[%s4 + $0x168] sm:$0xff]
        %v809 = vld [vmem:[%s4 + $0x170] sm:$0xff]
        %v810 = vld [vmem:[%s4 + $0x178] sm:$0xff]
        %v811 = vpack.c.bf16 %v762, %v762
        %v812 = vpack.c.bf16 %v766, %v763
        %v813 = vpack.c.bf16 %v767, %v764
        %v814 = vpack.c.bf16 %v768, %v765
        %v815 = vpack.c.bf16 %v772, %v769
        %v816 = vpack.c.bf16 %v773, %v770
        %v817 = vpack.c.bf16 %v774, %v771
        %v818 = vpack.c.bf16 %v778, %v775
        %v819 = vpack.c.bf16 %v779, %v776
        %v820 = vpack.c.bf16 %v780, %v777
        %v821 = vpack.c.bf16 %v784, %v781
        %v822 = vpack.c.bf16 %v785, %v782
        %v823 = vpack.c.bf16 %v786, %v783
        %v824 = vpack.c.bf16 %v790, %v787
        %v825 = vpack.c.bf16 %v791, %v788
        %v826 = vpack.c.bf16 %v792, %v789
        %v827 = vpack.c.bf16 %v796, %v793
        %v828 = vpack.c.bf16 %v797, %v794
        %v829 = vpack.c.bf16 %v798, %v795
        %v830 = vpack.c.bf16 %v802, %v799
        %v831 = vpack.c.bf16 %v803, %v800
        %v832 = vpack.c.bf16 %v804, %v801
        %v833 = vpack.c.bf16 %v808, %v805
        %v834 = vpack.c.bf16 %v809, %v806
        %v835 = vpack.c.bf16 %v810, %v807
        %v836 = vld [vmem:[%s5] sm:$0x7]
        %v838 = vperm.slane %v836, 0
        %v839 = vperm.slane %v836, 1
        %v840 = vperm.slane %v836, 2
        %844 = vmatpush.bf16.msra.mxu0 %v833
        %845 = vmatpush.bf16.msra.mxu0 %v830
        %846 = vmatpush.bf16.msra.mxu0 %v827
        %847 = vmatpush.bf16.msra.mxu0 %v824
        %848 = vmatpush.bf16.msra.mxu0 %v821
        %849 = vmatpush.bf16.msra.mxu0 %v818
        %850 = vmatpush.bf16.msra.mxu0 %v815
        %851 = vmatpush.bf16.msra.mxu0 %v812
        %852 = vmatmul.bf16.gmra.mxu0 %v811
        %v853 = vpop.f32.mrf.mxu0
        %v854 = vadd.f32 %v838, %v853
        %v855 = vpop.f32.mrf.mxu0
        %856 = vdwg.mxu0
        %857 = vmatpush.bf16.msra.mxu0 %v834
        %858 = vmatpush.bf16.msra.mxu0 %v831
        %859 = vmatpush.bf16.msra.mxu0 %v828
        %860 = vmatpush.bf16.msra.mxu0 %v825
        %861 = vmatpush.bf16.msra.mxu0 %v822
        %862 = vmatpush.bf16.msra.mxu0 %v819
        %863 = vmatpush.bf16.msra.mxu0 %v816
        %864 = vmatpush.bf16.msra.mxu0 %v813
        %865 = vmatmul.bf16.gmra.mxu0 %v811
        %v866 = vpop.f32.mrf.mxu0
        %v867 = vadd.f32 %v839, %v866
        %v868 = vpop.f32.mrf.mxu0
        %869 = vdwg.mxu0
        %870 = vmatpush.bf16.msra.mxu0 %v835
        %871 = vmatpush.bf16.msra.mxu0 %v832
        %872 = vmatpush.bf16.msra.mxu0 %v829
        %873 = vmatpush.bf16.msra.mxu0 %v826
        %874 = vmatpush.bf16.msra.mxu0 %v823
        %875 = vmatpush.bf16.msra.mxu0 %v820
        %876 = vmatpush.bf16.msra.mxu0 %v817
        %877 = vmatpush.bf16.msra.mxu0 %v814
        %878 = vmatmul.bf16.gmra.mxu0 %v811
        %v879 = vpop.f32.mrf.mxu0
        %v880 = vadd.f32 %v840, %v879
        %v881 = vpop.f32.mrf.mxu0
        %882 = vdwg.mxu0
        %v883 = vtanh.pop %v854
        %v884 = vtanh.pop %v867
        %v885 = vtanh.pop %v880
        %v886 = vld [vmem:[%s745] sm:$0x1f]
        %v887 = vld [vmem:[%s6] sm:$0xff]
        %v888 = vld [vmem:[%s6 + $0x8] sm:$0xff]
        %v889 = vld [vmem:[%s6 + $0x10] sm:$0xff]
        %v890 = vld [vmem:[%s6 + $0x18] sm:$0xff]
        %v891 = vld [vmem:[%s6 + $0x20] sm:$0xff]
        %v892 = vld [vmem:[%s6 + $0x28] sm:$0xff]
        %v893 = vld [vmem:[%s6 + $0x30] sm:$0xff]
        %v894 = vld [vmem:[%s6 + $0x38] sm:$0xff]
        %v895 = vld [vmem:[%s6 + $0x40] sm:$0xff]
        %v896 = vld [vmem:[%s6 + $0x48] sm:$0xff]
        %v897 = vld [vmem:[%s6 + $0x50] sm:$0xff]
        %v898 = vld [vmem:[%s6 + $0x58] sm:$0xff]
        %v899 = vld [vmem:[%s6 + $0x60] sm:$0xff]
        %v900 = vld [vmem:[%s6 + $0x68] sm:$0xff]
        %v901 = vld [vmem:[%s6 + $0x70] sm:$0xff]
        %v902 = vld [vmem:[%s6 + $0x78] sm:$0xff]
        %v903 = vpack.c.bf16 %v886, %v886
        %v904 = vpack.c.bf16 %v888, %v887
        %v905 = vpack.c.bf16 %v890, %v889
        %v906 = vpack.c.bf16 %v892, %v891
        %v907 = vpack.c.bf16 %v894, %v893
        %v908 = vpack.c.bf16 %v896, %v895
        %v909 = vpack.c.bf16 %v898, %v897
        %v910 = vpack.c.bf16 %v900, %v899
        %v911 = vpack.c.bf16 %v902, %v901
        %v912 = vld [vmem:[%s7] sm:$0x1]
        %v914 = vperm.slane %v912, 0
        %916 = vmatpush.bf16.msra.mxu0 %v911
        %917 = vmatpush.bf16.msra.mxu0 %v910
        %918 = vmatpush.bf16.msra.mxu0 %v909
        %919 = vmatpush.bf16.msra.mxu0 %v908
        %920 = vmatpush.bf16.msra.mxu0 %v907
        %921 = vmatpush.bf16.msra.mxu0 %v906
        %922 = vmatpush.bf16.msra.mxu0 %v905
        %923 = vmatpush.bf16.msra.mxu0 %v904
        %924 = vmatmul.bf16.gmra.mxu0 %v903
        %v925 = vpop.f32.mrf.mxu0
        %v926 = vadd.f32 %v914, %v925
        %v927 = vpop.f32.mrf.mxu0
        %928 = vdwg.mxu0
        %v929 = vtanh.pop %v926
        %v930 = vlaneseq
        %v931 = vand.u32 %v930, 127
        %v932 = vstv %s760
        %vm933 = vcmp.lt.s32.totalorder %v931, %v932
        %v934 = vlaneseq
        %v935 = vshrl.u32 %v934, 7
        %v936 = vstv %s761
        %vm937 = vcmp.lt.s32.totalorder %v935, %v936
        %v938 = vld [vmem:[%s8] sm:$0xff]
        %v939 = vld [vmem:[%s8 + $0x8] sm:$0xff]
        %v940 = vld [vmem:[%s8 + $0x10] sm:$0xff]
        %v941 = vld [vmem:[%s8 + $0x18] sm:$0xff]
        %v942 = vld [vmem:[%s8 + $0x20] sm:$0xff]
        %v943 = vld [vmem:[%s8 + $0x28] sm:$0xff]
        %v944 = vld [vmem:[%s8 + $0x30] sm:$0xff]
        %v945 = vld [vmem:[%s8 + $0x38] sm:$0xff]
        %v946 = vld [vmem:[%s8 + $0x40] sm:$0xff]
        %v947 = vld [vmem:[%s8 + $0x48] sm:$0xff]
        %v948 = vld [vmem:[%s8 + $0x50] sm:$0xff]
        %v949 = vld [vmem:[%s8 + $0x58] sm:$0xff]
        %v950 = vld [vmem:[%s8 + $0x60] sm:$0xff]
        %v951 = vld [vmem:[%s8 + $0x68] sm:$0xff]
        %v952 = vld [vmem:[%s8 + $0x70] sm:$0xff]
        %v953 = vld [vmem:[%s8 + $0x78] sm:$0xff]
        %v954 = vld [vmem:[%s8 + $0x80] sm:$0xff]
        %v955 = vld [vmem:[%s8 + $0x88] sm:$0xff]
        %v956 = vld [vmem:[%s8 + $0x90] sm:$0xff]
        %v957 = vld [vmem:[%s8 + $0x98] sm:$0xff]
        %v958 = vld [vmem:[%s8 + $0xa0] sm:$0xff]
        %v959 = vld [vmem:[%s8 + $0xa8] sm:$0xff]
        %v960 = vld [vmem:[%s8 + $0xb0] sm:$0xff]
        %v961 = vld [vmem:[%s8 + $0xb8] sm:$0xff]
        %v962 = vld [vmem:[%s8 + $0xc0] sm:$0xff]
        %v963 = vld [vmem:[%s8 + $0xc8] sm:$0xff]
        %v964 = vld [vmem:[%s8 + $0xd0] sm:$0xff]
        %v965 = vld [vmem:[%s8 + $0xd8] sm:$0xff]
        %v966 = vld [vmem:[%s8 + $0xe0] sm:$0xff]
        %v967 = vld [vmem:[%s8 + $0xe8] sm:$0xff]
        %v968 = vld [vmem:[%s8 + $0xf0] sm:$0xff]
        %v969 = vld [vmem:[%s8 + $0xf8] sm:$0xff]
        %v970 = vld [vmem:[%s8 + $0x100] sm:$0xff]
        %v971 = vld [vmem:[%s8 + $0x108] sm:$0xff]
        %v972 = vld [vmem:[%s8 + $0x110] sm:$0xff]
        %v973 = vld [vmem:[%s8 + $0x118] sm:$0xff]
        %v974 = vld [vmem:[%s8 + $0x120] sm:$0xff]
        %v975 = vld [vmem:[%s8 + $0x128] sm:$0xff]
        %v976 = vld [vmem:[%s8 + $0x130] sm:$0xff]
        %v977 = vld [vmem:[%s8 + $0x138] sm:$0xff]
        %v978 = vld [vmem:[%s8 + $0x140] sm:$0xff]
        %v979 = vld [vmem:[%s8 + $0x148] sm:$0xff]
        %v980 = vld [vmem:[%s8 + $0x150] sm:$0xff]
        %v981 = vld [vmem:[%s8 + $0x158] sm:$0xff]
        %v982 = vld [vmem:[%s8 + $0x160] sm:$0xff]
        %v983 = vld [vmem:[%s8 + $0x168] sm:$0xff]
        %v984 = vld [vmem:[%s8 + $0x170] sm:$0xff]
        %v985 = vld [vmem:[%s8 + $0x178] sm:$0xff]
        %v986 = vpack.c.bf16 %v883, %v883
        %v987 = vpack.c.bf16 %v941, %v938
        %v988 = vpack.c.bf16 %v942, %v939
        %v989 = vpack.c.bf16 %v943, %v940
        %v990 = vpack.c.bf16 %v947, %v944
        %v991 = vpack.c.bf16 %v948, %v945
        %v992 = vpack.c.bf16 %v949, %v946
        %v993 = vpack.c.bf16 %v953, %v950
        %v994 = vpack.c.bf16 %v954, %v951
        %v995 = vpack.c.bf16 %v955, %v952
        %v996 = vpack.c.bf16 %v959, %v956
        %v997 = vpack.c.bf16 %v960, %v957
        %v998 = vpack.c.bf16 %v961, %v958
        %v999 = vpack.c.bf16 %v965, %v962
        %v1000 = vpack.c.bf16 %v966, %v963
        %v1001 = vpack.c.bf16 %v967, %v964
        %v1002 = vpack.c.bf16 %v971, %v968
        %v1003 = vpack.c.bf16 %v972, %v969
        %v1004 = vpack.c.bf16 %v973, %v970
        %v1005 = vpack.c.bf16 %v977, %v974
        %v1006 = vpack.c.bf16 %v978, %v975
        %v1007 = vpack.c.bf16 %v979, %v976
        %v1008 = vpack.c.bf16 %v983, %v980
        %v1009 = vpack.c.bf16 %v984, %v981
        %v1010 = vpack.c.bf16 %v985, %v982
        %1011 = vmatpush.bf16.msra.mxu0 %v1008
        %1012 = vmatpush.bf16.msra.mxu0 %v1005
        %1013 = vmatpush.bf16.msra.mxu0 %v1002
        %1014 = vmatpush.bf16.msra.mxu0 %v999
        %1015 = vmatpush.bf16.msra.mxu0 %v996
        %1016 = vmatpush.bf16.msra.mxu0 %v993
        %1017 = vmatpush.bf16.msra.mxu0 %v990
        %1018 = vmatpush.bf16.msra.mxu0 %v987
        %1019 = vmatmul.bf16.gmra.mxu0 %v986
        %v1020 = vpop.f32.mrf.mxu0
        %v1021 = vadd.f32 0.0, %v1020
        %v1022 = vpop.f32.mrf.mxu0
        %1023 = vdwg.mxu0
        %1024 = vmatpush.bf16.msra.mxu0 %v1009
        %1025 = vmatpush.bf16.msra.mxu0 %v1006
        %1026 = vmatpush.bf16.msra.mxu0 %v1003
        %1027 = vmatpush.bf16.msra.mxu0 %v1000
        %1028 = vmatpush.bf16.msra.mxu0 %v997
        %1029 = vmatpush.bf16.msra.mxu0 %v994
        %1030 = vmatpush.bf16.msra.mxu0 %v991
        %1031 = vmatpush.bf16.msra.mxu0 %v988
        %1032 = vmatmul.bf16.gmra.mxu0 %v986
        %v1033 = vpop.f32.mrf.mxu0
        %v1034 = vadd.f32 0.0, %v1033
        %v1035 = vpop.f32.mrf.mxu0
        %1036 = vdwg.mxu0
        %1037 = vmatpush.bf16.msra.mxu0 %v1010
        %1038 = vmatpush.bf16.msra.mxu0 %v1007
        %1039 = vmatpush.bf16.msra.mxu0 %v1004
        %1040 = vmatpush.bf16.msra.mxu0 %v1001
        %1041 = vmatpush.bf16.msra.mxu0 %v998
        %1042 = vmatpush.bf16.msra.mxu0 %v995
        %1043 = vmatpush.bf16.msra.mxu0 %v992
        %1044 = vmatpush.bf16.msra.mxu0 %v989
        %1045 = vmatmul.bf16.gmra.mxu0 %v986
        %v1046 = vpop.f32.mrf.mxu0
        %v1047 = vadd.f32 0.0, %v1046
        %v1048 = vpop.f32.mrf.mxu0
        %1049 = vdwg.mxu0
        %v1050 = vld [vmem:[%s9] sm:$0xff]
        %v1051 = vld [vmem:[%s9 + $0x8] sm:$0xff]
        %v1052 = vld [vmem:[%s9 + $0x10] sm:$0xff]
        %v1053 = vld [vmem:[%s9 + $0x18] sm:$0xff]
        %v1054 = vld [vmem:[%s9 + $0x20] sm:$0xff]
        %v1055 = vld [vmem:[%s9 + $0x28] sm:$0xff]
        %v1056 = vld [vmem:[%s9 + $0x30] sm:$0xff]
        %v1057 = vld [vmem:[%s9 + $0x38] sm:$0xff]
        %v1058 = vld [vmem:[%s9 + $0x40] sm:$0xff]
        %v1059 = vld [vmem:[%s9 + $0x48] sm:$0xff]
        %v1060 = vld [vmem:[%s9 + $0x50] sm:$0xff]
        %v1061 = vld [vmem:[%s9 + $0x58] sm:$0xff]
        %v1062 = vld [vmem:[%s9 + $0x60] sm:$0xff]
        %v1063 = vld [vmem:[%s9 + $0x68] sm:$0xff]
        %v1064 = vld [vmem:[%s9 + $0x70] sm:$0xff]
        %v1065 = vld [vmem:[%s9 + $0x78] sm:$0xff]
        %v1066 = vld [vmem:[%s9 + $0x80] sm:$0xff]
        %v1067 = vld [vmem:[%s9 + $0x88] sm:$0xff]
        %v1068 = vld [vmem:[%s9 + $0x90] sm:$0xff]
        %v1069 = vld [vmem:[%s9 + $0x98] sm:$0xff]
        %v1070 = vld [vmem:[%s9 + $0xa0] sm:$0xff]
        %v1071 = vld [vmem:[%s9 + $0xa8] sm:$0xff]
        %v1072 = vld [vmem:[%s9 + $0xb0] sm:$0xff]
        %v1073 = vld [vmem:[%s9 + $0xb8] sm:$0xff]
        %v1074 = vld [vmem:[%s9 + $0xc0] sm:$0xff]
        %v1075 = vld [vmem:[%s9 + $0xc8] sm:$0xff]
        %v1076 = vld [vmem:[%s9 + $0xd0] sm:$0xff]
        %v1077 = vld [vmem:[%s9 + $0xd8] sm:$0xff]
        %v1078 = vld [vmem:[%s9 + $0xe0] sm:$0xff]
        %v1079 = vld [vmem:[%s9 + $0xe8] sm:$0xff]
        %v1080 = vld [vmem:[%s9 + $0xf0] sm:$0xff]
        %v1081 = vld [vmem:[%s9 + $0xf8] sm:$0xff]
        %v1082 = vpack.c.bf16 %v884, %v884
        %v1083 = vpack.c.bf16 %v1052, %v1050
        %v1084 = vpack.c.bf16 %v1053, %v1051
        %v1085 = vpack.c.bf16 %v1056, %v1054
        %v1086 = vpack.c.bf16 %v1057, %v1055
        %v1087 = vpack.c.bf16 %v1060, %v1058
        %v1088 = vpack.c.bf16 %v1061, %v1059
        %v1089 = vpack.c.bf16 %v1064, %v1062
        %v1090 = vpack.c.bf16 %v1065, %v1063
        %v1091 = vpack.c.bf16 %v1068, %v1066
        %v1092 = vpack.c.bf16 %v1069, %v1067
        %v1093 = vpack.c.bf16 %v1072, %v1070
        %v1094 = vpack.c.bf16 %v1073, %v1071
        %v1095 = vpack.c.bf16 %v1076, %v1074
        %v1096 = vpack.c.bf16 %v1077, %v1075
        %v1097 = vpack.c.bf16 %v1080, %v1078
        %v1098 = vpack.c.bf16 %v1081, %v1079
        %1099 = vmatpush.bf16.msra.mxu0 %v1097
        %1100 = vmatpush.bf16.msra.mxu0 %v1095
        %1101 = vmatpush.bf16.msra.mxu0 %v1093
        %1102 = vmatpush.bf16.msra.mxu0 %v1091
        %1103 = vmatpush.bf16.msra.mxu0 %v1089
        %1104 = vmatpush.bf16.msra.mxu0 %v1087
        %1105 = vmatpush.bf16.msra.mxu0 %v1085
        %1106 = vmatpush.bf16.msra.mxu0 %v1083
        %1107 = vmatmul.bf16.gmra.mxu0 %v1082
        %v1108 = vpop.f32.mrf.mxu0
        %v1109 = vadd.f32 0.0, %v1108
        %v1110 = vpop.f32.mrf.mxu0
        %1111 = vdwg.mxu0
        %1112 = vmatpush.bf16.msra.mxu0 %v1098
        %1113 = vmatpush.bf16.msra.mxu0 %v1096
        %1114 = vmatpush.bf16.msra.mxu0 %v1094
        %1115 = vmatpush.bf16.msra.mxu0 %v1092
        %1116 = vmatpush.bf16.msra.mxu0 %v1090
        %1117 = vmatpush.bf16.msra.mxu0 %v1088
        %1118 = vmatpush.bf16.msra.mxu0 %v1086
        %1119 = vmatpush.bf16.msra.mxu0 %v1084
        %1120 = vmatmul.bf16.gmra.mxu0 %v1082
        %v1121 = vpop.f32.mrf.mxu0
        %v1122 = vadd.f32 0.0, %v1121
        %v1123 = vpop.f32.mrf.mxu0
        %1124 = vdwg.mxu0
        %v1125 = vld [vmem:[%s10] sm:$0xff]
        %v1126 = vld [vmem:[%s10 + $0x8] sm:$0xff]
        %v1127 = vld [vmem:[%s10 + $0x10] sm:$0xff]
        %v1128 = vld [vmem:[%s10 + $0x18] sm:$0xff]
        %v1129 = vld [vmem:[%s10 + $0x20] sm:$0xff]
        %v1130 = vld [vmem:[%s10 + $0x28] sm:$0xff]
        %v1131 = vld [vmem:[%s10 + $0x30] sm:$0xff]
        %v1132 = vld [vmem:[%s10 + $0x38] sm:$0xff]
        %v1133 = vld [vmem:[%s10 + $0x40] sm:$0xff]
        %v1134 = vld [vmem:[%s10 + $0x48] sm:$0xff]
        %v1135 = vld [vmem:[%s10 + $0x50] sm:$0xff]
        %v1136 = vld [vmem:[%s10 + $0x58] sm:$0xff]
        %v1137 = vld [vmem:[%s10 + $0x60] sm:$0xff]
        %v1138 = vld [vmem:[%s10 + $0x68] sm:$0xff]
        %v1139 = vld [vmem:[%s10 + $0x70] sm:$0xff]
        %v1140 = vld [vmem:[%s10 + $0x78] sm:$0xff]
        %v1141 = vld [vmem:[%s10 + $0x80] sm:$0xff]
        %v1142 = vld [vmem:[%s10 + $0x88] sm:$0xff]
        %v1143 = vld [vmem:[%s10 + $0x90] sm:$0xff]
        %v1144 = vld [vmem:[%s10 + $0x98] sm:$0xff]
        %v1145 = vld [vmem:[%s10 + $0xa0] sm:$0xff]
        %v1146 = vld [vmem:[%s10 + $0xa8] sm:$0xff]
        %v1147 = vld [vmem:[%s10 + $0xb0] sm:$0xff]
        %v1148 = vld [vmem:[%s10 + $0xb8] sm:$0xff]
        %v1149 = vld [vmem:[%s10 + $0xc0] sm:$0xff]
        %v1150 = vld [vmem:[%s10 + $0xc8] sm:$0xff]
        %v1151 = vld [vmem:[%s10 + $0xd0] sm:$0xff]
        %v1152 = vld [vmem:[%s10 + $0xd8] sm:$0xff]
        %v1153 = vld [vmem:[%s10 + $0xe0] sm:$0xff]
        %v1154 = vld [vmem:[%s10 + $0xe8] sm:$0xff]
        %v1155 = vld [vmem:[%s10 + $0xf0] sm:$0xff]
        %v1156 = vld [vmem:[%s10 + $0xf8] sm:$0xff]
        %v1157 = vpack.c.bf16 %v885, %v885
        %v1158 = vpack.c.bf16 %v1127, %v1125
        %v1159 = vpack.c.bf16 %v1128, %v1126
        %v1160 = vpack.c.bf16 %v1131, %v1129
        %v1161 = vpack.c.bf16 %v1132, %v1130
        %v1162 = vpack.c.bf16 %v1135, %v1133
        %v1163 = vpack.c.bf16 %v1136, %v1134
        %v1164 = vpack.c.bf16 %v1139, %v1137
        %v1165 = vpack.c.bf16 %v1140, %v1138
        %v1166 = vpack.c.bf16 %v1143, %v1141
        %v1167 = vpack.c.bf16 %v1144, %v1142
        %v1168 = vpack.c.bf16 %v1147, %v1145
        %v1169 = vpack.c.bf16 %v1148, %v1146
        %v1170 = vpack.c.bf16 %v1151, %v1149
        %v1171 = vpack.c.bf16 %v1152, %v1150
        %v1172 = vpack.c.bf16 %v1155, %v1153
        %v1173 = vpack.c.bf16 %v1156, %v1154
        %1174 = vmatpush.bf16.msra.mxu0 %v1172
        %1175 = vmatpush.bf16.msra.mxu0 %v1170
        %1176 = vmatpush.bf16.msra.mxu0 %v1168
        %1177 = vmatpush.bf16.msra.mxu0 %v1166
        %1178 = vmatpush.bf16.msra.mxu0 %v1164
        %1179 = vmatpush.bf16.msra.mxu0 %v1162
        %1180 = vmatpush.bf16.msra.mxu0 %v1160
        %1181 = vmatpush.bf16.msra.mxu0 %v1158
        %1182 = vmatmul.bf16.gmra.mxu0 %v1157
        %v1183 = vpop.f32.mrf.mxu0
        %v1184 = vadd.f32 0.0, %v1183
        %v1185 = vpop.f32.mrf.mxu0
        %1186 = vdwg.mxu0
        %1187 = vmatpush.bf16.msra.mxu0 %v1173
        %1188 = vmatpush.bf16.msra.mxu0 %v1171
        %1189 = vmatpush.bf16.msra.mxu0 %v1169
        %1190 = vmatpush.bf16.msra.mxu0 %v1167
        %1191 = vmatpush.bf16.msra.mxu0 %v1165
        %1192 = vmatpush.bf16.msra.mxu0 %v1163
        %1193 = vmatpush.bf16.msra.mxu0 %v1161
        %1194 = vmatpush.bf16.msra.mxu0 %v1159
        %1195 = vmatmul.bf16.gmra.mxu0 %v1157
        %v1196 = vpop.f32.mrf.mxu0
        %v1197 = vadd.f32 0.0, %v1196
        %v1198 = vpop.f32.mrf.mxu0
        %1199 = vdwg.mxu0
        %v1200 = vpack.c.bf16 %v929, %v929
        %v1201 = vpack.c.bf16 %v1021, %v1021
        %1202 = vmatpush.bf16.xpose.msra.mxu0 0
        %1203 = vmatpush.bf16.xpose.msra.mxu0 0
        %1204 = vmatpush.bf16.xpose.msra.mxu0 0
        %1205 = vmatpush.bf16.xpose.msra.mxu0 0
        %1206 = vmatpush.bf16.xpose.msra.mxu0 0
        %1207 = vmatpush.bf16.xpose.msra.mxu0 0
        %1208 = vmatpush.bf16.xpose.msra.mxu0 0
        %1209 = vmatpush.bf16.xpose.msra.mxu0 %v1201
        %1210 = vmatmul.bf16.gmra.mxu0 %v1200
        %v1211 = vpop.f32.mrf.mxu0
        %v1212 = vadd.f32 0.0, %v1211
        %v1213 = vpop.f32.mrf.mxu0
        %1214 = vdwg.mxu0
        %v1215 = vsel %vm933, 1, 0
        %vm1216 = vcmp.eq.s32.totalorder %v1215, 1
        %v1217 = vsel %vm1216, %v1212, -1e+09
        %vm1218 = vcmask 61440
        %v1219 = vsel %vm1218, %v1217, -inf
        %1220 = vmax.xlane.f32.xlu0 %v1219
        %v1221 = vpop.xlane.xlu0 %1220
        %v1222 = vsub.f32 %v1217, %v1221
        %v1223 = vmul.f32 %v1222, 1.442695
        %v1224 = vpow.pop %v1223
        %v1225 = vsel %vm1218, %v1224, 0.0
        %1226 = vadd.xlane.f32.xlu0 %v1225
        %v1227 = vpop.xlane.xlu0 %1226
        %v1228 = vrcp.pop %v1227
        %v1229 = vmul.f32 %v1224, %v1228
        %v1230 = vpack.c.bf16 %v1229, %v1229
        %vm1231 = vcmask 64512
        %v1233 = vsel %vm1231, %v1230, 0
        %vm1235 = vcmask 1043456
        %v1237 = vsel %vm1235, %v986, 0
        %1239 = vmatpush.bf16.msra.mxu0 0
        %1240 = vmatpush.bf16.msra.mxu0 0
        %1241 = vmatpush.bf16.msra.mxu0 0
        %1242 = vmatpush.bf16.msra.mxu0 0
        %1243 = vmatpush.bf16.msra.mxu0 0
        %1244 = vmatpush.bf16.msra.mxu0 0
        %1245 = vmatpush.bf16.msra.mxu0 0
        %1246 = vmatpush.bf16.msra.mxu0 %v1237
        %1247 = vmatmul.bf16.gmra.mxu0 %v1233
        %v1248 = vpop.f32.mrf.mxu0
        %v1249 = vadd.f32 0.0, %v1248
        %v1250 = vpop.f32.mrf.mxu0
        %1251 = vdwg.mxu0
        %v1252 = vld [vmem:[%s11] sm:$0xff]
        %v1253 = vld [vmem:[%s11 + $0x8] sm:$0xff]
        %v1254 = vld [vmem:[%s11 + $0x10] sm:$0xff]
        %v1255 = vld [vmem:[%s11 + $0x18] sm:$0xff]
        %v1256 = vld [vmem:[%s11 + $0x20] sm:$0xff]
        %v1257 = vld [vmem:[%s11 + $0x28] sm:$0xff]
        %v1258 = vld [vmem:[%s11 + $0x30] sm:$0xff]
        %v1259 = vld [vmem:[%s11 + $0x38] sm:$0xff]
        %v1260 = vld [vmem:[%s11 + $0x40] sm:$0xff]
        %v1261 = vld [vmem:[%s11 + $0x48] sm:$0xff]
        %v1262 = vld [vmem:[%s11 + $0x50] sm:$0xff]
        %v1263 = vld [vmem:[%s11 + $0x58] sm:$0xff]
        %v1264 = vld [vmem:[%s11 + $0x60] sm:$0xff]
        %v1265 = vld [vmem:[%s11 + $0x68] sm:$0xff]
        %v1266 = vld [vmem:[%s11 + $0x70] sm:$0xff]
        %v1267 = vld [vmem:[%s11 + $0x78] sm:$0xff]
        %v1268 = vld [vmem:[%s11 + $0x80] sm:$0xff]
        %v1269 = vld [vmem:[%s11 + $0x88] sm:$0xff]
        %v1270 = vld [vmem:[%s11 + $0x90] sm:$0xff]
        %v1271 = vld [vmem:[%s11 + $0x98] sm:$0xff]
        %v1272 = vld [vmem:[%s11 + $0xa0] sm:$0xff]
        %v1273 = vld [vmem:[%s11 + $0xa8] sm:$0xff]
        %v1274 = vld [vmem:[%s11 + $0xb0] sm:$0xff]
        %v1275 = vld [vmem:[%s11 + $0xb8] sm:$0xff]
        %v1276 = vld [vmem:[%s11 + $0xc0] sm:$0xff]
        %v1277 = vld [vmem:[%s11 + $0xc8] sm:$0xff]
        %v1278 = vld [vmem:[%s11 + $0xd0] sm:$0xff]
        %v1279 = vld [vmem:[%s11 + $0xd8] sm:$0xff]
        %v1280 = vld [vmem:[%s11 + $0xe0] sm:$0xff]
        %v1281 = vld [vmem:[%s11 + $0xe8] sm:$0xff]
        %v1282 = vld [vmem:[%s11 + $0xf0] sm:$0xff]
        %v1283 = vld [vmem:[%s11 + $0xf8] sm:$0xff]
        %v1284 = vpack.c.bf16 %v1249, %v1249
        %v1285 = vpack.c.bf16 %v1253, %v1252
        %v1286 = vpack.c.bf16 %v1255, %v1254
        %v1287 = vpack.c.bf16 %v1257, %v1256
        %v1288 = vpack.c.bf16 %v1259, %v1258
        %v1289 = vpack.c.bf16 %v1261, %v1260
        %v1290 = vpack.c.bf16 %v1263, %v1262
        %v1291 = vpack.c.bf16 %v1265, %v1264
        %v1292 = vpack.c.bf16 %v1267, %v1266
        %v1293 = vpack.c.bf16 %v1269, %v1268
        %v1294 = vpack.c.bf16 %v1271, %v1270
        %v1295 = vpack.c.bf16 %v1273, %v1272
        %v1296 = vpack.c.bf16 %v1275, %v1274
        %v1297 = vpack.c.bf16 %v1277, %v1276
        %v1298 = vpack.c.bf16 %v1279, %v1278
        %v1299 = vpack.c.bf16 %v1281, %v1280
        %v1300 = vpack.c.bf16 %v1283, %v1282
        %1301 = vmatpush.bf16.msra.mxu0 %v1292
        %1302 = vmatpush.bf16.msra.mxu0 %v1291
        %1303 = vmatpush.bf16.msra.mxu0 %v1290
        %1304 = vmatpush.bf16.msra.mxu0 %v1289
        %1305 = vmatpush.bf16.msra.mxu0 %v1288
        %1306 = vmatpush.bf16.msra.mxu0 %v1287
        %1307 = vmatpush.bf16.msra.mxu0 %v1286
        %1308 = vmatpush.bf16.msra.mxu0 %v1285
        %1309 = vmatmul.bf16.gmra.mxu0 %v1284
        %v1310 = vpop.f32.mrf.mxu0
        %v1311 = vadd.f32 0.0, %v1310
        %v1312 = vpop.f32.mrf.mxu0
        %1313 = vdwg.mxu0
        %1314 = vmatpush.bf16.msra.mxu0 %v1300
        %1315 = vmatpush.bf16.msra.mxu0 %v1299
        %1316 = vmatpush.bf16.msra.mxu0 %v1298
        %1317 = vmatpush.bf16.msra.mxu0 %v1297
        %1318 = vmatpush.bf16.msra.mxu0 %v1296
        %1319 = vmatpush.bf16.msra.mxu0 %v1295
        %1320 = vmatpush.bf16.msra.mxu0 %v1294
        %1321 = vmatpush.bf16.msra.mxu0 %v1293
        %1322 = vmatmul.bf16.gmra.mxu0 %v1200
        %v1323 = vpop.f32.mrf.mxu0
        %v1324 = vadd.f32 %v1311, %v1323
        %v1325 = vpop.f32.mrf.mxu0
        %1326 = vdwg.mxu0
        %v1327 = vtanh.pop %v1324
        %v1328 = vld [vmem:[%s12] sm:$0xff]
        %v1329 = vld [vmem:[%s12 + $0x8] sm:$0xff]
        %v1330 = vld [vmem:[%s12 + $0x10] sm:$0xff]
        %v1331 = vld [vmem:[%s12 + $0x18] sm:$0xff]
        %v1332 = vld [vmem:[%s12 + $0x20] sm:$0xff]
        %v1333 = vld [vmem:[%s12 + $0x28] sm:$0xff]
        %v1334 = vld [vmem:[%s12 + $0x30] sm:$0xff]
        %v1335 = vld [vmem:[%s12 + $0x38] sm:$0xff]
        %v1336 = vld [vmem:[%s12 + $0x40] sm:$0xff]
        %v1337 = vld [vmem:[%s12 + $0x48] sm:$0xff]
        %v1338 = vld [vmem:[%s12 + $0x50] sm:$0xff]
        %v1339 = vld [vmem:[%s12 + $0x58] sm:$0xff]
        %v1340 = vld [vmem:[%s12 + $0x60] sm:$0xff]
        %v1341 = vld [vmem:[%s12 + $0x68] sm:$0xff]
        %v1342 = vld [vmem:[%s12 + $0x70] sm:$0xff]
        %v1343 = vld [vmem:[%s12 + $0x78] sm:$0xff]
        %v1344 = vpack.c.bf16 %v1327, %v1327
        %v1345 = vpack.c.bf16 %v1329, %v1328
        %v1346 = vpack.c.bf16 %v1331, %v1330
        %v1347 = vpack.c.bf16 %v1333, %v1332
        %v1348 = vpack.c.bf16 %v1335, %v1334
        %v1349 = vpack.c.bf16 %v1337, %v1336
        %v1350 = vpack.c.bf16 %v1339, %v1338
        %v1351 = vpack.c.bf16 %v1341, %v1340
        %v1352 = vpack.c.bf16 %v1343, %v1342
        %v1353 = vld [vmem:[%s13] sm:$0x1]
        %v1355 = vperm.slane %v1353, 0
        %1357 = vmatpush.bf16.msra.mxu0 %v1352
        %1358 = vmatpush.bf16.msra.mxu0 %v1351
        %1359 = vmatpush.bf16.msra.mxu0 %v1350
        %1360 = vmatpush.bf16.msra.mxu0 %v1349
        %1361 = vmatpush.bf16.msra.mxu0 %v1348
        %1362 = vmatpush.bf16.msra.mxu0 %v1347
        %1363 = vmatpush.bf16.msra.mxu0 %v1346
        %1364 = vmatpush.bf16.msra.mxu0 %v1345
        %1365 = vmatmul.bf16.gmra.mxu0 %v1344
        %v1366 = vpop.f32.mrf.mxu0
        %v1367 = vadd.f32 %v1355, %v1366
        %v1368 = vpop.f32.mrf.mxu0
        %1369 = vdwg.mxu0
        %v1370 = vsel %vm937, %v1367, -1e+09
        %vm1371 = vcmask 4096
        %1372 = vst.msk [vmem:[%s749] sm:$0x1f] %vm1371, %v1370
        %v1373 = vpack.c.bf16 %v1109, %v1109
        %1374 = vmatpush.bf16.xpose.msra.mxu0 0
        %1375 = vmatpush.bf16.xpose.msra.mxu0 0
        %1376 = vmatpush.bf16.xpose.msra.mxu0 0
        %1377 = vmatpush.bf16.xpose.msra.mxu0 0
        %1378 = vmatpush.bf16.xpose.msra.mxu0 0
        %1379 = vmatpush.bf16.xpose.msra.mxu0 0
        %1380 = vmatpush.bf16.xpose.msra.mxu0 0
        %1381 = vmatpush.bf16.xpose.msra.mxu0 %v1373
        %1382 = vmatmul.bf16.gmra.mxu0 %v1200
        %v1383 = vpop.f32.mrf.mxu0
        %v1384 = vadd.f32 0.0, %v1383
        %v1385 = vpop.f32.mrf.mxu0
        %1386 = vdwg.mxu0
        %v1387 = vsel %vm1216, %v1384, -1e+09
        %v1388 = vsel %vm1218, %v1387, -inf
        %1389 = vmax.xlane.f32.xlu0 %v1388
        %v1390 = vpop.xlane.xlu0 %1389
        %v1391 = vsub.f32 %v1387, %v1390
        %v1392 = vmul.f32 %v1391, 1.442695
        %v1393 = vpow.pop %v1392
        %v1394 = vsel %vm1218, %v1393, 0.0
        %1395 = vadd.xlane.f32.xlu0 %v1394
        %v1396 = vpop.xlane.xlu0 %1395
        %v1397 = vrcp.pop %v1396
        %v1398 = vmul.f32 %v1393, %v1397
        %v1399 = vpack.c.bf16 %v1398, %v1398
        %v1401 = vsel %vm1231, %v1399, 0
        %v1404 = vsel %vm1235, %v1082, 0
        %1406 = vmatpush.bf16.msra.mxu0 0
        %1407 = vmatpush.bf16.msra.mxu0 0
        %1408 = vmatpush.bf16.msra.mxu0 0
        %1409 = vmatpush.bf16.msra.mxu0 0
        %1410 = vmatpush.bf16.msra.mxu0 0
        %1411 = vmatpush.bf16.msra.mxu0 0
        %1412 = vmatpush.bf16.msra.mxu0 0
        %1413 = vmatpush.bf16.msra.mxu0 %v1404
        %1414 = vmatmul.bf16.gmra.mxu0 %v1401
        %v1415 = vpop.f32.mrf.mxu0
        %v1416 = vadd.f32 0.0, %v1415
        %v1417 = vpop.f32.mrf.mxu0
        %1418 = vdwg.mxu0
        %s1419 = scalar_lea.vmem %s11, 256
        %v1420 = vld [vmem:[%s1419] sm:$0xff]
        %v1421 = vld [vmem:[%s1419 + $0x8] sm:$0xff]
        %v1422 = vld [vmem:[%s1419 + $0x10] sm:$0xff]
        %v1423 = vld [vmem:[%s1419 + $0x18] sm:$0xff]
        %v1424 = vld [vmem:[%s1419 + $0x20] sm:$0xff]
        %v1425 = vld [vmem:[%s1419 + $0x28] sm:$0xff]
        %v1426 = vld [vmem:[%s1419 + $0x30] sm:$0xff]
        %v1427 = vld [vmem:[%s1419 + $0x38] sm:$0xff]
        %v1428 = vld [vmem:[%s1419 + $0x40] sm:$0xff]
        %v1429 = vld [vmem:[%s1419 + $0x48] sm:$0xff]
        %v1430 = vld [vmem:[%s1419 + $0x50] sm:$0xff]
        %v1431 = vld [vmem:[%s1419 + $0x58] sm:$0xff]
        %v1432 = vld [vmem:[%s1419 + $0x60] sm:$0xff]
        %v1433 = vld [vmem:[%s1419 + $0x68] sm:$0xff]
        %v1434 = vld [vmem:[%s1419 + $0x70] sm:$0xff]
        %v1435 = vld [vmem:[%s1419 + $0x78] sm:$0xff]
        %v1436 = vld [vmem:[%s1419 + $0x80] sm:$0xff]
        %v1437 = vld [vmem:[%s1419 + $0x88] sm:$0xff]
        %v1438 = vld [vmem:[%s1419 + $0x90] sm:$0xff]
        %v1439 = vld [vmem:[%s1419 + $0x98] sm:$0xff]
        %v1440 = vld [vmem:[%s1419 + $0xa0] sm:$0xff]
        %v1441 = vld [vmem:[%s1419 + $0xa8] sm:$0xff]
        %v1442 = vld [vmem:[%s1419 + $0xb0] sm:$0xff]
        %v1443 = vld [vmem:[%s1419 + $0xb8] sm:$0xff]
        %v1444 = vld [vmem:[%s1419 + $0xc0] sm:$0xff]
        %v1445 = vld [vmem:[%s1419 + $0xc8] sm:$0xff]
        %v1446 = vld [vmem:[%s1419 + $0xd0] sm:$0xff]
        %v1447 = vld [vmem:[%s1419 + $0xd8] sm:$0xff]
        %v1448 = vld [vmem:[%s1419 + $0xe0] sm:$0xff]
        %v1449 = vld [vmem:[%s1419 + $0xe8] sm:$0xff]
        %v1450 = vld [vmem:[%s1419 + $0xf0] sm:$0xff]
        %v1451 = vld [vmem:[%s1419 + $0xf8] sm:$0xff]
        %v1452 = vpack.c.bf16 %v1416, %v1416
        %v1453 = vpack.c.bf16 %v1421, %v1420
        %v1454 = vpack.c.bf16 %v1423, %v1422
        %v1455 = vpack.c.bf16 %v1425, %v1424
        %v1456 = vpack.c.bf16 %v1427, %v1426
        %v1457 = vpack.c.bf16 %v1429, %v1428
        %v1458 = vpack.c.bf16 %v1431, %v1430
        %v1459 = vpack.c.bf16 %v1433, %v1432
        %v1460 = vpack.c.bf16 %v1435, %v1434
        %v1461 = vpack.c.bf16 %v1437, %v1436
        %v1462 = vpack.c.bf16 %v1439, %v1438
        %v1463 = vpack.c.bf16 %v1441, %v1440
        %v1464 = vpack.c.bf16 %v1443, %v1442
        %v1465 = vpack.c.bf16 %v1445, %v1444
        %v1466 = vpack.c.bf16 %v1447, %v1446
        %v1467 = vpack.c.bf16 %v1449, %v1448
        %v1468 = vpack.c.bf16 %v1451, %v1450
        %1469 = vmatpush.bf16.msra.mxu0 %v1460
        %1470 = vmatpush.bf16.msra.mxu0 %v1459
        %1471 = vmatpush.bf16.msra.mxu0 %v1458
        %1472 = vmatpush.bf16.msra.mxu0 %v1457
        %1473 = vmatpush.bf16.msra.mxu0 %v1456
        %1474 = vmatpush.bf16.msra.mxu0 %v1455
        %1475 = vmatpush.bf16.msra.mxu0 %v1454
        %1476 = vmatpush.bf16.msra.mxu0 %v1453
        %1477 = vmatmul.bf16.gmra.mxu0 %v1452
        %v1478 = vpop.f32.mrf.mxu0
        %v1479 = vadd.f32 0.0, %v1478
        %v1480 = vpop.f32.mrf.mxu0
        %1481 = vdwg.mxu0
        %1482 = vmatpush.bf16.msra.mxu0 %v1468
        %1483 = vmatpush.bf16.msra.mxu0 %v1467
        %1484 = vmatpush.bf16.msra.mxu0 %v1466
        %1485 = vmatpush.bf16.msra.mxu0 %v1465
        %1486 = vmatpush.bf16.msra.mxu0 %v1464
        %1487 = vmatpush.bf16.msra.mxu0 %v1463
        %1488 = vmatpush.bf16.msra.mxu0 %v1462
        %1489 = vmatpush.bf16.msra.mxu0 %v1461
        %1490 = vmatmul.bf16.gmra.mxu0 %v1200
        %v1491 = vpop.f32.mrf.mxu0
        %v1492 = vadd.f32 %v1479, %v1491
        %v1493 = vpop.f32.mrf.mxu0
        %1494 = vdwg.mxu0
        %v1495 = vtanh.pop %v1492
        %s1496 = scalar_lea.vmem %s12, 128
        %v1497 = vld [vmem:[%s1496] sm:$0xff]
        %v1498 = vld [vmem:[%s1496 + $0x8] sm:$0xff]
        %v1499 = vld [vmem:[%s1496 + $0x10] sm:$0xff]
        %v1500 = vld [vmem:[%s1496 + $0x18] sm:$0xff]
        %v1501 = vld [vmem:[%s1496 + $0x20] sm:$0xff]
        %v1502 = vld [vmem:[%s1496 + $0x28] sm:$0xff]
        %v1503 = vld [vmem:[%s1496 + $0x30] sm:$0xff]
        %v1504 = vld [vmem:[%s1496 + $0x38] sm:$0xff]
        %v1505 = vld [vmem:[%s1496 + $0x40] sm:$0xff]
        %v1506 = vld [vmem:[%s1496 + $0x48] sm:$0xff]
        %v1507 = vld [vmem:[%s1496 + $0x50] sm:$0xff]
        %v1508 = vld [vmem:[%s1496 + $0x58] sm:$0xff]
        %v1509 = vld [vmem:[%s1496 + $0x60] sm:$0xff]
        %v1510 = vld [vmem:[%s1496 + $0x68] sm:$0xff]
        %v1511 = vld [vmem:[%s1496 + $0x70] sm:$0xff]
        %v1512 = vld [vmem:[%s1496 + $0x78] sm:$0xff]
        %v1513 = vpack.c.bf16 %v1495, %v1495
        %v1514 = vpack.c.bf16 %v1498, %v1497
        %v1515 = vpack.c.bf16 %v1500, %v1499
        %v1516 = vpack.c.bf16 %v1502, %v1501
        %v1517 = vpack.c.bf16 %v1504, %v1503
        %v1518 = vpack.c.bf16 %v1506, %v1505
        %v1519 = vpack.c.bf16 %v1508, %v1507
        %v1520 = vpack.c.bf16 %v1510, %v1509
        %v1521 = vpack.c.bf16 %v1512, %v1511
        %s1522 = scalar_lea.vmem %s13, 1
        %v1523 = vld [vmem:[%s1522] sm:$0x1]
        %v1525 = vperm.slane %v1523, 0
        %1527 = vmatpush.bf16.msra.mxu0 %v1521
        %1528 = vmatpush.bf16.msra.mxu0 %v1520
        %1529 = vmatpush.bf16.msra.mxu0 %v1519
        %1530 = vmatpush.bf16.msra.mxu0 %v1518
        %1531 = vmatpush.bf16.msra.mxu0 %v1517
        %1532 = vmatpush.bf16.msra.mxu0 %v1516
        %1533 = vmatpush.bf16.msra.mxu0 %v1515
        %1534 = vmatpush.bf16.msra.mxu0 %v1514
        %1535 = vmatmul.bf16.gmra.mxu0 %v1513
        %v1536 = vpop.f32.mrf.mxu0
        %v1537 = vadd.f32 %v1525, %v1536
        %v1538 = vpop.f32.mrf.mxu0
        %1539 = vdwg.mxu0
        %v1540 = vsel %vm937, %v1537, -1e+09
        %1541 = vst.msk [vmem:[%s753] sm:$0x1f] %vm1371, %v1540
        %v1542 = vld [vmem:[%s15] sm:$0x1]
        %v1543 = vpack.c.bf16 %v1542, %v1542
        %v1544 = vpack.c.bf16 %v1122, %v1122
        %1545 = vmatpush.bf16.xpose.msra.mxu0 0
        %1546 = vmatpush.bf16.xpose.msra.mxu0 0
        %1547 = vmatpush.bf16.xpose.msra.mxu0 0
        %1548 = vmatpush.bf16.xpose.msra.mxu0 0
        %1549 = vmatpush.bf16.xpose.msra.mxu0 0
        %1550 = vmatpush.bf16.xpose.msra.mxu0 0
        %1551 = vmatpush.bf16.xpose.msra.mxu0 0
        %1552 = vmatpush.bf16.xpose.msra.mxu0 %v1544
        %1553 = vmatmul.bf16.gmra.mxu0 %v1543
        %v1554 = vpop.f32.mrf.mxu0
        %v1555 = vadd.f32 0.0, %v1554
        %v1556 = vpop.f32.mrf.mxu0
        %1557 = vdwg.mxu0
        %v1558 = vsel %vm933, %v1555, -1e+09
        %vm1559 = vcmask 57344
        %v1560 = vsel %vm1559, %v1558, -inf
        %1561 = vmax.xlane.f32.xlu0 %v1560
        %v1562 = vpop.xlane.xlu0 %1561
        %v1563 = vsub.f32 %v1558, %v1562
        %v1564 = vmul.f32 %v1563, 1.442695
        %v1565 = vpow.pop %v1564
        %v1566 = vsel %vm1559, %v1565, 0.0
        %1567 = vadd.xlane.f32.xlu0 %v1566
        %v1568 = vpop.xlane.xlu0 %1567
        %v1569 = vrcp.pop %v1568
        %v1570 = vmul.f32 %v1565, %v1569
        %v1571 = vpack.c.bf16 %v1570, %v1570
        %v1573 = vsel %vm1231, %v1571, 0
        %1575 = vmatpush.bf16.msra.mxu0 0
        %1576 = vmatpush.bf16.msra.mxu0 0
        %1577 = vmatpush.bf16.msra.mxu0 0
        %1578 = vmatpush.bf16.msra.mxu0 0
        %1579 = vmatpush.bf16.msra.mxu0 0
        %1580 = vmatpush.bf16.msra.mxu0 0
        %1581 = vmatpush.bf16.msra.mxu0 0
        %1582 = vmatpush.bf16.msra.mxu0 %v1404
        %1583 = vmatmul.bf16.gmra.mxu0 %v1573
        %v1584 = vpop.f32.mrf.mxu0
        %v1585 = vadd.f32 0.0, %v1584
        %v1586 = vpop.f32.mrf.mxu0
        %1587 = vdwg.mxu0
        %s1588 = scalar_lea.vmem %s11, 512
        %v1589 = vld [vmem:[%s1588] sm:$0xff]
        %v1590 = vld [vmem:[%s1588 + $0x8] sm:$0xff]
        %v1591 = vld [vmem:[%s1588 + $0x10] sm:$0xff]
        %v1592 = vld [vmem:[%s1588 + $0x18] sm:$0xff]
        %v1593 = vld [vmem:[%s1588 + $0x20] sm:$0xff]
        %v1594 = vld [vmem:[%s1588 + $0x28] sm:$0xff]
        %v1595 = vld [vmem:[%s1588 + $0x30] sm:$0xff]
        %v1596 = vld [vmem:[%s1588 + $0x38] sm:$0xff]
        %v1597 = vld [vmem:[%s1588 + $0x40] sm:$0xff]
        %v1598 = vld [vmem:[%s1588 + $0x48] sm:$0xff]
        %v1599 = vld [vmem:[%s1588 + $0x50] sm:$0xff]
        %v1600 = vld [vmem:[%s1588 + $0x58] sm:$0xff]
        %v1601 = vld [vmem:[%s1588 + $0x60] sm:$0xff]
        %v1602 = vld [vmem:[%s1588 + $0x68] sm:$0xff]
        %v1603 = vld [vmem:[%s1588 + $0x70] sm:$0xff]
        %v1604 = vld [vmem:[%s1588 + $0x78] sm:$0xff]
        %v1605 = vld [vmem:[%s1588 + $0x80] sm:$0xff]
        %v1606 = vld [vmem:[%s1588 + $0x88] sm:$0xff]
        %v1607 = vld [vmem:[%s1588 + $0x90] sm:$0xff]
        %v1608 = vld [vmem:[%s1588 + $0x98] sm:$0xff]
        %v1609 = vld [vmem:[%s1588 + $0xa0] sm:$0xff]
        %v1610 = vld [vmem:[%s1588 + $0xa8] sm:$0xff]
        %v1611 = vld [vmem:[%s1588 + $0xb0] sm:$0xff]
        %v1612 = vld [vmem:[%s1588 + $0xb8] sm:$0xff]
        %v1613 = vld [vmem:[%s1588 + $0xc0] sm:$0xff]
        %v1614 = vld [vmem:[%s1588 + $0xc8] sm:$0xff]
        %v1615 = vld [vmem:[%s1588 + $0xd0] sm:$0xff]
        %v1616 = vld [vmem:[%s1588 + $0xd8] sm:$0xff]
        %v1617 = vld [vmem:[%s1588 + $0xe0] sm:$0xff]
        %v1618 = vld [vmem:[%s1588 + $0xe8] sm:$0xff]
        %v1619 = vld [vmem:[%s1588 + $0xf0] sm:$0xff]
        %v1620 = vld [vmem:[%s1588 + $0xf8] sm:$0xff]
        %v1621 = vpack.c.bf16 %v1585, %v1585
        %v1622 = vpack.c.bf16 %v1590, %v1589
        %v1623 = vpack.c.bf16 %v1592, %v1591
        %v1624 = vpack.c.bf16 %v1594, %v1593
        %v1625 = vpack.c.bf16 %v1596, %v1595
        %v1626 = vpack.c.bf16 %v1598, %v1597
        %v1627 = vpack.c.bf16 %v1600, %v1599
        %v1628 = vpack.c.bf16 %v1602, %v1601
        %v1629 = vpack.c.bf16 %v1604, %v1603
        %v1630 = vpack.c.bf16 %v1606, %v1605
        %v1631 = vpack.c.bf16 %v1608, %v1607
        %v1632 = vpack.c.bf16 %v1610, %v1609
        %v1633 = vpack.c.bf16 %v1612, %v1611
        %v1634 = vpack.c.bf16 %v1614, %v1613
        %v1635 = vpack.c.bf16 %v1616, %v1615
        %v1636 = vpack.c.bf16 %v1618, %v1617
        %v1637 = vpack.c.bf16 %v1620, %v1619
        %1638 = vmatpush.bf16.msra.mxu0 %v1629
        %1639 = vmatpush.bf16.msra.mxu0 %v1628
        %1640 = vmatpush.bf16.msra.mxu0 %v1627
        %1641 = vmatpush.bf16.msra.mxu0 %v1626
        %1642 = vmatpush.bf16.msra.mxu0 %v1625
        %1643 = vmatpush.bf16.msra.mxu0 %v1624
        %1644 = vmatpush.bf16.msra.mxu0 %v1623
        %1645 = vmatpush.bf16.msra.mxu0 %v1622
        %1646 = vmatmul.bf16.gmra.mxu0 %v1621
        %v1647 = vpop.f32.mrf.mxu0
        %v1648 = vadd.f32 0.0, %v1647
        %v1649 = vpop.f32.mrf.mxu0
        %1650 = vdwg.mxu0
        %1651 = vmatpush.bf16.msra.mxu0 %v1637
        %1652 = vmatpush.bf16.msra.mxu0 %v1636
        %1653 = vmatpush.bf16.msra.mxu0 %v1635
        %1654 = vmatpush.bf16.msra.mxu0 %v1634
        %1655 = vmatpush.bf16.msra.mxu0 %v1633
        %1656 = vmatpush.bf16.msra.mxu0 %v1632
        %1657 = vmatpush.bf16.msra.mxu0 %v1631
        %1658 = vmatpush.bf16.msra.mxu0 %v1630
        %1659 = vmatmul.bf16.gmra.mxu0 %v1543
        %v1660 = vpop.f32.mrf.mxu0
        %v1661 = vadd.f32 %v1648, %v1660
        %v1662 = vpop.f32.mrf.mxu0
        %1663 = vdwg.mxu0
        %v1664 = vtanh.pop %v1661
        %s1665 = scalar_lea.vmem %s12, 256
        %v1666 = vld [vmem:[%s1665] sm:$0xff]
        %v1667 = vld [vmem:[%s1665 + $0x8] sm:$0xff]
        %v1668 = vld [vmem:[%s1665 + $0x10] sm:$0xff]
        %v1669 = vld [vmem:[%s1665 + $0x18] sm:$0xff]
        %v1670 = vld [vmem:[%s1665 + $0x20] sm:$0xff]
        %v1671 = vld [vmem:[%s1665 + $0x28] sm:$0xff]
        %v1672 = vld [vmem:[%s1665 + $0x30] sm:$0xff]
        %v1673 = vld [vmem:[%s1665 + $0x38] sm:$0xff]
        %v1674 = vld [vmem:[%s1665 + $0x40] sm:$0xff]
        %v1675 = vld [vmem:[%s1665 + $0x48] sm:$0xff]
        %v1676 = vld [vmem:[%s1665 + $0x50] sm:$0xff]
        %v1677 = vld [vmem:[%s1665 + $0x58] sm:$0xff]
        %v1678 = vld [vmem:[%s1665 + $0x60] sm:$0xff]
        %v1679 = vld [vmem:[%s1665 + $0x68] sm:$0xff]
        %v1680 = vld [vmem:[%s1665 + $0x70] sm:$0xff]
        %v1681 = vld [vmem:[%s1665 + $0x78] sm:$0xff]
        %v1682 = vpack.c.bf16 %v1664, %v1664
        %v1683 = vpack.c.bf16 %v1667, %v1666
        %v1684 = vpack.c.bf16 %v1669, %v1668
        %v1685 = vpack.c.bf16 %v1671, %v1670
        %v1686 = vpack.c.bf16 %v1673, %v1672
        %v1687 = vpack.c.bf16 %v1675, %v1674
        %v1688 = vpack.c.bf16 %v1677, %v1676
        %v1689 = vpack.c.bf16 %v1679, %v1678
        %v1690 = vpack.c.bf16 %v1681, %v1680
        %s1691 = scalar_lea.vmem %s13, 2
        %v1692 = vld [vmem:[%s1691] sm:$0x1]
        %1693 = vmatpush.bf16.msra.mxu0 %v1690
        %1694 = vmatpush.bf16.msra.mxu0 %v1689
        %1695 = vmatpush.bf16.msra.mxu0 %v1688
        %1696 = vmatpush.bf16.msra.mxu0 %v1687
        %1697 = vmatpush.bf16.msra.mxu0 %v1686
        %1698 = vmatpush.bf16.msra.mxu0 %v1685
        %1699 = vmatpush.bf16.msra.mxu0 %v1684
        %1700 = vmatpush.bf16.msra.mxu0 %v1683
        %1701 = vmatmul.bf16.gmra.mxu0 %v1682
        %v1702 = vpop.f32.mrf.mxu0
        %v1703 = vadd.f32 %v1692, %v1702
        %v1704 = vpop.f32.mrf.mxu0
        %1705 = vdwg.mxu0
        %vm1706 = vcmask 32768
        %1707 = vst.msk [vmem:[%s717] sm:$0x1] %vm1706, %v1703
        %v1708 = vsel %vm1371, %v1370, -inf
        %v1709 = vrot.slane %v1708, 4
        %v1710 = vmax.f32 %v1708, %v1709
        %v1711 = vrot.slane %v1710, 2
        %v1712 = vmax.f32 %v1710, %v1711
        %v1713 = vrot.slane %v1712, 1
        %v1714 = vmax.f32 %v1712, %v1713
        %vm1715 = vcmp.ge.f32.partialorder %v1370, %v1714
        %v1716 = vsel %vm1715, %v935, 5
        %v1717 = vsel %vm1371, %v1716, 2147483647
        %v1718 = vrot.slane %v1717, 4
        %vm1719 = vcmp.lt.s32.totalorder %v1717, %v1718
        %v1720 = vsel %vm1719, %v1717, %v1718
        %v1721 = vrot.slane %v1720, 2
        %vm1722 = vcmp.lt.s32.totalorder %v1720, %v1721
        %v1723 = vsel %vm1722, %v1720, %v1721
        %v1724 = vrot.slane %v1723, 1
        %vm1725 = vcmp.lt.s32.totalorder %v1723, %v1724
        %v1726 = vsel %vm1725, %v1723, %v1724
        %vm1727 = vcmp.eq.s32.totalorder %v935, %v1726
        %v1728 = vsel %vm1727, 1, 0
        %1729 = vset.pattern.permute.xlu0 0
        %1730 = vperm.xlu0 %1729, %v1728
        %v1731 = vpop.permute.xlu0 %1730
        %vm1732 = vcmp.eq.s32.totalorder %v1731, 1
        %v1733 = vsel %vm1732, %v929, 0.0
        %vm1734 = vcmask 1044480
        %v1735 = vsel %vm1734, %v1733, 0.0
        %v1736 = vrot.slane %v1735, 4
        %v1737 = vadd.f32 %v1735, %v1736
        %v1738 = vrot.slane %v1737, 2
        %v1739 = vadd.f32 %v1737, %v1738
        %v1740 = vrot.slane %v1739, 1
        %v1741 = vadd.f32 %v1739, %v1740
        %v1742 = vsel %vm1371, %v1540, -inf
        %v1743 = vrot.slane %v1742, 4
        %v1744 = vmax.f32 %v1742, %v1743
        %v1745 = vrot.slane %v1744, 2
        %v1746 = vmax.f32 %v1744, %v1745
        %v1747 = vrot.slane %v1746, 1
        %v1748 = vmax.f32 %v1746, %v1747
        %vm1749 = vcmp.ge.f32.partialorder %v1540, %v1748
        %v1750 = vsel %vm1749, %v935, 5
        %v1751 = vsel %vm1371, %v1750, 2147483647
        %v1752 = vrot.slane %v1751, 4
        %vm1753 = vcmp.lt.s32.totalorder %v1751, %v1752
        %v1754 = vsel %vm1753, %v1751, %v1752
        %v1755 = vrot.slane %v1754, 2
        %vm1756 = vcmp.lt.s32.totalorder %v1754, %v1755
        %v1757 = vsel %vm1756, %v1754, %v1755
        %v1758 = vrot.slane %v1757, 1
        %vm1759 = vcmp.lt.s32.totalorder %v1757, %v1758
        %v1760 = vsel %vm1759, %v1757, %v1758
        %vm1761 = vcmp.eq.s32.totalorder %v935, %v1760
        %v1762 = vsel %vm1761, 1, 0
        %1763 = vset.pattern.permute.xlu0 0
        %1764 = vperm.xlu0 %1763, %v1762
        %v1765 = vpop.permute.xlu0 %1764
        %vm1766 = vcmp.eq.s32.totalorder %v1765, 1
        %v1767 = vsel %vm1766, %v929, 0.0
        %v1768 = vsel %vm1734, %v1767, 0.0
        %v1769 = vrot.slane %v1768, 4
        %v1770 = vadd.f32 %v1768, %v1769
        %v1771 = vrot.slane %v1770, 2
        %v1772 = vadd.f32 %v1770, %v1771
        %v1773 = vrot.slane %v1772, 1
        %v1774 = vadd.f32 %v1772, %v1773
        %v1775 = vsel %vm1761, -1e+30, %v1540
        %v1776 = vsel %vm1371, %v1775, -inf
        %v1777 = vrot.slane %v1776, 4
        %v1778 = vmax.f32 %v1776, %v1777
        %v1779 = vrot.slane %v1778, 2
        %v1780 = vmax.f32 %v1778, %v1779
        %v1781 = vrot.slane %v1780, 1
        %v1782 = vmax.f32 %v1780, %v1781
        %vm1783 = vcmp.ge.f32.partialorder %v1775, %v1782
        %v1784 = vsel %vm1783, %v935, 5
        %v1785 = vsel %vm1371, %v1784, 2147483647
        %v1786 = vrot.slane %v1785, 4
        %vm1787 = vcmp.lt.s32.totalorder %v1785, %v1786
        %v1788 = vsel %vm1787, %v1785, %v1786
        %v1789 = vrot.slane %v1788, 2
        %vm1790 = vcmp.lt.s32.totalorder %v1788, %v1789
        %v1791 = vsel %vm1790, %v1788, %v1789
        %v1792 = vrot.slane %v1791, 1
        %vm1793 = vcmp.lt.s32.totalorder %v1791, %v1792
        %v1794 = vsel %vm1793, %v1791, %v1792
        %vm1795 = vcmp.eq.s32.totalorder %v935, %v1794
        %v1796 = vsel %vm1795, 1, 0
        %1797 = vset.pattern.permute.xlu0 0
        %1798 = vperm.xlu0 %1797, %v1796
        %v1799 = vpop.permute.xlu0 %1798
        %vm1800 = vcmp.eq.s32.totalorder %v1799, 1
        %v1801 = vsel %vm1800, %v929, 0.0
        %v1802 = vsel %vm1734, %v1801, 0.0
        %v1803 = vrot.slane %v1802, 4
        %v1804 = vadd.f32 %v1802, %v1803
        %v1805 = vrot.slane %v1804, 2
        %v1806 = vadd.f32 %v1804, %v1805
        %v1807 = vrot.slane %v1806, 1
        %v1808 = vadd.f32 %v1806, %v1807
        %v1809 = vsel %vm1795, -1e+30, %v1775
        %v1810 = vsel %vm1371, %v1809, -inf
        %v1811 = vrot.slane %v1810, 4
        %v1812 = vmax.f32 %v1810, %v1811
        %v1813 = vrot.slane %v1812, 2
        %v1814 = vmax.f32 %v1812, %v1813
        %v1815 = vrot.slane %v1814, 1
        %v1816 = vmax.f32 %v1814, %v1815
        %vm1817 = vcmp.ge.f32.partialorder %v1809, %v1816
        %v1818 = vsel %vm1817, %v935, 5
        %v1819 = vsel %vm1371, %v1818, 2147483647
        %v1820 = vrot.slane %v1819, 4
        %vm1821 = vcmp.lt.s32.totalorder %v1819, %v1820
        %v1822 = vsel %vm1821, %v1819, %v1820
        %v1823 = vrot.slane %v1822, 2
        %vm1824 = vcmp.lt.s32.totalorder %v1822, %v1823
        %v1825 = vsel %vm1824, %v1822, %v1823
        %v1826 = vrot.slane %v1825, 1
        %vm1827 = vcmp.lt.s32.totalorder %v1825, %v1826
        %v1828 = vsel %vm1827, %v1825, %v1826
        %vm1829 = vcmp.eq.s32.totalorder %v935, %v1828
        %v1830 = vsel %vm1829, 1, 0
        %1831 = vset.pattern.permute.xlu0 0
        %1832 = vperm.xlu0 %1831, %v1830
        %v1833 = vpop.permute.xlu0 %1832
        %vm1834 = vcmp.eq.s32.totalorder %v1833, 1
        %v1835 = vsel %vm1834, %v929, 0.0
        %v1836 = vsel %vm1734, %v1835, 0.0
        %v1837 = vrot.slane %v1836, 4
        %v1838 = vadd.f32 %v1836, %v1837
        %v1839 = vrot.slane %v1838, 2
        %v1840 = vadd.f32 %v1838, %v1839
        %v1841 = vrot.slane %v1840, 1
        %v1842 = vadd.f32 %v1840, %v1841
        %v1843 = vsel %vm1829, -1e+30, %v1809
        %v1844 = vsel %vm1371, %v1843, -inf
        %v1845 = vrot.slane %v1844, 4
        %v1846 = vmax.f32 %v1844, %v1845
        %v1847 = vrot.slane %v1846, 2
        %v1848 = vmax.f32 %v1846, %v1847
        %v1849 = vrot.slane %v1848, 1
        %v1850 = vmax.f32 %v1848, %v1849
        %vm1851 = vcmp.ge.f32.partialorder %v1843, %v1850
        %v1852 = vsel %vm1851, %v935, 5
        %v1853 = vsel %vm1371, %v1852, 2147483647
        %v1854 = vrot.slane %v1853, 4
        %vm1855 = vcmp.lt.s32.totalorder %v1853, %v1854
        %v1856 = vsel %vm1855, %v1853, %v1854
        %v1857 = vrot.slane %v1856, 2
        %vm1858 = vcmp.lt.s32.totalorder %v1856, %v1857
        %v1859 = vsel %vm1858, %v1856, %v1857
        %v1860 = vrot.slane %v1859, 1
        %vm1861 = vcmp.lt.s32.totalorder %v1859, %v1860
        %v1862 = vsel %vm1861, %v1859, %v1860
        %vm1863 = vcmp.eq.s32.totalorder %v935, %v1862
        %v1864 = vsel %vm1863, 1, 0
        %1865 = vset.pattern.permute.xlu0 0
        %1866 = vperm.xlu0 %1865, %v1864
        %v1867 = vpop.permute.xlu0 %1866
        %vm1868 = vcmp.eq.s32.totalorder %v1867, 1
        %v1869 = vsel %vm1868, %v929, 0.0
        %v1870 = vsel %vm1734, %v1869, 0.0
        %v1871 = vrot.slane %v1870, 4
        %v1872 = vadd.f32 %v1870, %v1871
        %v1873 = vrot.slane %v1872, 2
        %v1874 = vadd.f32 %v1872, %v1873
        %v1875 = vrot.slane %v1874, 1
        %v1876 = vadd.f32 %v1874, %v1875
        %vm1877 = vcmask 1040384
        %v1878 = vsel %vm1877, %v1774, %v1808
        %vm1879 = vcmask 1041408
        %v1880 = vsel %vm1879, %v1878, %v1842
        %vm1881 = vcmask 1042432
        %v1882 = vsel %vm1881, %v1880, %v1876
        %v1883 = vpack.c.bf16 %v1741, %v1741
        %v1884 = vpack.c.bf16 %v1034, %v1034
        %1885 = vmatpush.bf16.xpose.msra.mxu0 0
        %1886 = vmatpush.bf16.xpose.msra.mxu0 0
        %1887 = vmatpush.bf16.xpose.msra.mxu0 0
        %1888 = vmatpush.bf16.xpose.msra.mxu0 0
        %1889 = vmatpush.bf16.xpose.msra.mxu0 0
        %1890 = vmatpush.bf16.xpose.msra.mxu0 0
        %1891 = vmatpush.bf16.xpose.msra.mxu0 0
        %1892 = vmatpush.bf16.xpose.msra.mxu0 %v1884
        %1893 = vmatmul.bf16.gmra.mxu0 %v1883
        %v1894 = vpop.f32.mrf.mxu0
        %v1895 = vadd.f32 0.0, %v1894
        %v1896 = vpop.f32.mrf.mxu0
        %1897 = vdwg.mxu0
        %v1898 = vsel %vm933, %v1895, -1e+09
        %v1899 = vsel %vm1559, %v1898, -inf
        %1900 = vmax.xlane.f32.xlu0 %v1899
        %v1901 = vpop.xlane.xlu0 %1900
        %v1902 = vsub.f32 %v1898, %v1901
        %v1903 = vmul.f32 %v1902, 1.442695
        %v1904 = vpow.pop %v1903
        %v1905 = vsel %vm1559, %v1904, 0.0
        %1906 = vadd.xlane.f32.xlu0 %v1905
        %v1907 = vpop.xlane.xlu0 %1906
        %v1908 = vrcp.pop %v1907
        %v1909 = vmul.f32 %v1904, %v1908
        %v1910 = vpack.c.bf16 %v1909, %v1909
        %v1912 = vsel %vm1231, %v1910, 0
        %1914 = vmatpush.bf16.msra.mxu0 0
        %1915 = vmatpush.bf16.msra.mxu0 0
        %1916 = vmatpush.bf16.msra.mxu0 0
        %1917 = vmatpush.bf16.msra.mxu0 0
        %1918 = vmatpush.bf16.msra.mxu0 0
        %1919 = vmatpush.bf16.msra.mxu0 0
        %1920 = vmatpush.bf16.msra.mxu0 0
        %1921 = vmatpush.bf16.msra.mxu0 %v1237
        %1922 = vmatmul.bf16.gmra.mxu0 %v1912
        %v1923 = vpop.f32.mrf.mxu0
        %v1924 = vadd.f32 0.0, %v1923
        %v1925 = vpop.f32.mrf.mxu0
        %1926 = vdwg.mxu0
        %s1927 = scalar_lea.vmem %s11, 768
        %v1928 = vld [vmem:[%s1927] sm:$0xff]
        %v1929 = vld [vmem:[%s1927 + $0x8] sm:$0xff]
        %v1930 = vld [vmem:[%s1927 + $0x10] sm:$0xff]
        %v1931 = vld [vmem:[%s1927 + $0x18] sm:$0xff]
        %v1932 = vld [vmem:[%s1927 + $0x20] sm:$0xff]
        %v1933 = vld [vmem:[%s1927 + $0x28] sm:$0xff]
        %v1934 = vld [vmem:[%s1927 + $0x30] sm:$0xff]
        %v1935 = vld [vmem:[%s1927 + $0x38] sm:$0xff]
        %v1936 = vld [vmem:[%s1927 + $0x40] sm:$0xff]
        %v1937 = vld [vmem:[%s1927 + $0x48] sm:$0xff]
        %v1938 = vld [vmem:[%s1927 + $0x50] sm:$0xff]
        %v1939 = vld [vmem:[%s1927 + $0x58] sm:$0xff]
        %v1940 = vld [vmem:[%s1927 + $0x60] sm:$0xff]
        %v1941 = vld [vmem:[%s1927 + $0x68] sm:$0xff]
        %v1942 = vld [vmem:[%s1927 + $0x70] sm:$0xff]
        %v1943 = vld [vmem:[%s1927 + $0x78] sm:$0xff]
        %v1944 = vld [vmem:[%s1927 + $0x80] sm:$0xff]
        %v1945 = vld [vmem:[%s1927 + $0x88] sm:$0xff]
        %v1946 = vld [vmem:[%s1927 + $0x90] sm:$0xff]
        %v1947 = vld [vmem:[%s1927 + $0x98] sm:$0xff]
        %v1948 = vld [vmem:[%s1927 + $0xa0] sm:$0xff]
        %v1949 = vld [vmem:[%s1927 + $0xa8] sm:$0xff]
        %v1950 = vld [vmem:[%s1927 + $0xb0] sm:$0xff]
        %v1951 = vld [vmem:[%s1927 + $0xb8] sm:$0xff]
        %v1952 = vld [vmem:[%s1927 + $0xc0] sm:$0xff]
        %v1953 = vld [vmem:[%s1927 + $0xc8] sm:$0xff]
        %v1954 = vld [vmem:[%s1927 + $0xd0] sm:$0xff]
        %v1955 = vld [vmem:[%s1927 + $0xd8] sm:$0xff]
        %v1956 = vld [vmem:[%s1927 + $0xe0] sm:$0xff]
        %v1957 = vld [vmem:[%s1927 + $0xe8] sm:$0xff]
        %v1958 = vld [vmem:[%s1927 + $0xf0] sm:$0xff]
        %v1959 = vld [vmem:[%s1927 + $0xf8] sm:$0xff]
        %v1960 = vpack.c.bf16 %v1924, %v1924
        %v1961 = vpack.c.bf16 %v1929, %v1928
        %v1962 = vpack.c.bf16 %v1931, %v1930
        %v1963 = vpack.c.bf16 %v1933, %v1932
        %v1964 = vpack.c.bf16 %v1935, %v1934
        %v1965 = vpack.c.bf16 %v1937, %v1936
        %v1966 = vpack.c.bf16 %v1939, %v1938
        %v1967 = vpack.c.bf16 %v1941, %v1940
        %v1968 = vpack.c.bf16 %v1943, %v1942
        %v1969 = vpack.c.bf16 %v1945, %v1944
        %v1970 = vpack.c.bf16 %v1947, %v1946
        %v1971 = vpack.c.bf16 %v1949, %v1948
        %v1972 = vpack.c.bf16 %v1951, %v1950
        %v1973 = vpack.c.bf16 %v1953, %v1952
        %v1974 = vpack.c.bf16 %v1955, %v1954
        %v1975 = vpack.c.bf16 %v1957, %v1956
        %v1976 = vpack.c.bf16 %v1959, %v1958
        %1977 = vmatpush.bf16.msra.mxu0 %v1968
        %1978 = vmatpush.bf16.msra.mxu0 %v1967
        %1979 = vmatpush.bf16.msra.mxu0 %v1966
        %1980 = vmatpush.bf16.msra.mxu0 %v1965
        %1981 = vmatpush.bf16.msra.mxu0 %v1964
        %1982 = vmatpush.bf16.msra.mxu0 %v1963
        %1983 = vmatpush.bf16.msra.mxu0 %v1962
        %1984 = vmatpush.bf16.msra.mxu0 %v1961
        %1985 = vmatmul.bf16.gmra.mxu0 %v1960
        %v1986 = vpop.f32.mrf.mxu0
        %v1987 = vadd.f32 0.0, %v1986
        %v1988 = vpop.f32.mrf.mxu0
        %1989 = vdwg.mxu0
        %1990 = vmatpush.bf16.msra.mxu0 %v1976
        %1991 = vmatpush.bf16.msra.mxu0 %v1975
        %1992 = vmatpush.bf16.msra.mxu0 %v1974
        %1993 = vmatpush.bf16.msra.mxu0 %v1973
        %1994 = vmatpush.bf16.msra.mxu0 %v1972
        %1995 = vmatpush.bf16.msra.mxu0 %v1971
        %1996 = vmatpush.bf16.msra.mxu0 %v1970
        %1997 = vmatpush.bf16.msra.mxu0 %v1969
        %1998 = vmatmul.bf16.gmra.mxu0 %v1883
        %v1999 = vpop.f32.mrf.mxu0
        %v2000 = vadd.f32 %v1987, %v1999
        %v2001 = vpop.f32.mrf.mxu0
        %2002 = vdwg.mxu0
        %v2003 = vtanh.pop %v2000
        %s2004 = scalar_lea.vmem %s12, 384
        %v2005 = vld [vmem:[%s2004] sm:$0xff]
        %v2006 = vld [vmem:[%s2004 + $0x8] sm:$0xff]
        %v2007 = vld [vmem:[%s2004 + $0x10] sm:$0xff]
        %v2008 = vld [vmem:[%s2004 + $0x18] sm:$0xff]
        %v2009 = vld [vmem:[%s2004 + $0x20] sm:$0xff]
        %v2010 = vld [vmem:[%s2004 + $0x28] sm:$0xff]
        %v2011 = vld [vmem:[%s2004 + $0x30] sm:$0xff]
        %v2012 = vld [vmem:[%s2004 + $0x38] sm:$0xff]
        %v2013 = vld [vmem:[%s2004 + $0x40] sm:$0xff]
        %v2014 = vld [vmem:[%s2004 + $0x48] sm:$0xff]
        %v2015 = vld [vmem:[%s2004 + $0x50] sm:$0xff]
        %v2016 = vld [vmem:[%s2004 + $0x58] sm:$0xff]
        %v2017 = vld [vmem:[%s2004 + $0x60] sm:$0xff]
        %v2018 = vld [vmem:[%s2004 + $0x68] sm:$0xff]
        %v2019 = vld [vmem:[%s2004 + $0x70] sm:$0xff]
        %v2020 = vld [vmem:[%s2004 + $0x78] sm:$0xff]
        %v2021 = vpack.c.bf16 %v2003, %v2003
        %v2022 = vpack.c.bf16 %v2006, %v2005
        %v2023 = vpack.c.bf16 %v2008, %v2007
        %v2024 = vpack.c.bf16 %v2010, %v2009
        %v2025 = vpack.c.bf16 %v2012, %v2011
        %v2026 = vpack.c.bf16 %v2014, %v2013
        %v2027 = vpack.c.bf16 %v2016, %v2015
        %v2028 = vpack.c.bf16 %v2018, %v2017
        %v2029 = vpack.c.bf16 %v2020, %v2019
        %s2030 = scalar_lea.vmem %s13, 3
        %v2031 = vld [vmem:[%s2030] sm:$0x1]
        %2032 = vmatpush.bf16.msra.mxu0 %v2029
        %2033 = vmatpush.bf16.msra.mxu0 %v2028
        %2034 = vmatpush.bf16.msra.mxu0 %v2027
        %2035 = vmatpush.bf16.msra.mxu0 %v2026
        %2036 = vmatpush.bf16.msra.mxu0 %v2025
        %2037 = vmatpush.bf16.msra.mxu0 %v2024
        %2038 = vmatpush.bf16.msra.mxu0 %v2023
        %2039 = vmatpush.bf16.msra.mxu0 %v2022
        %2040 = vmatmul.bf16.gmra.mxu0 %v2021
        %v2041 = vpop.f32.mrf.mxu0
        %v2042 = vadd.f32 %v2031, %v2041
        %v2043 = vpop.f32.mrf.mxu0
        %2044 = vdwg.mxu0
        %vm2045 = vcmask 40960
        %2046 = vst.msk [vmem:[%s711] sm:$0x1] %vm2045, %v2042
        %v2047 = vpack.c.bf16 %v1882, %v1882
        %v2048 = vpack.c.bf16 %v1047, %v1047
        %2049 = vmatpush.bf16.xpose.msra.mxu0 0
        %2050 = vmatpush.bf16.xpose.msra.mxu0 0
        %2051 = vmatpush.bf16.xpose.msra.mxu0 0
        %2052 = vmatpush.bf16.xpose.msra.mxu0 0
        %2053 = vmatpush.bf16.xpose.msra.mxu0 0
        %2054 = vmatpush.bf16.xpose.msra.mxu0 0
        %2055 = vmatpush.bf16.xpose.msra.mxu0 0
        %2056 = vmatpush.bf16.xpose.msra.mxu0 %v2048
        %2057 = vmatmul.bf16.gmra.mxu0 %v2047
        %v2058 = vpop.f32.mrf.mxu0
        %v2059 = vadd.f32 0.0, %v2058
        %v2060 = vpop.f32.mrf.mxu0
        %2061 = vdwg.mxu0
        %v2062 = vsel %vm1216, %v2059, -1e+09
        %vm2063 = vcmask 60416
        %v2064 = vsel %vm2063, %v2062, -inf
        %2065 = vmax.xlane.f32.xlu0 %v2064
        %v2066 = vpop.xlane.xlu0 %2065
        %v2067 = vsub.f32 %v2062, %v2066
        %v2068 = vmul.f32 %v2067, 1.442695
        %v2069 = vpow.pop %v2068
        %v2070 = vsel %vm2063, %v2069, 0.0
        %2071 = vadd.xlane.f32.xlu0 %v2070
        %v2072 = vpop.xlane.xlu0 %2071
        %v2073 = vrcp.pop %v2072
        %v2074 = vmul.f32 %v2069, %v2073
        %v2075 = vpack.c.bf16 %v2074, %v2074
        %v2077 = vsel %vm1231, %v2075, 0
        %2079 = vmatpush.bf16.msra.mxu0 0
        %2080 = vmatpush.bf16.msra.mxu0 0
        %2081 = vmatpush.bf16.msra.mxu0 0
        %2082 = vmatpush.bf16.msra.mxu0 0
        %2083 = vmatpush.bf16.msra.mxu0 0
        %2084 = vmatpush.bf16.msra.mxu0 0
        %2085 = vmatpush.bf16.msra.mxu0 0
        %2086 = vmatpush.bf16.msra.mxu0 %v1237
        %2087 = vmatmul.bf16.gmra.mxu0 %v2077
        %v2088 = vpop.f32.mrf.mxu0
        %v2089 = vadd.f32 0.0, %v2088
        %v2090 = vpop.f32.mrf.mxu0
        %2091 = vdwg.mxu0
        %s2092 = scalar_lea.vmem %s11, 1024
        %v2093 = vld [vmem:[%s2092] sm:$0xff]
        %v2094 = vld [vmem:[%s2092 + $0x8] sm:$0xff]
        %v2095 = vld [vmem:[%s2092 + $0x10] sm:$0xff]
        %v2096 = vld [vmem:[%s2092 + $0x18] sm:$0xff]
        %v2097 = vld [vmem:[%s2092 + $0x20] sm:$0xff]
        %v2098 = vld [vmem:[%s2092 + $0x28] sm:$0xff]
        %v2099 = vld [vmem:[%s2092 + $0x30] sm:$0xff]
        %v2100 = vld [vmem:[%s2092 + $0x38] sm:$0xff]
        %v2101 = vld [vmem:[%s2092 + $0x40] sm:$0xff]
        %v2102 = vld [vmem:[%s2092 + $0x48] sm:$0xff]
        %v2103 = vld [vmem:[%s2092 + $0x50] sm:$0xff]
        %v2104 = vld [vmem:[%s2092 + $0x58] sm:$0xff]
        %v2105 = vld [vmem:[%s2092 + $0x60] sm:$0xff]
        %v2106 = vld [vmem:[%s2092 + $0x68] sm:$0xff]
        %v2107 = vld [vmem:[%s2092 + $0x70] sm:$0xff]
        %v2108 = vld [vmem:[%s2092 + $0x78] sm:$0xff]
        %v2109 = vld [vmem:[%s2092 + $0x80] sm:$0xff]
        %v2110 = vld [vmem:[%s2092 + $0x88] sm:$0xff]
        %v2111 = vld [vmem:[%s2092 + $0x90] sm:$0xff]
        %v2112 = vld [vmem:[%s2092 + $0x98] sm:$0xff]
        %v2113 = vld [vmem:[%s2092 + $0xa0] sm:$0xff]
        %v2114 = vld [vmem:[%s2092 + $0xa8] sm:$0xff]
        %v2115 = vld [vmem:[%s2092 + $0xb0] sm:$0xff]
        %v2116 = vld [vmem:[%s2092 + $0xb8] sm:$0xff]
        %v2117 = vld [vmem:[%s2092 + $0xc0] sm:$0xff]
        %v2118 = vld [vmem:[%s2092 + $0xc8] sm:$0xff]
        %v2119 = vld [vmem:[%s2092 + $0xd0] sm:$0xff]
        %v2120 = vld [vmem:[%s2092 + $0xd8] sm:$0xff]
        %v2121 = vld [vmem:[%s2092 + $0xe0] sm:$0xff]
        %v2122 = vld [vmem:[%s2092 + $0xe8] sm:$0xff]
        %v2123 = vld [vmem:[%s2092 + $0xf0] sm:$0xff]
        %v2124 = vld [vmem:[%s2092 + $0xf8] sm:$0xff]
        %v2125 = vpack.c.bf16 %v2089, %v2089
        %v2126 = vpack.c.bf16 %v2094, %v2093
        %v2127 = vpack.c.bf16 %v2096, %v2095
        %v2128 = vpack.c.bf16 %v2098, %v2097
        %v2129 = vpack.c.bf16 %v2100, %v2099
        %v2130 = vpack.c.bf16 %v2102, %v2101
        %v2131 = vpack.c.bf16 %v2104, %v2103
        %v2132 = vpack.c.bf16 %v2106, %v2105
        %v2133 = vpack.c.bf16 %v2108, %v2107
        %v2134 = vpack.c.bf16 %v2110, %v2109
        %v2135 = vpack.c.bf16 %v2112, %v2111
        %v2136 = vpack.c.bf16 %v2114, %v2113
        %v2137 = vpack.c.bf16 %v2116, %v2115
        %v2138 = vpack.c.bf16 %v2118, %v2117
        %v2139 = vpack.c.bf16 %v2120, %v2119
        %v2140 = vpack.c.bf16 %v2122, %v2121
        %v2141 = vpack.c.bf16 %v2124, %v2123
        %2142 = vmatpush.bf16.msra.mxu0 %v2133
        %2143 = vmatpush.bf16.msra.mxu0 %v2132
        %2144 = vmatpush.bf16.msra.mxu0 %v2131
        %2145 = vmatpush.bf16.msra.mxu0 %v2130
        %2146 = vmatpush.bf16.msra.mxu0 %v2129
        %2147 = vmatpush.bf16.msra.mxu0 %v2128
        %2148 = vmatpush.bf16.msra.mxu0 %v2127
        %2149 = vmatpush.bf16.msra.mxu0 %v2126
        %2150 = vmatmul.bf16.gmra.mxu0 %v2125
        %v2151 = vpop.f32.mrf.mxu0
        %v2152 = vadd.f32 0.0, %v2151
        %v2153 = vpop.f32.mrf.mxu0
        %2154 = vdwg.mxu0
        %2155 = vmatpush.bf16.msra.mxu0 %v2141
        %2156 = vmatpush.bf16.msra.mxu0 %v2140
        %2157 = vmatpush.bf16.msra.mxu0 %v2139
        %2158 = vmatpush.bf16.msra.mxu0 %v2138
        %2159 = vmatpush.bf16.msra.mxu0 %v2137
        %2160 = vmatpush.bf16.msra.mxu0 %v2136
        %2161 = vmatpush.bf16.msra.mxu0 %v2135
        %2162 = vmatpush.bf16.msra.mxu0 %v2134
        %2163 = vmatmul.bf16.gmra.mxu0 %v2047
        %v2164 = vpop.f32.mrf.mxu0
        %v2165 = vadd.f32 %v2152, %v2164
        %v2166 = vpop.f32.mrf.mxu0
        %2167 = vdwg.mxu0
        %v2168 = vtanh.pop %v2165
        %s2169 = scalar_lea.vmem %s12, 512
        %v2170 = vld [vmem:[%s2169] sm:$0xff]
        %v2171 = vld [vmem:[%s2169 + $0x8] sm:$0xff]
        %v2172 = vld [vmem:[%s2169 + $0x10] sm:$0xff]
        %v2173 = vld [vmem:[%s2169 + $0x18] sm:$0xff]
        %v2174 = vld [vmem:[%s2169 + $0x20] sm:$0xff]
        %v2175 = vld [vmem:[%s2169 + $0x28] sm:$0xff]
        %v2176 = vld [vmem:[%s2169 + $0x30] sm:$0xff]
        %v2177 = vld [vmem:[%s2169 + $0x38] sm:$0xff]
        %v2178 = vld [vmem:[%s2169 + $0x40] sm:$0xff]
        %v2179 = vld [vmem:[%s2169 + $0x48] sm:$0xff]
        %v2180 = vld [vmem:[%s2169 + $0x50] sm:$0xff]
        %v2181 = vld [vmem:[%s2169 + $0x58] sm:$0xff]
        %v2182 = vld [vmem:[%s2169 + $0x60] sm:$0xff]
        %v2183 = vld [vmem:[%s2169 + $0x68] sm:$0xff]
        %v2184 = vld [vmem:[%s2169 + $0x70] sm:$0xff]
        %v2185 = vld [vmem:[%s2169 + $0x78] sm:$0xff]
        %v2186 = vpack.c.bf16 %v2168, %v2168
        %v2187 = vpack.c.bf16 %v2171, %v2170
        %v2188 = vpack.c.bf16 %v2173, %v2172
        %v2189 = vpack.c.bf16 %v2175, %v2174
        %v2190 = vpack.c.bf16 %v2177, %v2176
        %v2191 = vpack.c.bf16 %v2179, %v2178
        %v2192 = vpack.c.bf16 %v2181, %v2180
        %v2193 = vpack.c.bf16 %v2183, %v2182
        %v2194 = vpack.c.bf16 %v2185, %v2184
        %s2195 = scalar_lea.vmem %s13, 4
        %v2196 = vld [vmem:[%s2195] sm:$0x1]
        %v2198 = vperm.slane %v2196, 0
        %2200 = vmatpush.bf16.msra.mxu0 %v2194
        %2201 = vmatpush.bf16.msra.mxu0 %v2193
        %2202 = vmatpush.bf16.msra.mxu0 %v2192
        %2203 = vmatpush.bf16.msra.mxu0 %v2191
        %2204 = vmatpush.bf16.msra.mxu0 %v2190
        %2205 = vmatpush.bf16.msra.mxu0 %v2189
        %2206 = vmatpush.bf16.msra.mxu0 %v2188
        %2207 = vmatpush.bf16.msra.mxu0 %v2187
        %2208 = vmatmul.bf16.gmra.mxu0 %v2186
        %v2209 = vpop.f32.mrf.mxu0
        %v2210 = vadd.f32 %v2198, %v2209
        %v2211 = vpop.f32.mrf.mxu0
        %2212 = vdwg.mxu0
        %vm2213 = vcmask 27648
        %2214 = vst.msk [vmem:[%s730] sm:$0xf] %vm2213, %v2210
        %vm2215 = vcmp.lt.s32.totalorder %v931, 4
        %v2216 = vsel %vm2215, %v2210, -1e+30
        %v2217 = vsel %vm2063, %v2216, -inf
        %2218 = vmax.xlane.f32.xlu0 %v2217
        %v2219 = vpop.xlane.xlu0 %2218
        %vm2220 = vcmp.ge.f32.partialorder %v2210, %v2219
        %vm2221 = vmand %vm2215, %vm2220
        %v2222 = vsel %vm2221, %v931, 8
        %v2223 = vsel %vm2063, %v2222, 2147483647
        %v2224 = vand.u32 %v2223, 65535
        %v2225 = vshra.s32 %v2223, 16
        %v2226 = vcvt.s32.f32 %v2224
        %v2227 = vcvt.s32.f32 %v2225
        %2228 = vmin.xlane.f32.xlu0 %v2227
        %v2229 = vpop.xlane.xlu0 %2228
        %vm2230 = vcmp.eq.f32.partialorder %v2227, %v2229
        %v2231 = vsel %vm2230, %v2226, inf
        %2232 = vmin.xlane.f32.xlu0 %v2231
        %v2233 = vpop.xlane.xlu0 %2232
        %v2234 = vcvt.f32.s32 %v2233
        %v2235 = vcvt.f32.s32 %v2229
        %v2236 = vshll.u32 %v2235, 16
        %v2237 = vadd.s32 %v2236, %v2234
        %vm2238 = vcmp.eq.s32.totalorder %v931, %v2237
        %v2239 = vld [vmem:[%s14] sm:$0xff]
        %v2240 = vsel %vm2238, 1, 0
        %v2241 = vcvt.s32.f32 %v2240
        %v2242 = vpack.c.bf16 %v2241, %v2241
        %v2243 = vpack.c.bf16 %v2239, %v2239
        %v2245 = vsel %vm1231, %v2242, 0
        %v2248 = vsel %vm1235, %v2243, 0
        %2250 = vmatpush.bf16.msra.mxu0 0
        %2251 = vmatpush.bf16.msra.mxu0 0
        %2252 = vmatpush.bf16.msra.mxu0 0
        %2253 = vmatpush.bf16.msra.mxu0 0
        %2254 = vmatpush.bf16.msra.mxu0 0
        %2255 = vmatpush.bf16.msra.mxu0 0
        %2256 = vmatpush.bf16.msra.mxu0 0
        %2257 = vmatpush.bf16.msra.mxu0 %v2248
        %2258 = vmatmul.bf16.gmra.mxu0 %v2245
        %v2259 = vpop.f32.mrf.mxu0
        %v2260 = vadd.f32 0.0, %v2259
        %v2261 = vpop.f32.mrf.mxu0
        %2262 = vdwg.mxu0
        %v2263 = vpack.c.bf16 %v1184, %v1184
        %2264 = vmatpush.bf16.xpose.msra.mxu0 0
        %2265 = vmatpush.bf16.xpose.msra.mxu0 0
        %2266 = vmatpush.bf16.xpose.msra.mxu0 0
        %2267 = vmatpush.bf16.xpose.msra.mxu0 0
        %2268 = vmatpush.bf16.xpose.msra.mxu0 0
        %2269 = vmatpush.bf16.xpose.msra.mxu0 0
        %2270 = vmatpush.bf16.xpose.msra.mxu0 0
        %2271 = vmatpush.bf16.xpose.msra.mxu0 %v2263
        %2272 = vmatmul.bf16.gmra.mxu0 %v2047
        %v2273 = vpop.f32.mrf.mxu0
        %v2274 = vadd.f32 0.0, %v2273
        %v2275 = vpop.f32.mrf.mxu0
        %2276 = vdwg.mxu0
        %v2277 = vsel %vm1216, %v2274, -1e+09
        %v2278 = vsel %vm2063, %v2277, -inf
        %2279 = vmax.xlane.f32.xlu0 %v2278
        %v2280 = vpop.xlane.xlu0 %2279
        %v2281 = vsub.f32 %v2277, %v2280
        %v2282 = vmul.f32 %v2281, 1.442695
        %v2283 = vpow.pop %v2282
        %v2284 = vsel %vm2063, %v2283, 0.0
        %2285 = vadd.xlane.f32.xlu0 %v2284
        %v2286 = vpop.xlane.xlu0 %2285
        %v2287 = vrcp.pop %v2286
        %v2288 = vmul.f32 %v2283, %v2287
        %v2289 = vpack.c.bf16 %v2288, %v2288
        %v2291 = vsel %vm1231, %v2289, 0
        %v2294 = vsel %vm1235, %v1157, 0
        %2296 = vmatpush.bf16.msra.mxu0 0
        %2297 = vmatpush.bf16.msra.mxu0 0
        %2298 = vmatpush.bf16.msra.mxu0 0
        %2299 = vmatpush.bf16.msra.mxu0 0
        %2300 = vmatpush.bf16.msra.mxu0 0
        %2301 = vmatpush.bf16.msra.mxu0 0
        %2302 = vmatpush.bf16.msra.mxu0 0
        %2303 = vmatpush.bf16.msra.mxu0 %v2294
        %2304 = vmatmul.bf16.gmra.mxu0 %v2291
        %v2305 = vpop.f32.mrf.mxu0
        %v2306 = vadd.f32 0.0, %v2305
        %v2307 = vpop.f32.mrf.mxu0
        %2308 = vdwg.mxu0
        %v2309 = vld [vmem:[%s16] sm:$0xff]
        %v2310 = vld [vmem:[%s16 + $0x8] sm:$0xff]
        %v2311 = vld [vmem:[%s16 + $0x10] sm:$0xff]
        %v2312 = vld [vmem:[%s16 + $0x18] sm:$0xff]
        %v2313 = vld [vmem:[%s16 + $0x20] sm:$0xff]
        %v2314 = vld [vmem:[%s16 + $0x28] sm:$0xff]
        %v2315 = vld [vmem:[%s16 + $0x30] sm:$0xff]
        %v2316 = vld [vmem:[%s16 + $0x38] sm:$0xff]
        %v2317 = vld [vmem:[%s16 + $0x40] sm:$0xff]
        %v2318 = vld [vmem:[%s16 + $0x48] sm:$0xff]
        %v2319 = vld [vmem:[%s16 + $0x50] sm:$0xff]
        %v2320 = vld [vmem:[%s16 + $0x58] sm:$0xff]
        %v2321 = vld [vmem:[%s16 + $0x60] sm:$0xff]
        %v2322 = vld [vmem:[%s16 + $0x68] sm:$0xff]
        %v2323 = vld [vmem:[%s16 + $0x70] sm:$0xff]
        %v2324 = vld [vmem:[%s16 + $0x78] sm:$0xff]
        %v2325 = vld [vmem:[%s16 + $0x80] sm:$0xff]
        %v2326 = vld [vmem:[%s16 + $0x88] sm:$0xff]
        %v2327 = vld [vmem:[%s16 + $0x90] sm:$0xff]
        %v2328 = vld [vmem:[%s16 + $0x98] sm:$0xff]
        %v2329 = vld [vmem:[%s16 + $0xa0] sm:$0xff]
        %v2330 = vld [vmem:[%s16 + $0xa8] sm:$0xff]
        %v2331 = vld [vmem:[%s16 + $0xb0] sm:$0xff]
        %v2332 = vld [vmem:[%s16 + $0xb8] sm:$0xff]
        %v2333 = vld [vmem:[%s16 + $0xc0] sm:$0xff]
        %v2334 = vld [vmem:[%s16 + $0xc8] sm:$0xff]
        %v2335 = vld [vmem:[%s16 + $0xd0] sm:$0xff]
        %v2336 = vld [vmem:[%s16 + $0xd8] sm:$0xff]
        %v2337 = vld [vmem:[%s16 + $0xe0] sm:$0xff]
        %v2338 = vld [vmem:[%s16 + $0xe8] sm:$0xff]
        %v2339 = vld [vmem:[%s16 + $0xf0] sm:$0xff]
        %v2340 = vld [vmem:[%s16 + $0xf8] sm:$0xff]
        %v2341 = vpack.c.bf16 %v2306, %v2306
        %v2342 = vpack.c.bf16 %v2260, %v2260
        %v2343 = vpack.c.bf16 %v2310, %v2309
        %v2344 = vpack.c.bf16 %v2312, %v2311
        %v2345 = vpack.c.bf16 %v2314, %v2313
        %v2346 = vpack.c.bf16 %v2316, %v2315
        %v2347 = vpack.c.bf16 %v2318, %v2317
        %v2348 = vpack.c.bf16 %v2320, %v2319
        %v2349 = vpack.c.bf16 %v2322, %v2321
        %v2350 = vpack.c.bf16 %v2324, %v2323
        %v2351 = vpack.c.bf16 %v2326, %v2325
        %v2352 = vpack.c.bf16 %v2328, %v2327
        %v2353 = vpack.c.bf16 %v2330, %v2329
        %v2354 = vpack.c.bf16 %v2332, %v2331
        %v2355 = vpack.c.bf16 %v2334, %v2333
        %v2356 = vpack.c.bf16 %v2336, %v2335
        %v2357 = vpack.c.bf16 %v2338, %v2337
        %v2358 = vpack.c.bf16 %v2340, %v2339
        %2359 = vmatpush.bf16.msra.mxu0 %v2350
        %2360 = vmatpush.bf16.msra.mxu0 %v2349
        %2361 = vmatpush.bf16.msra.mxu0 %v2348
        %2362 = vmatpush.bf16.msra.mxu0 %v2347
        %2363 = vmatpush.bf16.msra.mxu0 %v2346
        %2364 = vmatpush.bf16.msra.mxu0 %v2345
        %2365 = vmatpush.bf16.msra.mxu0 %v2344
        %2366 = vmatpush.bf16.msra.mxu0 %v2343
        %2367 = vmatmul.bf16.gmra.mxu0 %v2341
        %v2368 = vpop.f32.mrf.mxu0
        %v2369 = vadd.f32 0.0, %v2368
        %v2370 = vpop.f32.mrf.mxu0
        %2371 = vdwg.mxu0
        %2372 = vmatpush.bf16.msra.mxu0 %v2358
        %2373 = vmatpush.bf16.msra.mxu0 %v2357
        %2374 = vmatpush.bf16.msra.mxu0 %v2356
        %2375 = vmatpush.bf16.msra.mxu0 %v2355
        %2376 = vmatpush.bf16.msra.mxu0 %v2354
        %2377 = vmatpush.bf16.msra.mxu0 %v2353
        %2378 = vmatpush.bf16.msra.mxu0 %v2352
        %2379 = vmatpush.bf16.msra.mxu0 %v2351
        %2380 = vmatmul.bf16.gmra.mxu0 %v2342
        %v2381 = vpop.f32.mrf.mxu0
        %v2382 = vadd.f32 %v2369, %v2381
        %v2383 = vpop.f32.mrf.mxu0
        %2384 = vdwg.mxu0
        %v2385 = vperm.slane %v2382, 0
        %v2386 = vadd.f32 %v1197, %v2385
        %v2387 = vtanh.pop %v2386
        %v2388 = vperm.slane %v2382, 1
        %v2389 = vadd.f32 %v1197, %v2388
        %v2390 = vtanh.pop %v2389
        %v2391 = vperm.slane %v2382, 2
        %v2392 = vadd.f32 %v1197, %v2391
        %v2393 = vtanh.pop %v2392
        %v2394 = vperm.slane %v2382, 3
        %v2395 = vadd.f32 %v1197, %v2394
        %v2396 = vtanh.pop %v2395
        %v2397 = vld [vmem:[%s17] sm:$0xff]
        %v2398 = vld [vmem:[%s17 + $0x8] sm:$0xff]
        %v2399 = vld [vmem:[%s17 + $0x10] sm:$0xff]
        %v2400 = vld [vmem:[%s17 + $0x18] sm:$0xff]
        %v2401 = vld [vmem:[%s17 + $0x20] sm:$0xff]
        %v2402 = vld [vmem:[%s17 + $0x28] sm:$0xff]
        %v2403 = vld [vmem:[%s17 + $0x30] sm:$0xff]
        %v2404 = vld [vmem:[%s17 + $0x38] sm:$0xff]
        %v2405 = vld [vmem:[%s17 + $0x40] sm:$0xff]
        %v2406 = vld [vmem:[%s17 + $0x48] sm:$0xff]
        %v2407 = vld [vmem:[%s17 + $0x50] sm:$0xff]
        %v2408 = vld [vmem:[%s17 + $0x58] sm:$0xff]
        %v2409 = vld [vmem:[%s17 + $0x60] sm:$0xff]
        %v2410 = vld [vmem:[%s17 + $0x68] sm:$0xff]
        %v2411 = vld [vmem:[%s17 + $0x70] sm:$0xff]
        %v2412 = vld [vmem:[%s17 + $0x78] sm:$0xff]
        %v2413 = vpack.c.bf16 %v2390, %v2387
        %v2414 = vpack.c.bf16 %v2396, %v2393
        %v2415 = vpack.c.bf16 %v2398, %v2397
        %v2416 = vpack.c.bf16 %v2400, %v2399
        %v2417 = vpack.c.bf16 %v2402, %v2401
        %v2418 = vpack.c.bf16 %v2404, %v2403
        %v2419 = vpack.c.bf16 %v2406, %v2405
        %v2420 = vpack.c.bf16 %v2408, %v2407
        %v2421 = vpack.c.bf16 %v2410, %v2409
        %v2422 = vpack.c.bf16 %v2412, %v2411
        %v2423 = vld [vmem:[%s18] sm:$0x1]
        %v2425 = vperm.slane %v2423, 0
        %2427 = vmatpush.bf16.msra.mxu0 %v2422
        %2428 = vmatpush.bf16.msra.mxu0 %v2421
        %2429 = vmatpush.bf16.msra.mxu0 %v2420
        %2430 = vmatpush.bf16.msra.mxu0 %v2419
        %2431 = vmatpush.bf16.msra.mxu0 %v2418
        %2432 = vmatpush.bf16.msra.mxu0 %v2417
        %2433 = vmatpush.bf16.msra.mxu0 %v2416
        %2434 = vmatpush.bf16.msra.mxu0 %v2415
        %2435 = vmatmul.bf16.gmra.mxu0 %v2413
        %v2436 = vpop.f32.mrf.mxu0
        %v2437 = vadd.f32 %v2425, %v2436
        %v2438 = vpop.f32.mrf.mxu0
        %v2439 = vadd.f32 %v2425, %v2438
        %2440 = vmatmul.bf16.gmra.mxu0 %v2414
        %v2441 = vpop.f32.mrf.mxu0
        %v2442 = vadd.f32 %v2425, %v2441
        %v2443 = vpop.f32.mrf.mxu0
        %v2444 = vadd.f32 %v2425, %v2443
        %2445 = vdwg.mxu0
        %vm2446 = vcmask 15360
        %2447 = vst.msk [vmem:[%s758] sm:$0xff] %vm2446, %v2437
        %2448 = vst.msk [vmem:[%s758 + $0x8] sm:$0xff] %vm2446, %v2439
        %2449 = vst.msk [vmem:[%s758 + $0x10] sm:$0xff] %vm2446, %v2442
        %2450 = vst.msk [vmem:[%s758 + $0x18] sm:$0xff] %vm2446, %v2444
        %p2451 = scmp.lt.s32.totalorder %s55, 1
        %s2452 = scalar_select %p2451, %s55, 1
        %s2453 = smul.addr %s2452, 8
        %s2454 = scalar_lea.vmem %s19, %s2453
        %s2455 = sand.u32 %s456, 1
        %s2456 = scalar_lea.sflag [#allocation6], %s2455
        %s2457 = sand.u32 %s456, 1
        %s2458 = scalar_lea.vmem [#allocation5], %s2457
        %s2459 = sand.u32 %s55, 1
        %s2460 = scalar_lea.sflag [#allocation8], %s2459
        %s2461 = sand.u32 %s482, 1
        %s2462 = scalar_lea.vmem [#allocation7], %s2461
        %p2463 = scmp.lt.s32.totalorder %s55, 1
        %s2464 = scalar_select %p2463, %s55, 1
        %s2465 = smul.addr %s2464, 8
        %s2466 = scalar_lea.vmem %s22, %s2465
        %s2467 = sand.u32 %s55, 1
        %s2468 = scalar_lea.sflag [#allocation8], %s2467
        %s2469 = sand.u32 %s534, 1
        %s2470 = smul.addr %s2469, 4
        %s2471 = scalar_lea.vmem [#allocation9], %s2470
        %p2472 = scmp.lt.s32.totalorder %s55, 1
        %s2473 = scalar_select %p2472, %s55, 1
        %s2474 = smul.addr %s2473, 4
        %s2475 = smul.addr %s2474, 8
        %s2476 = scalar_lea.vmem %s24, %s2475
        // Predicated region
        $region89: #{seq2sql_forward.1} parent=87 // pred_check
          %p2477 = pneg %p440
        $region90: #{seq2sql_forward.1} parent=87 // pred_check_branch
          %2479 = sbr.rel (%p2477) target = $region92
        $region91: #{seq2sql_forward.1} parent=87 // pred_region
          _
        $region92: #{seq2sql_forward.1} parent=87 // pred_fallthru
          _
        // Predicated region
        $region93: #{seq2sql_forward.1} parent=87 // pred_check
          %p2480 = pneg %p466
        $region94: #{seq2sql_forward.1} parent=87 // pred_check_branch
          %2482 = sbr.rel (%p2480) target = $region96
        $region95: #{seq2sql_forward.1} parent=87 // pred_region
          %2484 = vsyncadd %s2456, 0
          %s2485 = scalar_lea.hbm %s20, %s55
          %s2487 = sshll.u32 %s2458, 4
          %s2488 = int_to_ptr.vmem [resolvable:$true] %s2487
          %s2489 = sshll.u32 %s2485, 4
          %s2490 = int_to_ptr.hbm [resolvable:$true] %s2489
          %2492 = dma.vmem_to_hbm [thread:$0]  %s2488, 16, %s2490, %s2456
        $region96: #{seq2sql_forward.1} parent=87 // pred_fallthru
          _
        // Predicated region
        $region97: #{seq2sql_forward.1} parent=87 // pred_check
          %p2493 = pneg %p492
        $region98: #{seq2sql_forward.1} parent=87 // pred_check_branch
          %2495 = sbr.rel (%p2493) target = $region100
        $region99: #{seq2sql_forward.1} parent=87 // pred_region
          %2497 = vsyncadd %s2460, 0
          %s2498 = scalar_lea.hbm %s21, %s55
          %s2500 = sshll.u32 %s2462, 4
          %s2501 = int_to_ptr.vmem [resolvable:$true] %s2500
          %s2502 = sshll.u32 %s2498, 4
          %s2503 = int_to_ptr.hbm [resolvable:$true] %s2502
          %2505 = dma.vmem_to_hbm [thread:$0]  %s2501, 16, %s2503, %s2460
        $region100: #{seq2sql_forward.1} parent=87 // pred_fallthru
          _
        // Predicated region
        $region101: #{seq2sql_forward.1} parent=87 // pred_check
          %p2506 = pneg %p518
        $region102: #{seq2sql_forward.1} parent=87 // pred_check_branch
          %2508 = sbr.rel (%p2506) target = $region104
        $region103: #{seq2sql_forward.1} parent=87 // pred_region
          _
        $region104: #{seq2sql_forward.1} parent=87 // pred_fallthru
          _
        // Predicated region
        $region105: #{seq2sql_forward.1} parent=87 // pred_check
          %p2509 = pneg %p544
        $region106: #{seq2sql_forward.1} parent=87 // pred_check_branch
          %2511 = sbr.rel (%p2509) target = $region108
        $region107: #{seq2sql_forward.1} parent=87 // pred_region
          %2513 = vsyncadd %s2468, 0
          %s2514 = smul.addr %s55, 4
          %s2515 = scalar_lea.hbm %s23, %s2514
          %s2517 = sshll.u32 %s2471, 4
          %s2518 = int_to_ptr.vmem [resolvable:$true] %s2517
          %s2519 = sshll.u32 %s2515, 4
          %s2520 = int_to_ptr.hbm [resolvable:$true] %s2519
          %2522 = dma.vmem_to_hbm [thread:$0]  %s2518, 64, %s2520, %s2468
        $region108: #{seq2sql_forward.1} parent=87 // pred_fallthru
          _
        // Predicated region
        $region109: #{seq2sql_forward.1} parent=87 // pred_check
          %p2523 = pneg %p570
        $region110: #{seq2sql_forward.1} parent=87 // pred_check_branch
          %2525 = sbr.rel (%p2523) target = $region112
        $region111: #{seq2sql_forward.1} parent=87 // pred_region
          _
        $region112: #{seq2sql_forward.1} parent=87 // pred_fallthru
          _
      $region88: #{seq2sql_forward.1} parent=5 // pred_fallthru
        _
      %p2526 = scmp.le.s32.totalorder 2, %s50
      // Predicated region
      $region113: #{seq2sql_forward.1} parent=5 // pred_check
        %p2527 = pneg %p2526
      $region114: #{seq2sql_forward.1} parent=5 // pred_check_branch
        %2529 = sbr.rel (%p2527) target = $region116
      $region115: #{seq2sql_forward.1} parent=5 // pred_region
        %s2530 = ssub.s32 %s50, 2
        // Predicated region
        $region117: #{seq2sql_forward.1} parent=115 // pred_check
          %p2531 = pneg %p446
        $region118: #{seq2sql_forward.1} parent=115 // pred_check_branch
          %2533 = sbr.rel (%p2531) target = $region120
        $region119: #{seq2sql_forward.1} parent=115 // pred_region
          %p2534 = scmp.lt.s32.totalorder %s56, 1
          %s2535 = scalar_select %p2534, %s56, 1
          %s2536 = smul.addr %s2535, 8
          %s2537 = scalar_lea.vmem %s19, %s2536
        $region120: #{seq2sql_forward.1} parent=115 // pred_fallthru
          _
        // Predicated region
        $region121: #{seq2sql_forward.1} parent=115 // pred_check
          %p2538 = pneg %p472
        $region122: #{seq2sql_forward.1} parent=115 // pred_check_branch
          %2540 = sbr.rel (%p2538) target = $region124
        $region123: #{seq2sql_forward.1} parent=115 // pred_region
          %s2541 = sand.u32 %s457, 1
          %s2542 = scalar_lea.sflag [#allocation6], %s2541
          %s2543 = sand.u32 %s457, 1
          %s2544 = scalar_lea.vmem [#allocation5], %s2543
          %2546 = dma.done %s2542, 16
        $region124: #{seq2sql_forward.1} parent=115 // pred_fallthru
          _
        // Predicated region
        $region125: #{seq2sql_forward.1} parent=115 // pred_check
          %p2547 = pneg %p498
        $region126: #{seq2sql_forward.1} parent=115 // pred_check_branch
          %2549 = sbr.rel (%p2547) target = $region128
        $region127: #{seq2sql_forward.1} parent=115 // pred_region
          %s2550 = sand.u32 %s56, 1
          %s2551 = scalar_lea.sflag [#allocation8], %s2550
          %s2552 = sand.u32 %s483, 1
          %s2553 = scalar_lea.vmem [#allocation7], %s2552
          %2555 = dma.done %s2551, 16
        $region128: #{seq2sql_forward.1} parent=115 // pred_fallthru
          _
        // Predicated region
        $region129: #{seq2sql_forward.1} parent=115 // pred_check
          %p2556 = pneg %p524
        $region130: #{seq2sql_forward.1} parent=115 // pred_check_branch
          %2558 = sbr.rel (%p2556) target = $region132
        $region131: #{seq2sql_forward.1} parent=115 // pred_region
          %p2559 = scmp.lt.s32.totalorder %s56, 1
          %s2560 = scalar_select %p2559, %s56, 1
          %s2561 = smul.addr %s2560, 8
          %s2562 = scalar_lea.vmem %s22, %s2561
        $region132: #{seq2sql_forward.1} parent=115 // pred_fallthru
          _
        // Predicated region
        $region133: #{seq2sql_forward.1} parent=115 // pred_check
          %p2563 = pneg %p550
        $region134: #{seq2sql_forward.1} parent=115 // pred_check_branch
          %2565 = sbr.rel (%p2563) target = $region136
        $region135: #{seq2sql_forward.1} parent=115 // pred_region
          %s2566 = sand.u32 %s56, 1
          %s2567 = scalar_lea.sflag [#allocation8], %s2566
          %s2568 = sand.u32 %s535, 1
          %s2569 = smul.addr %s2568, 4
          %s2570 = scalar_lea.vmem [#allocation9], %s2569
          %2572 = dma.done %s2567, 64
        $region136: #{seq2sql_forward.1} parent=115 // pred_fallthru
          _
        // Predicated region
        $region137: #{seq2sql_forward.1} parent=115 // pred_check
          %p2573 = pneg %p576
        $region138: #{seq2sql_forward.1} parent=115 // pred_check_branch
          %2575 = sbr.rel (%p2573) target = $region140
        $region139: #{seq2sql_forward.1} parent=115 // pred_region
          %p2576 = scmp.lt.s32.totalorder %s56, 1
          %s2577 = scalar_select %p2576, %s56, 1
          %s2578 = smul.addr %s2577, 4
          %s2579 = smul.addr %s2578, 8
          %s2580 = scalar_lea.vmem %s24, %s2579
        $region140: #{seq2sql_forward.1} parent=115 // pred_fallthru
          _
      $region116: #{seq2sql_forward.1} parent=5 // pred_fallthru
        _
    $region6: #{seq2sql_forward.1} parent=1 // loop_footer
      %s54 = sadd.s32 1, %s50
    $region7: #{seq2sql_forward.1} parent=1 // loop_footer_branch
      %49 = sbr.rel target = $region3
    $region8: #{seq2sql_forward.1} parent=1 // loop_exit
      _
    %2581 = vsyncpa [#allocation6], 1
    %s2582 = scalar_lea.sflag [#allocation6], 1
    %2583 = vsyncpa %s2582, 1
    %2584 = vsyncpa [#allocation8], 1
    %s2585 = scalar_lea.sflag [#allocation8], 1
    %2586 = vsyncpa %s2585, 1

</llo_original>
